<compile_context>
chip_gen: v7x
topology: tpu7x:2x2x1
jax: 0.10.0
libtpu: 0.0.40
codegen_flags: <defaults>
</compile_context>

<pallas_src>
import jax
import jax.numpy as jnp
from jax import lax
from jax.experimental import pallas as pl
from jax.experimental.pallas import tpu as pltpu

INPUT_DIM = 64
OUTPUT_DIM = 64
HIDDEN_DIM = 32
COMBINED_DIM = INPUT_DIM + OUTPUT_DIM      # 128 -> exactly one lane group
FORGET_GATE_INIT = 0.01


def titan_seq_kernel(keep_ref, mem0_ref, x_ref,
                     w1x_ref, w1m_ref, b1_ref, w2_ref, b2_ref,
                     out_ref, sur_ref,
                     mem_scratch):
    tb = pl.program_id(1)

    # Seed the carried memory from the initial memory at the first time block
    # of every batch block.
    @pl.when(tb == 0)
    def _():
        mem_scratch[...] = mem0_ref[...]

    # Resident (constant-index) operands: read once per grid step.
    keep = jnp.broadcast_to(keep_ref[...], mem_scratch.shape)   # (B, 64) f32
    w1x = w1x_ref[...]            # (64, 32)  f32  (fc1 rows for x)
    w1m = w1m_ref[...]            # (64, 32)  f32  (fc1 rows for gated memory)
    b1 = b1_ref[...]              # (1, 32)   f32
    w2 = w2_ref[...]              # (32, 128) f32
    b2 = b2_ref[...]              # (1, 128)  f32

    block_t = x_ref.shape[0]      # static

    def step(tl, carry):
        # x streamed as bf16 from HBM; compute in f32.
        x = x_ref[tl].astype(jnp.float32)                       # (B, 64)
        gated = mem_scratch[...] * keep                         # (B, 64) f32

        # fc1 on the "concatenated" [x, gated_memory] input, expressed as two
        # matmuls on the split weight halves (no lane-axis concatenate).
        hidden = (jnp.dot(x, w1x, preferred_element_type=jnp.float32)
                  + jnp.dot(gated, w1m, preferred_element_type=jnp.float32)
                  + b1)
        hidden = jnp.maximum(hidden, 0.0)                       # (B, 32)

        # fc2 -> single lane-dense (B, 128) slab: [new_memory | predicted].
        output = jnp.dot(hidden, w2,
                         preferred_element_type=jnp.float32) + b2
        out_ref[tl] = output.astype(out_ref.dtype)              # bf16 128-lane store

        new_memory = output[:, :OUTPUT_DIM]                     # (B, 64) f32
        predicted = output[:, OUTPUT_DIM:]                      # (B, 64) f32

        # Recurrent carry stays in f32 VMEM scratch (no bf16 drift across T).
        mem_scratch[...] = new_memory

        # Per-row surprise = mean((predicted - x)^2) -> one full-lane row.
        diff = predicted - x
        sur_ref[tl, :] = jnp.mean(diff * diff, axis=-1)          # (B,)
        return carry

    lax.fori_loop(0, block_t, step, 0, unroll=True)


def _choose_block_b(B):
    """Whole batch as one block unless it can be split into >=2 lane-dense
    (multiple-of-128) blocks, which lets the 'parallel' batch axis shard
    across v7x's two TensorCores."""
    if B >= 256 and B % 128 == 0:
        for cand in (512, 384, 256, 128):
            if cand <= B // 2 and B % cand == 0:
                return cand
    return B


def titan_memory_forward_seq(xs, memory0, forget_gate, w1_t, b1, w2_t, b2,
                             *, block_b=None, block_t=None):
    """Run the TitanMemory recurrence for a whole sequence in ONE pallas_call.

    xs:       (T, B, INPUT_DIM)   independent sequences batched along B
              (pass bf16 to avoid an extra HBM cast; f32 also accepted)
    memory0:  (B, OUTPUT_DIM)     initial memory state per sequence
    w1_t:     (INPUT_DIM + OUTPUT_DIM, HIDDEN_DIM)   (= fc1.weight.T)
    b1:       (HIDDEN_DIM,)
    w2_t:     (HIDDEN_DIM, INPUT_DIM + OUTPUT_DIM)   (= fc2.weight.T)
    b2:       (INPUT_DIM + OUTPUT_DIM,)

    Returns (predicted (T,B,INPUT_DIM) bf16, new_memory (T,B,OUTPUT_DIM) bf16,
    surprise (T,B) f32).  Each step is exactly TitanMemoryModel.forward with
    the memory carried; HBM-streamed tensors are bf16, compute is f32.
    """
    xs = jnp.asarray(xs)
    T, B, _ = xs.shape

    if block_t is None:
        block_t = T if T <= 16 else 16
    if block_b is None:
        block_b = _choose_block_b(B)
    assert block_b == B or (B % block_b == 0 and block_b % 128 == 0), (B, block_b)
    nb = B // block_b
    n_tb = pl.cdiv(T, block_t)
    Tp = n_tb * block_t

    # bf16 HBM streaming of x; pad time to a multiple of block_t (padded steps
    # are computed but sliced away; they come after all real steps so the
    # recurrence for real steps is unaffected).
    xs_bf = xs.astype(jnp.bfloat16)
    if Tp != T:
        xs_bf = jnp.pad(xs_bf, ((0, Tp - T), (0, 0), (0, 0)))

    mem0 = jnp.asarray(memory0, jnp.float32).reshape(B, OUTPUT_DIM)
    # keep = 1 - sigmoid(forget_gate), hoisted out of the kernel.
    keep = (1.0 - jax.nn.sigmoid(jnp.asarray(forget_gate, jnp.float32))).reshape(1, 1)
    w1_t = jnp.asarray(w1_t, jnp.float32)
    w1_x = w1_t[:INPUT_DIM, :]                    # (64, 32) rows for x
    w1_m = w1_t[INPUT_DIM:, :]                    # (64, 32) rows for gated memory
    b1_2 = jnp.asarray(b1, jnp.float32).reshape(1, HIDDEN_DIM)
    w2 = jnp.asarray(w2_t, jnp.float32)           # (32, 128)
    b2_2 = jnp.asarray(b2, jnp.float32).reshape(1, COMBINED_DIM)

    out_raw, surprise = pl.pallas_call(
        titan_seq_kernel,
        out_shape=(
            jax.ShapeDtypeStruct((Tp, B, COMBINED_DIM), jnp.bfloat16),
            jax.ShapeDtypeStruct((Tp, B), jnp.float32),
        ),
        grid_spec=pltpu.PrefetchScalarGridSpec(
            num_scalar_prefetch=0,
            grid=(nb, n_tb),
            in_specs=[
                # keep (1 - sigmoid(forget_gate)), resident
                pl.BlockSpec((1, 1), lambda b, t: (0, 0)),
                # initial memory: resident per batch block
                pl.BlockSpec((block_b, OUTPUT_DIM), lambda b, t: (b, 0)),
                # x: one (block_t, block_b, 64) bf16 slab per grid step
                pl.BlockSpec((block_t, block_b, INPUT_DIM), lambda b, t: (t, b, 0)),
                # weights/biases: constant block index -> loaded once, VMEM-resident
                pl.BlockSpec((INPUT_DIM, HIDDEN_DIM), lambda b, t: (0, 0)),
                pl.BlockSpec((OUTPUT_DIM, HIDDEN_DIM), lambda b, t: (0, 0)),
                pl.BlockSpec((1, HIDDEN_DIM), lambda b, t: (0, 0)),
                pl.BlockSpec((HIDDEN_DIM, COMBINED_DIM), lambda b, t: (0, 0)),
                pl.BlockSpec((1, COMBINED_DIM), lambda b, t: (0, 0)),
            ],
            out_specs=(
                pl.BlockSpec((block_t, block_b, COMBINED_DIM), lambda b, t: (t, b, 0)),
                pl.BlockSpec((block_t, block_b), lambda b, t: (t, b)),
            ),
            scratch_shapes=[pltpu.VMEM((block_b, OUTPUT_DIM), jnp.float32)],
        ),
        compiler_params=pltpu.CompilerParams(
            dimension_semantics=("parallel", "arbitrary")),
    )(keep, mem0, xs_bf, w1_x, w1_m, b1_2, w2, b2_2)

    out_raw = out_raw[:T]
    surprise = surprise[:T]
    new_memory = out_raw[..., :OUTPUT_DIM]
    predicted = out_raw[..., OUTPUT_DIM:]
    return predicted, new_memory, surprise


def reference_step(x, memory, forget_gate, w1_t, b1, w2_t, b2):
    """Pure-JAX step matching the PyTorch forward exactly (batched or not)."""
    keep = 1.0 - jax.nn.sigmoid(forget_gate)
    combined = jnp.concatenate([x, memory * keep], axis=-1)
    hidden = jax.nn.relu(combined @ w1_t + b1)
    output = hidden @ w2_t + b2
    new_memory = output[..., :OUTPUT_DIM]
    predicted = output[..., OUTPUT_DIM:]
    surprise = jnp.mean((predicted - x) ** 2, axis=-1)
    return predicted, new_memory, surprise


def reference_seq(xs, memory0, forget_gate, w1_t, b1, w2_t, b2):
    def step(mem, x):
        pred, new_mem, sur = reference_step(x, mem, forget_gate, w1_t, b1, w2_t, b2)
        return new_mem, (pred, new_mem, sur)
    _, (preds, mems, surs) = jax.lax.scan(step, memory0, xs)
    return preds, mems, surs


def titan_memory_forward(x, memory, forget_gate, w1_t, b1, w2_t, b2):
    """Single-step forward matching TitanMemoryModel.forward (x, memory: (64,)).

    A full pallas_call for ~16 KFLOPs is dominated by launch/pipeline overhead,
    so the single-step path is plain JAX; use titan_memory_forward_seq for the
    batched/sequence (Pallas) path.
    """
    pred, new_mem, sur = reference_step(
        jnp.asarray(x, jnp.float32), jnp.asarray(memory, jnp.float32),
        forget_gate, w1_t, b1, w2_t, b2)
    return {'predicted': pred, 'new_memory': new_mem, 'surprise': sur}


def init_params(key):
    """Deterministic parameter init mimicking nn.Linear (uniform +/- 1/sqrt(fan_in))."""
    k1, k2, k3, k4 = jax.random.split(key, 4)
    in1 = INPUT_DIM + OUTPUT_DIM
    bound1 = 1.0 / jnp.sqrt(jnp.float32(in1))
    # stored pre-transposed: (in_features, out_features)
    w1_t = jax.random.uniform(k1, (in1, HIDDEN_DIM), jnp.float32, -bound1, bound1)
    b1 = jax.random.uniform(k2, (HIDDEN_DIM,), jnp.float32, -bound1, bound1)
    bound2 = 1.0 / jnp.sqrt(jnp.float32(HIDDEN_DIM))
    w2_t = jax.random.uniform(k3, (HIDDEN_DIM, in1), jnp.float32, -bound2, bound2)
    b2 = jax.random.uniform(k4, (in1,), jnp.float32, -bound2, bound2)
    forget_gate = jnp.float32(FORGET_GATE_INIT)
    return w1_t, b1, w2_t, b2, forget_gate


if __name__ == "__main__":
    key = jax.random.PRNGKey(0)
    kp, kx = jax.random.split(key)
    w1_t, b1, w2_t, b2, forget_gate = init_params(kp)

    # Small demo: 8 independent sequences, 20 timesteps (exercises time-block
    # padding: block_t=16, two time blocks, recurrence carried across blocks).
    T, B = 20, 8
    xs = jax.random.normal(kx, (T, B, INPUT_DIM), jnp.float32)
    memory0 = jnp.zeros((B, OUTPUT_DIM), jnp.float32)   # reset_memory()

    pred, new_mem, surprise = titan_memory_forward_seq(
        xs, memory0, forget_gate, w1_t, b1, w2_t, b2)
    jax.block_until_ready((pred, new_mem, surprise))

    # Correctness vs. pure-JAX recurrent reference (fed the same bf16-quantized
    # x so only kernel-side bf16 output quantization + accumulation order differ).
    xs_q = xs.astype(jnp.bfloat16).astype(jnp.float32)
    ref_pred, ref_mem, ref_sur = reference_seq(
        xs_q, memory0, forget_gate, w1_t, b1, w2_t, b2)

    pred32 = pred.astype(jnp.float32)
    mem32 = new_mem.astype(jnp.float32)
    assert jnp.allclose(pred32, ref_pred, atol=2e-2, rtol=2e-2), \
        float(jnp.max(jnp.abs(pred32 - ref_pred)))
    assert jnp.allclose(mem32, ref_mem, atol=2e-2, rtol=2e-2), \
        float(jnp.max(jnp.abs(mem32 - ref_mem)))
    assert jnp.allclose(surprise, ref_sur, atol=1e-3, rtol=1e-3), \
        float(jnp.max(jnp.abs(surprise - ref_sur)))

    # Single-step API matching the PyTorch forward() signature (plain-JAX path).
    out = titan_memory_forward(xs[0, 0], memory0[0], forget_gate,
                               w1_t, b1, w2_t, b2)
    jax.block_until_ready(out)
    r_pred, r_mem, r_sur = reference_step(xs[0, 0], memory0[0], forget_gate,
                                          w1_t, b1, w2_t, b2)
    assert jnp.allclose(out['predicted'], r_pred, atol=1e-5)
    assert jnp.allclose(out['new_memory'], r_mem, atol=1e-5)
    assert jnp.allclose(out['surprise'], r_sur, atol=1e-5)

    print("KERNEL_OK")
</pallas_src>

<mosaic_0001>
module attributes {stable_mosaic.version = 11 : i64} {
  func.func @titan_seq_kernel(%arg0: i32, %arg1: i32, %arg2: memref<1x1xf32, #tpu.memory_space<vmem>>, %arg3: memref<8x64xf32, #tpu.memory_space<vmem>>, %arg4: memref<16x8x64xbf16, #tpu.memory_space<vmem>>, %arg5: memref<64x32xf32, #tpu.memory_space<vmem>>, %arg6: memref<64x32xf32, #tpu.memory_space<vmem>>, %arg7: memref<1x32xf32, #tpu.memory_space<vmem>>, %arg8: memref<32x128xf32, #tpu.memory_space<vmem>>, %arg9: memref<1x128xf32, #tpu.memory_space<vmem>>, %arg10: memref<16x8x128xbf16, #tpu.memory_space<vmem>>, %arg11: memref<16x8xf32, #tpu.memory_space<vmem>>, %arg12: memref<8x64xf32, #tpu.memory_space<vmem>>) attributes {dimension_semantics = [#tpu.dimension_semantics<parallel>, #tpu.dimension_semantics<arbitrary>], iteration_bounds = array<i64: 1, 2>, scalar_prefetch = 0 : i64, scratch_operands = 1 : i64, tpu.core_type = #tpu.core_type<tc>, window_params = [{pipeline_mode = #tpu.pipeline_mode<synchronous>, transform_indices = @transform_0, window_bounds = array<i64: 1, 1>}, {transform_indices = @transform_1, window_bounds = array<i64: 8, 64>}, {transform_indices = @transform_2, window_bounds = array<i64: 16, 8, 64>}, {pipeline_mode = #tpu.pipeline_mode<synchronous>, transform_indices = @transform_3, window_bounds = array<i64: 64, 32>}, {pipeline_mode = #tpu.pipeline_mode<synchronous>, transform_indices = @transform_4, window_bounds = array<i64: 64, 32>}, {pipeline_mode = #tpu.pipeline_mode<synchronous>, transform_indices = @transform_5, window_bounds = array<i64: 1, 32>}, {pipeline_mode = #tpu.pipeline_mode<synchronous>, transform_indices = @transform_6, window_bounds = array<i64: 32, 128>}, {pipeline_mode = #tpu.pipeline_mode<synchronous>, transform_indices = @transform_7, window_bounds = array<i64: 1, 128>}, {transform_indices = @transform_8, window_bounds = array<i64: 16, 8, 128>}, {transform_indices = @transform_9, window_bounds = array<i64: 16, 8>}]} {
    %c0_i32 = arith.constant 0 : i32
    %0 = arith.cmpi eq, %arg1, %c0_i32 : i32
    %1 = arith.extui %0 : i1 to i32
    %c0_i32_0 = arith.constant 0 : i32
    %2 = arith.cmpi ne, %1, %c0_i32_0 : i32
    scf.if %2 {
      %c0_252 = arith.constant 0 : index
      %c0_253 = arith.constant 0 : index
      %539 = vector.load %arg3[%c0_252, %c0_253] : memref<8x64xf32, #tpu.memory_space<vmem>>, vector<8x64xf32>
      %c0_254 = arith.constant 0 : index
      %c0_255 = arith.constant 0 : index
      %540 = vector.load %arg12[%c0_254, %c0_255] : memref<8x64xf32, #tpu.memory_space<vmem>>, vector<8x64xf32>
      tpu.vector_store %arg12[%c0_254, %c0_255], %539 {strides = array<i32>} : memref<8x64xf32, #tpu.memory_space<vmem>>, vector<8x64xf32>,
    } else {
    }
    %c0 = arith.constant 0 : index
    %c0_1 = arith.constant 0 : index
    %3 = vector.load %arg2[%c0, %c0_1] : memref<1x1xf32, #tpu.memory_space<vmem>>, vector<1x1xf32>
    %4 = vector.shape_cast %3 : vector<1x1xf32> to vector<1x1xf32>
    %5 = vector.broadcast %4 : vector<1x1xf32> to vector<8x64xf32>
    %c0_2 = arith.constant 0 : index
    %c0_3 = arith.constant 0 : index
    %6 = vector.load %arg5[%c0_2, %c0_3] : memref<64x32xf32, #tpu.memory_space<vmem>>, vector<64x32xf32>
    %c0_4 = arith.constant 0 : index
    %c0_5 = arith.constant 0 : index
    %7 = vector.load %arg6[%c0_4, %c0_5] : memref<64x32xf32, #tpu.memory_space<vmem>>, vector<64x32xf32>
    %c0_6 = arith.constant 0 : index
    %c0_7 = arith.constant 0 : index
    %8 = vector.load %arg7[%c0_6, %c0_7] : memref<1x32xf32, #tpu.memory_space<vmem>>, vector<1x32xf32>
    %c0_8 = arith.constant 0 : index
    %c0_9 = arith.constant 0 : index
    %9 = vector.load %arg8[%c0_8, %c0_9] : memref<32x128xf32, #tpu.memory_space<vmem>>, vector<32x128xf32>
    %c0_10 = arith.constant 0 : index
    %c0_11 = arith.constant 0 : index
    %10 = vector.load %arg9[%c0_10, %c0_11] : memref<1x128xf32, #tpu.memory_space<vmem>>, vector<1x128xf32>
    %c0_i32_12 = arith.constant 0 : i32
    %11 = arith.index_cast %c0_i32_12 : i32 to index
    %c0_13 = arith.constant 0 : index
    %c0_14 = arith.constant 0 : index
    %12 = vector.load %arg4[%11, %c0_13, %c0_14] : memref<16x8x64xbf16, #tpu.memory_space<vmem>>, vector<1x8x64xbf16>
    %13 = vector.shape_cast %12 : vector<1x8x64xbf16> to vector<8x64xbf16>
    %14 = arith.extf %13 : vector<8x64xbf16> to vector<8x64xf32>
    %c0_15 = arith.constant 0 : index
    %c0_16 = arith.constant 0 : index
    %15 = vector.load %arg12[%c0_15, %c0_16] : memref<8x64xf32, #tpu.memory_space<vmem>>, vector<8x64xf32>
    %16 = arith.mulf %15, %5 : vector<8x64xf32>
    %cst = arith.constant dense<0.000000e+00> : vector<8x32xf32>
    %17 = tpu.matmul %14, %6, %cst {dimension_numbers = #tpu.dot_dimension_numbers<[1], [0], [0], [1], [0, 0, 1, 1], [], []>} : vector<8x64xf32>, vector<64x32xf32>, vector<8x32xf32> -> vector<8x32xf32>
    %cst_17 = arith.constant dense<0.000000e+00> : vector<8x32xf32>
    %18 = tpu.matmul %16, %7, %cst_17 {dimension_numbers = #tpu.dot_dimension_numbers<[1], [0], [0], [1], [0, 0, 1, 1], [], []>} : vector<8x64xf32>, vector<64x32xf32>, vector<8x32xf32> -> vector<8x32xf32>
    %19 = arith.addf %17, %18 : vector<8x32xf32>
    %20 = vector.broadcast %8 : vector<1x32xf32> to vector<8x32xf32>
    %21 = arith.addf %19, %20 : vector<8x32xf32>
    %cst_18 = arith.constant 0.000000e+00 : f32
    %22 = vector.broadcast %cst_18 : f32 to vector<8x32xf32>
    %23 = arith.maximumf %21, %22 : vector<8x32xf32>
    %cst_19 = arith.constant dense<0.000000e+00> : vector<8x128xf32>
    %24 = tpu.matmul %23, %9, %cst_19 {dimension_numbers = #tpu.dot_dimension_numbers<[1], [0], [0], [1], [0, 0, 1, 1], [], []>} : vector<8x32xf32>, vector<32x128xf32>, vector<8x128xf32> -> vector<8x128xf32>
    %25 = vector.broadcast %10 : vector<1x128xf32> to vector<8x128xf32>
    %26 = arith.addf %24, %25 : vector<8x128xf32>
    %27 = arith.truncf %26 : vector<8x128xf32> to vector<8x128xbf16>
    %28 = arith.index_cast %c0_i32_12 : i32 to index
    %c0_20 = arith.constant 0 : index
    %c0_21 = arith.constant 0 : index
    %29 = vector.load %arg10[%28, %c0_20, %c0_21] : memref<16x8x128xbf16, #tpu.memory_space<vmem>>, vector<1x8x128xbf16>
    %30 = vector.shape_cast %29 : vector<1x8x128xbf16> to vector<8x128xbf16>
    %31 = vector.shape_cast %27 : vector<8x128xbf16> to vector<1x8x128xbf16>
    tpu.vector_store %arg10[%28, %c0_20, %c0_21], %31 {strides = array<i32>} : memref<16x8x128xbf16, #tpu.memory_space<vmem>>, vector<1x8x128xbf16>,
    %32 = vector.extract_strided_slice %26 {offsets = [0, 0], sizes = [8, 64], strides = [1, 1]} : vector<8x128xf32> to vector<8x64xf32>
    %33 = vector.extract_strided_slice %26 {offsets = [0, 64], sizes = [8, 64], strides = [1, 1]} : vector<8x128xf32> to vector<8x64xf32>
    %c0_22 = arith.constant 0 : index
    %c0_23 = arith.constant 0 : index
    %34 = vector.load %arg12[%c0_22, %c0_23] : memref<8x64xf32, #tpu.memory_space<vmem>>, vector<8x64xf32>
    tpu.vector_store %arg12[%c0_22, %c0_23], %32 {strides = array<i32>} : memref<8x64xf32, #tpu.memory_space<vmem>>, vector<8x64xf32>,
    %35 = arith.subf %33, %14 : vector<8x64xf32>
    %36 = arith.mulf %35, %35 : vector<8x64xf32>
    %cst_24 = arith.constant dense<0.000000e+00> : vector<8xf32>
    %37 = vector.multi_reduction <add>, %36, %cst_24 [1] : vector<8x64xf32> to vector<8xf32>
    %cst_25 = arith.constant 6.400000e+01 : f32
    %38 = vector.broadcast %cst_25 : f32 to vector<8xf32>
    %39 = arith.divf %37, %38 : vector<8xf32>
    %40 = arith.index_cast %c0_i32_12 : i32 to index
    %c0_26 = arith.constant 0 : index
    %41 = vector.load %arg11[%40, %c0_26] : memref<16x8xf32, #tpu.memory_space<vmem>>, vector<1x8xf32>
    %42 = vector.shape_cast %41 : vector<1x8xf32> to vector<8xf32>
    %43 = vector.shape_cast %39 : vector<8xf32> to vector<1x8xf32>
    tpu.vector_store %arg11[%40, %c0_26], %43 {strides = array<i32>} : memref<16x8xf32, #tpu.memory_space<vmem>>, vector<1x8xf32>,
    %c1_i32 = arith.constant 1 : i32
    %44 = arith.index_cast %c1_i32 : i32 to index
    %c0_27 = arith.constant 0 : index
    %c0_28 = arith.constant 0 : index
    %45 = vector.load %arg4[%44, %c0_27, %c0_28] : memref<16x8x64xbf16, #tpu.memory_space<vmem>>, vector<1x8x64xbf16>
    %46 = vector.shape_cast %45 : vector<1x8x64xbf16> to vector<8x64xbf16>
    %47 = arith.extf %46 : vector<8x64xbf16> to vector<8x64xf32>
    %c0_29 = arith.constant 0 : index
    %c0_30 = arith.constant 0 : index
    %48 = vector.load %arg12[%c0_29, %c0_30] : memref<8x64xf32, #tpu.memory_space<vmem>>, vector<8x64xf32>
    %49 = arith.mulf %48, %5 : vector<8x64xf32>
    %cst_31 = arith.constant dense<0.000000e+00> : vector<8x32xf32>
    %50 = tpu.matmul %47, %6, %cst_31 {dimension_numbers = #tpu.dot_dimension_numbers<[1], [0], [0], [1], [0, 0, 1, 1], [], []>} : vector<8x64xf32>, vector<64x32xf32>, vector<8x32xf32> -> vector<8x32xf32>
    %cst_32 = arith.constant dense<0.000000e+00> : vector<8x32xf32>
    %51 = tpu.matmul %49, %7, %cst_32 {dimension_numbers = #tpu.dot_dimension_numbers<[1], [0], [0], [1], [0, 0, 1, 1], [], []>} : vector<8x64xf32>, vector<64x32xf32>, vector<8x32xf32> -> vector<8x32xf32>
    %52 = arith.addf %50, %51 : vector<8x32xf32>
    %53 = vector.broadcast %8 : vector<1x32xf32> to vector<8x32xf32>
    %54 = arith.addf %52, %53 : vector<8x32xf32>
    %cst_33 = arith.constant 0.000000e+00 : f32
    %55 = vector.broadcast %cst_33 : f32 to vector<8x32xf32>
    %56 = arith.maximumf %54, %55 : vector<8x32xf32>
    %cst_34 = arith.constant dense<0.000000e+00> : vector<8x128xf32>
    %57 = tpu.matmul %56, %9, %cst_34 {dimension_numbers = #tpu.dot_dimension_numbers<[1], [0], [0], [1], [0, 0, 1, 1], [], []>} : vector<8x32xf32>, vector<32x128xf32>, vector<8x128xf32> -> vector<8x128xf32>
    %58 = vector.broadcast %10 : vector<1x128xf32> to vector<8x128xf32>
    %59 = arith.addf %57, %58 : vector<8x128xf32>
    %60 = arith.truncf %59 : vector<8x128xf32> to vector<8x128xbf16>
    %61 = arith.index_cast %c1_i32 : i32 to index
    %c0_35 = arith.constant 0 : index
    %c0_36 = arith.constant 0 : index
    %62 = vector.load %arg10[%61, %c0_35, %c0_36] : memref<16x8x128xbf16, #tpu.memory_space<vmem>>, vector<1x8x128xbf16>
    %63 = vector.shape_cast %62 : vector<1x8x128xbf16> to vector<8x128xbf16>
    %64 = vector.shape_cast %60 : vector<8x128xbf16> to vector<1x8x128xbf16>
    tpu.vector_store %arg10[%61, %c0_35, %c0_36], %64 {strides = array<i32>} : memref<16x8x128xbf16, #tpu.memory_space<vmem>>, vector<1x8x128xbf16>,
    %65 = vector.extract_strided_slice %59 {offsets = [0, 0], sizes = [8, 64], strides = [1, 1]} : vector<8x128xf32> to vector<8x64xf32>
    %66 = vector.extract_strided_slice %59 {offsets = [0, 64], sizes = [8, 64], strides = [1, 1]} : vector<8x128xf32> to vector<8x64xf32>
    %c0_37 = arith.constant 0 : index
    %c0_38 = arith.constant 0 : index
    %67 = vector.load %arg12[%c0_37, %c0_38] : memref<8x64xf32, #tpu.memory_space<vmem>>, vector<8x64xf32>
    tpu.vector_store %arg12[%c0_37, %c0_38], %65 {strides = array<i32>} : memref<8x64xf32, #tpu.memory_space<vmem>>, vector<8x64xf32>,
    %68 = arith.subf %66, %47 : vector<8x64xf32>
    %69 = arith.mulf %68, %68 : vector<8x64xf32>
    %cst_39 = arith.constant dense<0.000000e+00> : vector<8xf32>
    %70 = vector.multi_reduction <add>, %69, %cst_39 [1] : vector<8x64xf32> to vector<8xf32>
    %cst_40 = arith.constant 6.400000e+01 : f32
    %71 = vector.broadcast %cst_40 : f32 to vector<8xf32>
    %72 = arith.divf %70, %71 : vector<8xf32>
    %73 = arith.index_cast %c1_i32 : i32 to index
    %c0_41 = arith.constant 0 : index
    %74 = vector.load %arg11[%73, %c0_41] : memref<16x8xf32, #tpu.memory_space<vmem>>, vector<1x8xf32>
    %75 = vector.shape_cast %74 : vector<1x8xf32> to vector<8xf32>
    %76 = vector.shape_cast %72 : vector<8xf32> to vector<1x8xf32>
    tpu.vector_store %arg11[%73, %c0_41], %76 {strides = array<i32>} : memref<16x8xf32, #tpu.memory_space<vmem>>, vector<1x8xf32>,
    %c2_i32 = arith.constant 2 : i32
    %77 = arith.index_cast %c2_i32 : i32 to index
    %c0_42 = arith.constant 0 : index
    %c0_43 = arith.constant 0 : index
    %78 = vector.load %arg4[%77, %c0_42, %c0_43] : memref<16x8x64xbf16, #tpu.memory_space<vmem>>, vector<1x8x64xbf16>
    %79 = vector.shape_cast %78 : vector<1x8x64xbf16> to vector<8x64xbf16>
    %80 = arith.extf %79 : vector<8x64xbf16> to vector<8x64xf32>
    %c0_44 = arith.constant 0 : index
    %c0_45 = arith.constant 0 : index
    %81 = vector.load %arg12[%c0_44, %c0_45] : memref<8x64xf32, #tpu.memory_space<vmem>>, vector<8x64xf32>
    %82 = arith.mulf %81, %5 : vector<8x64xf32>
    %cst_46 = arith.constant dense<0.000000e+00> : vector<8x32xf32>
    %83 = tpu.matmul %80, %6, %cst_46 {dimension_numbers = #tpu.dot_dimension_numbers<[1], [0], [0], [1], [0, 0, 1, 1], [], []>} : vector<8x64xf32>, vector<64x32xf32>, vector<8x32xf32> -> vector<8x32xf32>
    %cst_47 = arith.constant dense<0.000000e+00> : vector<8x32xf32>
    %84 = tpu.matmul %82, %7, %cst_47 {dimension_numbers = #tpu.dot_dimension_numbers<[1], [0], [0], [1], [0, 0, 1, 1], [], []>} : vector<8x64xf32>, vector<64x32xf32>, vector<8x32xf32> -> vector<8x32xf32>
    %85 = arith.addf %83, %84 : vector<8x32xf32>
    %86 = vector.broadcast %8 : vector<1x32xf32> to vector<8x32xf32>
    %87 = arith.addf %85, %86 : vector<8x32xf32>
    %cst_48 = arith.constant 0.000000e+00 : f32
    %88 = vector.broadcast %cst_48 : f32 to vector<8x32xf32>
    %89 = arith.maximumf %87, %88 : vector<8x32xf32>
    %cst_49 = arith.constant dense<0.000000e+00> : vector<8x128xf32>
    %90 = tpu.matmul %89, %9, %cst_49 {dimension_numbers = #tpu.dot_dimension_numbers<[1], [0], [0], [1], [0, 0, 1, 1], [], []>} : vector<8x32xf32>, vector<32x128xf32>, vector<8x128xf32> -> vector<8x128xf32>
    %91 = vector.broadcast %10 : vector<1x128xf32> to vector<8x128xf32>
    %92 = arith.addf %90, %91 : vector<8x128xf32>
    %93 = arith.truncf %92 : vector<8x128xf32> to vector<8x128xbf16>
    %94 = arith.index_cast %c2_i32 : i32 to index
    %c0_50 = arith.constant 0 : index
    %c0_51 = arith.constant 0 : index
    %95 = vector.load %arg10[%94, %c0_50, %c0_51] : memref<16x8x128xbf16, #tpu.memory_space<vmem>>, vector<1x8x128xbf16>
    %96 = vector.shape_cast %95 : vector<1x8x128xbf16> to vector<8x128xbf16>
    %97 = vector.shape_cast %93 : vector<8x128xbf16> to vector<1x8x128xbf16>
    tpu.vector_store %arg10[%94, %c0_50, %c0_51], %97 {strides = array<i32>} : memref<16x8x128xbf16, #tpu.memory_space<vmem>>, vector<1x8x128xbf16>,
    %98 = vector.extract_strided_slice %92 {offsets = [0, 0], sizes = [8, 64], strides = [1, 1]} : vector<8x128xf32> to vector<8x64xf32>
    %99 = vector.extract_strided_slice %92 {offsets = [0, 64], sizes = [8, 64], strides = [1, 1]} : vector<8x128xf32> to vector<8x64xf32>
    %c0_52 = arith.constant 0 : index
    %c0_53 = arith.constant 0 : index
    %100 = vector.load %arg12[%c0_52, %c0_53] : memref<8x64xf32, #tpu.memory_space<vmem>>, vector<8x64xf32>
    tpu.vector_store %arg12[%c0_52, %c0_53], %98 {strides = array<i32>} : memref<8x64xf32, #tpu.memory_space<vmem>>, vector<8x64xf32>,
    %101 = arith.subf %99, %80 : vector<8x64xf32>
    %102 = arith.mulf %101, %101 : vector<8x64xf32>
    %cst_54 = arith.constant dense<0.000000e+00> : vector<8xf32>
    %103 = vector.multi_reduction <add>, %102, %cst_54 [1] : vector<8x64xf32> to vector<8xf32>
    %cst_55 = arith.constant 6.400000e+01 : f32
    %104 = vector.broadcast %cst_55 : f32 to vector<8xf32>
    %105 = arith.divf %103, %104 : vector<8xf32>
    %106 = arith.index_cast %c2_i32 : i32 to index
    %c0_56 = arith.constant 0 : index
    %107 = vector.load %arg11[%106, %c0_56] : memref<16x8xf32, #tpu.memory_space<vmem>>, vector<1x8xf32>
    %108 = vector.shape_cast %107 : vector<1x8xf32> to vector<8xf32>
    %109 = vector.shape_cast %105 : vector<8xf32> to vector<1x8xf32>
    tpu.vector_store %arg11[%106, %c0_56], %109 {strides = array<i32>} : memref<16x8xf32, #tpu.memory_space<vmem>>, vector<1x8xf32>,
    %c3_i32 = arith.constant 3 : i32
    %110 = arith.index_cast %c3_i32 : i32 to index
    %c0_57 = arith.constant 0 : index
    %c0_58 = arith.constant 0 : index
    %111 = vector.load %arg4[%110, %c0_57, %c0_58] : memref<16x8x64xbf16, #tpu.memory_space<vmem>>, vector<1x8x64xbf16>
    %112 = vector.shape_cast %111 : vector<1x8x64xbf16> to vector<8x64xbf16>
    %113 = arith.extf %112 : vector<8x64xbf16> to vector<8x64xf32>
    %c0_59 = arith.constant 0 : index
    %c0_60 = arith.constant 0 : index
    %114 = vector.load %arg12[%c0_59, %c0_60] : memref<8x64xf32, #tpu.memory_space<vmem>>, vector<8x64xf32>
    %115 = arith.mulf %114, %5 : vector<8x64xf32>
    %cst_61 = arith.constant dense<0.000000e+00> : vector<8x32xf32>
    %116 = tpu.matmul %113, %6, %cst_61 {dimension_numbers = #tpu.dot_dimension_numbers<[1], [0], [0], [1], [0, 0, 1, 1], [], []>} : vector<8x64xf32>, vector<64x32xf32>, vector<8x32xf32> -> vector<8x32xf32>
    %cst_62 = arith.constant dense<0.000000e+00> : vector<8x32xf32>
    %117 = tpu.matmul %115, %7, %cst_62 {dimension_numbers = #tpu.dot_dimension_numbers<[1], [0], [0], [1], [0, 0, 1, 1], [], []>} : vector<8x64xf32>, vector<64x32xf32>, vector<8x32xf32> -> vector<8x32xf32>
    %118 = arith.addf %116, %117 : vector<8x32xf32>
    %119 = vector.broadcast %8 : vector<1x32xf32> to vector<8x32xf32>
    %120 = arith.addf %118, %119 : vector<8x32xf32>
    %cst_63 = arith.constant 0.000000e+00 : f32
    %121 = vector.broadcast %cst_63 : f32 to vector<8x32xf32>
    %122 = arith.maximumf %120, %121 : vector<8x32xf32>
    %cst_64 = arith.constant dense<0.000000e+00> : vector<8x128xf32>
    %123 = tpu.matmul %122, %9, %cst_64 {dimension_numbers = #tpu.dot_dimension_numbers<[1], [0], [0], [1], [0, 0, 1, 1], [], []>} : vector<8x32xf32>, vector<32x128xf32>, vector<8x128xf32> -> vector<8x128xf32>
    %124 = vector.broadcast %10 : vector<1x128xf32> to vector<8x128xf32>
    %125 = arith.addf %123, %124 : vector<8x128xf32>
    %126 = arith.truncf %125 : vector<8x128xf32> to vector<8x128xbf16>
    %127 = arith.index_cast %c3_i32 : i32 to index
    %c0_65 = arith.constant 0 : index
    %c0_66 = arith.constant 0 : index
    %128 = vector.load %arg10[%127, %c0_65, %c0_66] : memref<16x8x128xbf16, #tpu.memory_space<vmem>>, vector<1x8x128xbf16>
    %129 = vector.shape_cast %128 : vector<1x8x128xbf16> to vector<8x128xbf16>
    %130 = vector.shape_cast %126 : vector<8x128xbf16> to vector<1x8x128xbf16>
    tpu.vector_store %arg10[%127, %c0_65, %c0_66], %130 {strides = array<i32>} : memref<16x8x128xbf16, #tpu.memory_space<vmem>>, vector<1x8x128xbf16>,
    %131 = vector.extract_strided_slice %125 {offsets = [0, 0], sizes = [8, 64], strides = [1, 1]} : vector<8x128xf32> to vector<8x64xf32>
    %132 = vector.extract_strided_slice %125 {offsets = [0, 64], sizes = [8, 64], strides = [1, 1]} : vector<8x128xf32> to vector<8x64xf32>
    %c0_67 = arith.constant 0 : index
    %c0_68 = arith.constant 0 : index
    %133 = vector.load %arg12[%c0_67, %c0_68] : memref<8x64xf32, #tpu.memory_space<vmem>>, vector<8x64xf32>
    tpu.vector_store %arg12[%c0_67, %c0_68], %131 {strides = array<i32>} : memref<8x64xf32, #tpu.memory_space<vmem>>, vector<8x64xf32>,
    %134 = arith.subf %132, %113 : vector<8x64xf32>
    %135 = arith.mulf %134, %134 : vector<8x64xf32>
    %cst_69 = arith.constant dense<0.000000e+00> : vector<8xf32>
    %136 = vector.multi_reduction <add>, %135, %cst_69 [1] : vector<8x64xf32> to vector<8xf32>
    %cst_70 = arith.constant 6.400000e+01 : f32
    %137 = vector.broadcast %cst_70 : f32 to vector<8xf32>
    %138 = arith.divf %136, %137 : vector<8xf32>
    %139 = arith.index_cast %c3_i32 : i32 to index
    %c0_71 = arith.constant 0 : index
    %140 = vector.load %arg11[%139, %c0_71] : memref<16x8xf32, #tpu.memory_space<vmem>>, vector<1x8xf32>
    %141 = vector.shape_cast %140 : vector<1x8xf32> to vector<8xf32>
    %142 = vector.shape_cast %138 : vector<8xf32> to vector<1x8xf32>
    tpu.vector_store %arg11[%139, %c0_71], %142 {strides = array<i32>} : memref<16x8xf32, #tpu.memory_space<vmem>>, vector<1x8xf32>,
    %c4_i32 = arith.constant 4 : i32
    %143 = arith.index_cast %c4_i32 : i32 to index
    %c0_72 = arith.constant 0 : index
    %c0_73 = arith.constant 0 : index
    %144 = vector.load %arg4[%143, %c0_72, %c0_73] : memref<16x8x64xbf16, #tpu.memory_space<vmem>>, vector<1x8x64xbf16>
    %145 = vector.shape_cast %144 : vector<1x8x64xbf16> to vector<8x64xbf16>
    %146 = arith.extf %145 : vector<8x64xbf16> to vector<8x64xf32>
    %c0_74 = arith.constant 0 : index
    %c0_75 = arith.constant 0 : index
    %147 = vector.load %arg12[%c0_74, %c0_75] : memref<8x64xf32, #tpu.memory_space<vmem>>, vector<8x64xf32>
    %148 = arith.mulf %147, %5 : vector<8x64xf32>
    %cst_76 = arith.constant dense<0.000000e+00> : vector<8x32xf32>
    %149 = tpu.matmul %146, %6, %cst_76 {dimension_numbers = #tpu.dot_dimension_numbers<[1], [0], [0], [1], [0, 0, 1, 1], [], []>} : vector<8x64xf32>, vector<64x32xf32>, vector<8x32xf32> -> vector<8x32xf32>
    %cst_77 = arith.constant dense<0.000000e+00> : vector<8x32xf32>
    %150 = tpu.matmul %148, %7, %cst_77 {dimension_numbers = #tpu.dot_dimension_numbers<[1], [0], [0], [1], [0, 0, 1, 1], [], []>} : vector<8x64xf32>, vector<64x32xf32>, vector<8x32xf32> -> vector<8x32xf32>
    %151 = arith.addf %149, %150 : vector<8x32xf32>
    %152 = vector.broadcast %8 : vector<1x32xf32> to vector<8x32xf32>
    %153 = arith.addf %151, %152 : vector<8x32xf32>
    %cst_78 = arith.constant 0.000000e+00 : f32
    %154 = vector.broadcast %cst_78 : f32 to vector<8x32xf32>
    %155 = arith.maximumf %153, %154 : vector<8x32xf32>
    %cst_79 = arith.constant dense<0.000000e+00> : vector<8x128xf32>
    %156 = tpu.matmul %155, %9, %cst_79 {dimension_numbers = #tpu.dot_dimension_numbers<[1], [0], [0], [1], [0, 0, 1, 1], [], []>} : vector<8x32xf32>, vector<32x128xf32>, vector<8x128xf32> -> vector<8x128xf32>
    %157 = vector.broadcast %10 : vector<1x128xf32> to vector<8x128xf32>
    %158 = arith.addf %156, %157 : vector<8x128xf32>
    %159 = arith.truncf %158 : vector<8x128xf32> to vector<8x128xbf16>
    %160 = arith.index_cast %c4_i32 : i32 to index
    %c0_80 = arith.constant 0 : index
    %c0_81 = arith.constant 0 : index
    %161 = vector.load %arg10[%160, %c0_80, %c0_81] : memref<16x8x128xbf16, #tpu.memory_space<vmem>>, vector<1x8x128xbf16>
    %162 = vector.shape_cast %161 : vector<1x8x128xbf16> to vector<8x128xbf16>
    %163 = vector.shape_cast %159 : vector<8x128xbf16> to vector<1x8x128xbf16>
    tpu.vector_store %arg10[%160, %c0_80, %c0_81], %163 {strides = array<i32>} : memref<16x8x128xbf16, #tpu.memory_space<vmem>>, vector<1x8x128xbf16>,
    %164 = vector.extract_strided_slice %158 {offsets = [0, 0], sizes = [8, 64], strides = [1, 1]} : vector<8x128xf32> to vector<8x64xf32>
    %165 = vector.extract_strided_slice %158 {offsets = [0, 64], sizes = [8, 64], strides = [1, 1]} : vector<8x128xf32> to vector<8x64xf32>
    %c0_82 = arith.constant 0 : index
    %c0_83 = arith.constant 0 : index
    %166 = vector.load %arg12[%c0_82, %c0_83] : memref<8x64xf32, #tpu.memory_space<vmem>>, vector<8x64xf32>
    tpu.vector_store %arg12[%c0_82, %c0_83], %164 {strides = array<i32>} : memref<8x64xf32, #tpu.memory_space<vmem>>, vector<8x64xf32>,
    %167 = arith.subf %165, %146 : vector<8x64xf32>
    %168 = arith.mulf %167, %167 : vector<8x64xf32>
    %cst_84 = arith.constant dense<0.000000e+00> : vector<8xf32>
    %169 = vector.multi_reduction <add>, %168, %cst_84 [1] : vector<8x64xf32> to vector<8xf32>
    %cst_85 = arith.constant 6.400000e+01 : f32
    %170 = vector.broadcast %cst_85 : f32 to vector<8xf32>
    %171 = arith.divf %169, %170 : vector<8xf32>
    %172 = arith.index_cast %c4_i32 : i32 to index
    %c0_86 = arith.constant 0 : index
    %173 = vector.load %arg11[%172, %c0_86] : memref<16x8xf32, #tpu.memory_space<vmem>>, vector<1x8xf32>
    %174 = vector.shape_cast %173 : vector<1x8xf32> to vector<8xf32>
    %175 = vector.shape_cast %171 : vector<8xf32> to vector<1x8xf32>
    tpu.vector_store %arg11[%172, %c0_86], %175 {strides = array<i32>} : memref<16x8xf32, #tpu.memory_space<vmem>>, vector<1x8xf32>,
    %c5_i32 = arith.constant 5 : i32
    %176 = arith.index_cast %c5_i32 : i32 to index
    %c0_87 = arith.constant 0 : index
    %c0_88 = arith.constant 0 : index
    %177 = vector.load %arg4[%176, %c0_87, %c0_88] : memref<16x8x64xbf16, #tpu.memory_space<vmem>>, vector<1x8x64xbf16>
    %178 = vector.shape_cast %177 : vector<1x8x64xbf16> to vector<8x64xbf16>
    %179 = arith.extf %178 : vector<8x64xbf16> to vector<8x64xf32>
    %c0_89 = arith.constant 0 : index
    %c0_90 = arith.constant 0 : index
    %180 = vector.load %arg12[%c0_89, %c0_90] : memref<8x64xf32, #tpu.memory_space<vmem>>, vector<8x64xf32>
    %181 = arith.mulf %180, %5 : vector<8x64xf32>
    %cst_91 = arith.constant dense<0.000000e+00> : vector<8x32xf32>
    %182 = tpu.matmul %179, %6, %cst_91 {dimension_numbers = #tpu.dot_dimension_numbers<[1], [0], [0], [1], [0, 0, 1, 1], [], []>} : vector<8x64xf32>, vector<64x32xf32>, vector<8x32xf32> -> vector<8x32xf32>
    %cst_92 = arith.constant dense<0.000000e+00> : vector<8x32xf32>
    %183 = tpu.matmul %181, %7, %cst_92 {dimension_numbers = #tpu.dot_dimension_numbers<[1], [0], [0], [1], [0, 0, 1, 1], [], []>} : vector<8x64xf32>, vector<64x32xf32>, vector<8x32xf32> -> vector<8x32xf32>
    %184 = arith.addf %182, %183 : vector<8x32xf32>
    %185 = vector.broadcast %8 : vector<1x32xf32> to vector<8x32xf32>
    %186 = arith.addf %184, %185 : vector<8x32xf32>
    %cst_93 = arith.constant 0.000000e+00 : f32
    %187 = vector.broadcast %cst_93 : f32 to vector<8x32xf32>
    %188 = arith.maximumf %186, %187 : vector<8x32xf32>
    %cst_94 = arith.constant dense<0.000000e+00> : vector<8x128xf32>
    %189 = tpu.matmul %188, %9, %cst_94 {dimension_numbers = #tpu.dot_dimension_numbers<[1], [0], [0], [1], [0, 0, 1, 1], [], []>} : vector<8x32xf32>, vector<32x128xf32>, vector<8x128xf32> -> vector<8x128xf32>
    %190 = vector.broadcast %10 : vector<1x128xf32> to vector<8x128xf32>
    %191 = arith.addf %189, %190 : vector<8x128xf32>
    %192 = arith.truncf %191 : vector<8x128xf32> to vector<8x128xbf16>
    %193 = arith.index_cast %c5_i32 : i32 to index
    %c0_95 = arith.constant 0 : index
    %c0_96 = arith.constant 0 : index
    %194 = vector.load %arg10[%193, %c0_95, %c0_96] : memref<16x8x128xbf16, #tpu.memory_space<vmem>>, vector<1x8x128xbf16>
    %195 = vector.shape_cast %194 : vector<1x8x128xbf16> to vector<8x128xbf16>
    %196 = vector.shape_cast %192 : vector<8x128xbf16> to vector<1x8x128xbf16>
    tpu.vector_store %arg10[%193, %c0_95, %c0_96], %196 {strides = array<i32>} : memref<16x8x128xbf16, #tpu.memory_space<vmem>>, vector<1x8x128xbf16>,
    %197 = vector.extract_strided_slice %191 {offsets = [0, 0], sizes = [8, 64], strides = [1, 1]} : vector<8x128xf32> to vector<8x64xf32>
    %198 = vector.extract_strided_slice %191 {offsets = [0, 64], sizes = [8, 64], strides = [1, 1]} : vector<8x128xf32> to vector<8x64xf32>
    %c0_97 = arith.constant 0 : index
    %c0_98 = arith.constant 0 : index
    %199 = vector.load %arg12[%c0_97, %c0_98] : memref<8x64xf32, #tpu.memory_space<vmem>>, vector<8x64xf32>
    tpu.vector_store %arg12[%c0_97, %c0_98], %197 {strides = array<i32>} : memref<8x64xf32, #tpu.memory_space<vmem>>, vector<8x64xf32>,
    %200 = arith.subf %198, %179 : vector<8x64xf32>
    %201 = arith.mulf %200, %200 : vector<8x64xf32>
    %cst_99 = arith.constant dense<0.000000e+00> : vector<8xf32>
    %202 = vector.multi_reduction <add>, %201, %cst_99 [1] : vector<8x64xf32> to vector<8xf32>
    %cst_100 = arith.constant 6.400000e+01 : f32
    %203 = vector.broadcast %cst_100 : f32 to vector<8xf32>
    %204 = arith.divf %202, %203 : vector<8xf32>
    %205 = arith.index_cast %c5_i32 : i32 to index
    %c0_101 = arith.constant 0 : index
    %206 = vector.load %arg11[%205, %c0_101] : memref<16x8xf32, #tpu.memory_space<vmem>>, vector<1x8xf32>
    %207 = vector.shape_cast %206 : vector<1x8xf32> to vector<8xf32>
    %208 = vector.shape_cast %204 : vector<8xf32> to vector<1x8xf32>
    tpu.vector_store %arg11[%205, %c0_101], %208 {strides = array<i32>} : memref<16x8xf32, #tpu.memory_space<vmem>>, vector<1x8xf32>,
    %c6_i32 = arith.constant 6 : i32
    %209 = arith.index_cast %c6_i32 : i32 to index
    %c0_102 = arith.constant 0 : index
    %c0_103 = arith.constant 0 : index
    %210 = vector.load %arg4[%209, %c0_102, %c0_103] : memref<16x8x64xbf16, #tpu.memory_space<vmem>>, vector<1x8x64xbf16>
    %211 = vector.shape_cast %210 : vector<1x8x64xbf16> to vector<8x64xbf16>
    %212 = arith.extf %211 : vector<8x64xbf16> to vector<8x64xf32>
    %c0_104 = arith.constant 0 : index
    %c0_105 = arith.constant 0 : index
    %213 = vector.load %arg12[%c0_104, %c0_105] : memref<8x64xf32, #tpu.memory_space<vmem>>, vector<8x64xf32>
    %214 = arith.mulf %213, %5 : vector<8x64xf32>
    %cst_106 = arith.constant dense<0.000000e+00> : vector<8x32xf32>
    %215 = tpu.matmul %212, %6, %cst_106 {dimension_numbers = #tpu.dot_dimension_numbers<[1], [0], [0], [1], [0, 0, 1, 1], [], []>} : vector<8x64xf32>, vector<64x32xf32>, vector<8x32xf32> -> vector<8x32xf32>
    %cst_107 = arith.constant dense<0.000000e+00> : vector<8x32xf32>
    %216 = tpu.matmul %214, %7, %cst_107 {dimension_numbers = #tpu.dot_dimension_numbers<[1], [0], [0], [1], [0, 0, 1, 1], [], []>} : vector<8x64xf32>, vector<64x32xf32>, vector<8x32xf32> -> vector<8x32xf32>
    %217 = arith.addf %215, %216 : vector<8x32xf32>
    %218 = vector.broadcast %8 : vector<1x32xf32> to vector<8x32xf32>
    %219 = arith.addf %217, %218 : vector<8x32xf32>
    %cst_108 = arith.constant 0.000000e+00 : f32
    %220 = vector.broadcast %cst_108 : f32 to vector<8x32xf32>
    %221 = arith.maximumf %219, %220 : vector<8x32xf32>
    %cst_109 = arith.constant dense<0.000000e+00> : vector<8x128xf32>
    %222 = tpu.matmul %221, %9, %cst_109 {dimension_numbers = #tpu.dot_dimension_numbers<[1], [0], [0], [1], [0, 0, 1, 1], [], []>} : vector<8x32xf32>, vector<32x128xf32>, vector<8x128xf32> -> vector<8x128xf32>
    %223 = vector.broadcast %10 : vector<1x128xf32> to vector<8x128xf32>
    %224 = arith.addf %222, %223 : vector<8x128xf32>
    %225 = arith.truncf %224 : vector<8x128xf32> to vector<8x128xbf16>
    %226 = arith.index_cast %c6_i32 : i32 to index
    %c0_110 = arith.constant 0 : index
    %c0_111 = arith.constant 0 : index
    %227 = vector.load %arg10[%226, %c0_110, %c0_111] : memref<16x8x128xbf16, #tpu.memory_space<vmem>>, vector<1x8x128xbf16>
    %228 = vector.shape_cast %227 : vector<1x8x128xbf16> to vector<8x128xbf16>
    %229 = vector.shape_cast %225 : vector<8x128xbf16> to vector<1x8x128xbf16>
    tpu.vector_store %arg10[%226, %c0_110, %c0_111], %229 {strides = array<i32>} : memref<16x8x128xbf16, #tpu.memory_space<vmem>>, vector<1x8x128xbf16>,
    %230 = vector.extract_strided_slice %224 {offsets = [0, 0], sizes = [8, 64], strides = [1, 1]} : vector<8x128xf32> to vector<8x64xf32>
    %231 = vector.extract_strided_slice %224 {offsets = [0, 64], sizes = [8, 64], strides = [1, 1]} : vector<8x128xf32> to vector<8x64xf32>
    %c0_112 = arith.constant 0 : index
    %c0_113 = arith.constant 0 : index
    %232 = vector.load %arg12[%c0_112, %c0_113] : memref<8x64xf32, #tpu.memory_space<vmem>>, vector<8x64xf32>
    tpu.vector_store %arg12[%c0_112, %c0_113], %230 {strides = array<i32>} : memref<8x64xf32, #tpu.memory_space<vmem>>, vector<8x64xf32>,
    %233 = arith.subf %231, %212 : vector<8x64xf32>
    %234 = arith.mulf %233, %233 : vector<8x64xf32>
    %cst_114 = arith.constant dense<0.000000e+00> : vector<8xf32>
    %235 = vector.multi_reduction <add>, %234, %cst_114 [1] : vector<8x64xf32> to vector<8xf32>
    %cst_115 = arith.constant 6.400000e+01 : f32
    %236 = vector.broadcast %cst_115 : f32 to vector<8xf32>
    %237 = arith.divf %235, %236 : vector<8xf32>
    %238 = arith.index_cast %c6_i32 : i32 to index
    %c0_116 = arith.constant 0 : index
    %239 = vector.load %arg11[%238, %c0_116] : memref<16x8xf32, #tpu.memory_space<vmem>>, vector<1x8xf32>
    %240 = vector.shape_cast %239 : vector<1x8xf32> to vector<8xf32>
    %241 = vector.shape_cast %237 : vector<8xf32> to vector<1x8xf32>
    tpu.vector_store %arg11[%238, %c0_116], %241 {strides = array<i32>} : memref<16x8xf32, #tpu.memory_space<vmem>>, vector<1x8xf32>,
    %c7_i32 = arith.constant 7 : i32
    %242 = arith.index_cast %c7_i32 : i32 to index
    %c0_117 = arith.constant 0 : index
    %c0_118 = arith.constant 0 : index
    %243 = vector.load %arg4[%242, %c0_117, %c0_118] : memref<16x8x64xbf16, #tpu.memory_space<vmem>>, vector<1x8x64xbf16>
    %244 = vector.shape_cast %243 : vector<1x8x64xbf16> to vector<8x64xbf16>
    %245 = arith.extf %244 : vector<8x64xbf16> to vector<8x64xf32>
    %c0_119 = arith.constant 0 : index
    %c0_120 = arith.constant 0 : index
    %246 = vector.load %arg12[%c0_119, %c0_120] : memref<8x64xf32, #tpu.memory_space<vmem>>, vector<8x64xf32>
    %247 = arith.mulf %246, %5 : vector<8x64xf32>
    %cst_121 = arith.constant dense<0.000000e+00> : vector<8x32xf32>
    %248 = tpu.matmul %245, %6, %cst_121 {dimension_numbers = #tpu.dot_dimension_numbers<[1], [0], [0], [1], [0, 0, 1, 1], [], []>} : vector<8x64xf32>, vector<64x32xf32>, vector<8x32xf32> -> vector<8x32xf32>
    %cst_122 = arith.constant dense<0.000000e+00> : vector<8x32xf32>
    %249 = tpu.matmul %247, %7, %cst_122 {dimension_numbers = #tpu.dot_dimension_numbers<[1], [0], [0], [1], [0, 0, 1, 1], [], []>} : vector<8x64xf32>, vector<64x32xf32>, vector<8x32xf32> -> vector<8x32xf32>
    %250 = arith.addf %248, %249 : vector<8x32xf32>
    %251 = vector.broadcast %8 : vector<1x32xf32> to vector<8x32xf32>
    %252 = arith.addf %250, %251 : vector<8x32xf32>
    %cst_123 = arith.constant 0.000000e+00 : f32
    %253 = vector.broadcast %cst_123 : f32 to vector<8x32xf32>
    %254 = arith.maximumf %252, %253 : vector<8x32xf32>
    %cst_124 = arith.constant dense<0.000000e+00> : vector<8x128xf32>
    %255 = tpu.matmul %254, %9, %cst_124 {dimension_numbers = #tpu.dot_dimension_numbers<[1], [0], [0], [1], [0, 0, 1, 1], [], []>} : vector<8x32xf32>, vector<32x128xf32>, vector<8x128xf32> -> vector<8x128xf32>
    %256 = vector.broadcast %10 : vector<1x128xf32> to vector<8x128xf32>
    %257 = arith.addf %255, %256 : vector<8x128xf32>
    %258 = arith.truncf %257 : vector<8x128xf32> to vector<8x128xbf16>
    %259 = arith.index_cast %c7_i32 : i32 to index
    %c0_125 = arith.constant 0 : index
    %c0_126 = arith.constant 0 : index
    %260 = vector.load %arg10[%259, %c0_125, %c0_126] : memref<16x8x128xbf16, #tpu.memory_space<vmem>>, vector<1x8x128xbf16>
    %261 = vector.shape_cast %260 : vector<1x8x128xbf16> to vector<8x128xbf16>
    %262 = vector.shape_cast %258 : vector<8x128xbf16> to vector<1x8x128xbf16>
    tpu.vector_store %arg10[%259, %c0_125, %c0_126], %262 {strides = array<i32>} : memref<16x8x128xbf16, #tpu.memory_space<vmem>>, vector<1x8x128xbf16>,
    %263 = vector.extract_strided_slice %257 {offsets = [0, 0], sizes = [8, 64], strides = [1, 1]} : vector<8x128xf32> to vector<8x64xf32>
    %264 = vector.extract_strided_slice %257 {offsets = [0, 64], sizes = [8, 64], strides = [1, 1]} : vector<8x128xf32> to vector<8x64xf32>
    %c0_127 = arith.constant 0 : index
    %c0_128 = arith.constant 0 : index
    %265 = vector.load %arg12[%c0_127, %c0_128] : memref<8x64xf32, #tpu.memory_space<vmem>>, vector<8x64xf32>
    tpu.vector_store %arg12[%c0_127, %c0_128], %263 {strides = array<i32>} : memref<8x64xf32, #tpu.memory_space<vmem>>, vector<8x64xf32>,
    %266 = arith.subf %264, %245 : vector<8x64xf32>
    %267 = arith.mulf %266, %266 : vector<8x64xf32>
    %cst_129 = arith.constant dense<0.000000e+00> : vector<8xf32>
    %268 = vector.multi_reduction <add>, %267, %cst_129 [1] : vector<8x64xf32> to vector<8xf32>
    %cst_130 = arith.constant 6.400000e+01 : f32
    %269 = vector.broadcast %cst_130 : f32 to vector<8xf32>
    %270 = arith.divf %268, %269 : vector<8xf32>
    %271 = arith.index_cast %c7_i32 : i32 to index
    %c0_131 = arith.constant 0 : index
    %272 = vector.load %arg11[%271, %c0_131] : memref<16x8xf32, #tpu.memory_space<vmem>>, vector<1x8xf32>
    %273 = vector.shape_cast %272 : vector<1x8xf32> to vector<8xf32>
    %274 = vector.shape_cast %270 : vector<8xf32> to vector<1x8xf32>
    tpu.vector_store %arg11[%271, %c0_131], %274 {strides = array<i32>} : memref<16x8xf32, #tpu.memory_space<vmem>>, vector<1x8xf32>,
    %c8_i32 = arith.constant 8 : i32
    %275 = arith.index_cast %c8_i32 : i32 to index
    %c0_132 = arith.constant 0 : index
    %c0_133 = arith.constant 0 : index
    %276 = vector.load %arg4[%275, %c0_132, %c0_133] : memref<16x8x64xbf16, #tpu.memory_space<vmem>>, vector<1x8x64xbf16>
    %277 = vector.shape_cast %276 : vector<1x8x64xbf16> to vector<8x64xbf16>
    %278 = arith.extf %277 : vector<8x64xbf16> to vector<8x64xf32>
    %c0_134 = arith.constant 0 : index
    %c0_135 = arith.constant 0 : index
    %279 = vector.load %arg12[%c0_134, %c0_135] : memref<8x64xf32, #tpu.memory_space<vmem>>, vector<8x64xf32>
    %280 = arith.mulf %279, %5 : vector<8x64xf32>
    %cst_136 = arith.constant dense<0.000000e+00> : vector<8x32xf32>
    %281 = tpu.matmul %278, %6, %cst_136 {dimension_numbers = #tpu.dot_dimension_numbers<[1], [0], [0], [1], [0, 0, 1, 1], [], []>} : vector<8x64xf32>, vector<64x32xf32>, vector<8x32xf32> -> vector<8x32xf32>
    %cst_137 = arith.constant dense<0.000000e+00> : vector<8x32xf32>
    %282 = tpu.matmul %280, %7, %cst_137 {dimension_numbers = #tpu.dot_dimension_numbers<[1], [0], [0], [1], [0, 0, 1, 1], [], []>} : vector<8x64xf32>, vector<64x32xf32>, vector<8x32xf32> -> vector<8x32xf32>
    %283 = arith.addf %281, %282 : vector<8x32xf32>
    %284 = vector.broadcast %8 : vector<1x32xf32> to vector<8x32xf32>
    %285 = arith.addf %283, %284 : vector<8x32xf32>
    %cst_138 = arith.constant 0.000000e+00 : f32
    %286 = vector.broadcast %cst_138 : f32 to vector<8x32xf32>
    %287 = arith.maximumf %285, %286 : vector<8x32xf32>
    %cst_139 = arith.constant dense<0.000000e+00> : vector<8x128xf32>
    %288 = tpu.matmul %287, %9, %cst_139 {dimension_numbers = #tpu.dot_dimension_numbers<[1], [0], [0], [1], [0, 0, 1, 1], [], []>} : vector<8x32xf32>, vector<32x128xf32>, vector<8x128xf32> -> vector<8x128xf32>
    %289 = vector.broadcast %10 : vector<1x128xf32> to vector<8x128xf32>
    %290 = arith.addf %288, %289 : vector<8x128xf32>
    %291 = arith.truncf %290 : vector<8x128xf32> to vector<8x128xbf16>
    %292 = arith.index_cast %c8_i32 : i32 to index
    %c0_140 = arith.constant 0 : index
    %c0_141 = arith.constant 0 : index
    %293 = vector.load %arg10[%292, %c0_140, %c0_141] : memref<16x8x128xbf16, #tpu.memory_space<vmem>>, vector<1x8x128xbf16>
    %294 = vector.shape_cast %293 : vector<1x8x128xbf16> to vector<8x128xbf16>
    %295 = vector.shape_cast %291 : vector<8x128xbf16> to vector<1x8x128xbf16>
    tpu.vector_store %arg10[%292, %c0_140, %c0_141], %295 {strides = array<i32>} : memref<16x8x128xbf16, #tpu.memory_space<vmem>>, vector<1x8x128xbf16>,
    %296 = vector.extract_strided_slice %290 {offsets = [0, 0], sizes = [8, 64], strides = [1, 1]} : vector<8x128xf32> to vector<8x64xf32>
    %297 = vector.extract_strided_slice %290 {offsets = [0, 64], sizes = [8, 64], strides = [1, 1]} : vector<8x128xf32> to vector<8x64xf32>
    %c0_142 = arith.constant 0 : index
    %c0_143 = arith.constant 0 : index
    %298 = vector.load %arg12[%c0_142, %c0_143] : memref<8x64xf32, #tpu.memory_space<vmem>>, vector<8x64xf32>
    tpu.vector_store %arg12[%c0_142, %c0_143], %296 {strides = array<i32>} : memref<8x64xf32, #tpu.memory_space<vmem>>, vector<8x64xf32>,
    %299 = arith.subf %297, %278 : vector<8x64xf32>
    %300 = arith.mulf %299, %299 : vector<8x64xf32>
    %cst_144 = arith.constant dense<0.000000e+00> : vector<8xf32>
    %301 = vector.multi_reduction <add>, %300, %cst_144 [1] : vector<8x64xf32> to vector<8xf32>
    %cst_145 = arith.constant 6.400000e+01 : f32
    %302 = vector.broadcast %cst_145 : f32 to vector<8xf32>
    %303 = arith.divf %301, %302 : vector<8xf32>
    %304 = arith.index_cast %c8_i32 : i32 to index
    %c0_146 = arith.constant 0 : index
    %305 = vector.load %arg11[%304, %c0_146] : memref<16x8xf32, #tpu.memory_space<vmem>>, vector<1x8xf32>
    %306 = vector.shape_cast %305 : vector<1x8xf32> to vector<8xf32>
    %307 = vector.shape_cast %303 : vector<8xf32> to vector<1x8xf32>
    tpu.vector_store %arg11[%304, %c0_146], %307 {strides = array<i32>} : memref<16x8xf32, #tpu.memory_space<vmem>>, vector<1x8xf32>,
    %c9_i32 = arith.constant 9 : i32
    %308 = arith.index_cast %c9_i32 : i32 to index
    %c0_147 = arith.constant 0 : index
    %c0_148 = arith.constant 0 : index
    %309 = vector.load %arg4[%308, %c0_147, %c0_148] : memref<16x8x64xbf16, #tpu.memory_space<vmem>>, vector<1x8x64xbf16>
    %310 = vector.shape_cast %309 : vector<1x8x64xbf16> to vector<8x64xbf16>
    %311 = arith.extf %310 : vector<8x64xbf16> to vector<8x64xf32>
    %c0_149 = arith.constant 0 : index
    %c0_150 = arith.constant 0 : index
    %312 = vector.load %arg12[%c0_149, %c0_150] : memref<8x64xf32, #tpu.memory_space<vmem>>, vector<8x64xf32>
    %313 = arith.mulf %312, %5 : vector<8x64xf32>
    %cst_151 = arith.constant dense<0.000000e+00> : vector<8x32xf32>
    %314 = tpu.matmul %311, %6, %cst_151 {dimension_numbers = #tpu.dot_dimension_numbers<[1], [0], [0], [1], [0, 0, 1, 1], [], []>} : vector<8x64xf32>, vector<64x32xf32>, vector<8x32xf32> -> vector<8x32xf32>
    %cst_152 = arith.constant dense<0.000000e+00> : vector<8x32xf32>
    %315 = tpu.matmul %313, %7, %cst_152 {dimension_numbers = #tpu.dot_dimension_numbers<[1], [0], [0], [1], [0, 0, 1, 1], [], []>} : vector<8x64xf32>, vector<64x32xf32>, vector<8x32xf32> -> vector<8x32xf32>
    %316 = arith.addf %314, %315 : vector<8x32xf32>
    %317 = vector.broadcast %8 : vector<1x32xf32> to vector<8x32xf32>
    %318 = arith.addf %316, %317 : vector<8x32xf32>
    %cst_153 = arith.constant 0.000000e+00 : f32
    %319 = vector.broadcast %cst_153 : f32 to vector<8x32xf32>
    %320 = arith.maximumf %318, %319 : vector<8x32xf32>
    %cst_154 = arith.constant dense<0.000000e+00> : vector<8x128xf32>
    %321 = tpu.matmul %320, %9, %cst_154 {dimension_numbers = #tpu.dot_dimension_numbers<[1], [0], [0], [1], [0, 0, 1, 1], [], []>} : vector<8x32xf32>, vector<32x128xf32>, vector<8x128xf32> -> vector<8x128xf32>
    %322 = vector.broadcast %10 : vector<1x128xf32> to vector<8x128xf32>
    %323 = arith.addf %321, %322 : vector<8x128xf32>
    %324 = arith.truncf %323 : vector<8x128xf32> to vector<8x128xbf16>
    %325 = arith.index_cast %c9_i32 : i32 to index
    %c0_155 = arith.constant 0 : index
    %c0_156 = arith.constant 0 : index
    %326 = vector.load %arg10[%325, %c0_155, %c0_156] : memref<16x8x128xbf16, #tpu.memory_space<vmem>>, vector<1x8x128xbf16>
    %327 = vector.shape_cast %326 : vector<1x8x128xbf16> to vector<8x128xbf16>
    %328 = vector.shape_cast %324 : vector<8x128xbf16> to vector<1x8x128xbf16>
    tpu.vector_store %arg10[%325, %c0_155, %c0_156], %328 {strides = array<i32>} : memref<16x8x128xbf16, #tpu.memory_space<vmem>>, vector<1x8x128xbf16>,
    %329 = vector.extract_strided_slice %323 {offsets = [0, 0], sizes = [8, 64], strides = [1, 1]} : vector<8x128xf32> to vector<8x64xf32>
    %330 = vector.extract_strided_slice %323 {offsets = [0, 64], sizes = [8, 64], strides = [1, 1]} : vector<8x128xf32> to vector<8x64xf32>
    %c0_157 = arith.constant 0 : index
    %c0_158 = arith.constant 0 : index
    %331 = vector.load %arg12[%c0_157, %c0_158] : memref<8x64xf32, #tpu.memory_space<vmem>>, vector<8x64xf32>
    tpu.vector_store %arg12[%c0_157, %c0_158], %329 {strides = array<i32>} : memref<8x64xf32, #tpu.memory_space<vmem>>, vector<8x64xf32>,
    %332 = arith.subf %330, %311 : vector<8x64xf32>
    %333 = arith.mulf %332, %332 : vector<8x64xf32>
    %cst_159 = arith.constant dense<0.000000e+00> : vector<8xf32>
    %334 = vector.multi_reduction <add>, %333, %cst_159 [1] : vector<8x64xf32> to vector<8xf32>
    %cst_160 = arith.constant 6.400000e+01 : f32
    %335 = vector.broadcast %cst_160 : f32 to vector<8xf32>
    %336 = arith.divf %334, %335 : vector<8xf32>
    %337 = arith.index_cast %c9_i32 : i32 to index
    %c0_161 = arith.constant 0 : index
    %338 = vector.load %arg11[%337, %c0_161] : memref<16x8xf32, #tpu.memory_space<vmem>>, vector<1x8xf32>
    %339 = vector.shape_cast %338 : vector<1x8xf32> to vector<8xf32>
    %340 = vector.shape_cast %336 : vector<8xf32> to vector<1x8xf32>
    tpu.vector_store %arg11[%337, %c0_161], %340 {strides = array<i32>} : memref<16x8xf32, #tpu.memory_space<vmem>>, vector<1x8xf32>,
    %c10_i32 = arith.constant 10 : i32
    %341 = arith.index_cast %c10_i32 : i32 to index
    %c0_162 = arith.constant 0 : index
    %c0_163 = arith.constant 0 : index
    %342 = vector.load %arg4[%341, %c0_162, %c0_163] : memref<16x8x64xbf16, #tpu.memory_space<vmem>>, vector<1x8x64xbf16>
    %343 = vector.shape_cast %342 : vector<1x8x64xbf16> to vector<8x64xbf16>
    %344 = arith.extf %343 : vector<8x64xbf16> to vector<8x64xf32>
    %c0_164 = arith.constant 0 : index
    %c0_165 = arith.constant 0 : index
    %345 = vector.load %arg12[%c0_164, %c0_165] : memref<8x64xf32, #tpu.memory_space<vmem>>, vector<8x64xf32>
    %346 = arith.mulf %345, %5 : vector<8x64xf32>
    %cst_166 = arith.constant dense<0.000000e+00> : vector<8x32xf32>
    %347 = tpu.matmul %344, %6, %cst_166 {dimension_numbers = #tpu.dot_dimension_numbers<[1], [0], [0], [1], [0, 0, 1, 1], [], []>} : vector<8x64xf32>, vector<64x32xf32>, vector<8x32xf32> -> vector<8x32xf32>
    %cst_167 = arith.constant dense<0.000000e+00> : vector<8x32xf32>
    %348 = tpu.matmul %346, %7, %cst_167 {dimension_numbers = #tpu.dot_dimension_numbers<[1], [0], [0], [1], [0, 0, 1, 1], [], []>} : vector<8x64xf32>, vector<64x32xf32>, vector<8x32xf32> -> vector<8x32xf32>
    %349 = arith.addf %347, %348 : vector<8x32xf32>
    %350 = vector.broadcast %8 : vector<1x32xf32> to vector<8x32xf32>
    %351 = arith.addf %349, %350 : vector<8x32xf32>
    %cst_168 = arith.constant 0.000000e+00 : f32
    %352 = vector.broadcast %cst_168 : f32 to vector<8x32xf32>
    %353 = arith.maximumf %351, %352 : vector<8x32xf32>
    %cst_169 = arith.constant dense<0.000000e+00> : vector<8x128xf32>
    %354 = tpu.matmul %353, %9, %cst_169 {dimension_numbers = #tpu.dot_dimension_numbers<[1], [0], [0], [1], [0, 0, 1, 1], [], []>} : vector<8x32xf32>, vector<32x128xf32>, vector<8x128xf32> -> vector<8x128xf32>
    %355 = vector.broadcast %10 : vector<1x128xf32> to vector<8x128xf32>
    %356 = arith.addf %354, %355 : vector<8x128xf32>
    %357 = arith.truncf %356 : vector<8x128xf32> to vector<8x128xbf16>
    %358 = arith.index_cast %c10_i32 : i32 to index
    %c0_170 = arith.constant 0 : index
    %c0_171 = arith.constant 0 : index
    %359 = vector.load %arg10[%358, %c0_170, %c0_171] : memref<16x8x128xbf16, #tpu.memory_space<vmem>>, vector<1x8x128xbf16>
    %360 = vector.shape_cast %359 : vector<1x8x128xbf16> to vector<8x128xbf16>
    %361 = vector.shape_cast %357 : vector<8x128xbf16> to vector<1x8x128xbf16>
    tpu.vector_store %arg10[%358, %c0_170, %c0_171], %361 {strides = array<i32>} : memref<16x8x128xbf16, #tpu.memory_space<vmem>>, vector<1x8x128xbf16>,
    %362 = vector.extract_strided_slice %356 {offsets = [0, 0], sizes = [8, 64], strides = [1, 1]} : vector<8x128xf32> to vector<8x64xf32>
    %363 = vector.extract_strided_slice %356 {offsets = [0, 64], sizes = [8, 64], strides = [1, 1]} : vector<8x128xf32> to vector<8x64xf32>
    %c0_172 = arith.constant 0 : index
    %c0_173 = arith.constant 0 : index
    %364 = vector.load %arg12[%c0_172, %c0_173] : memref<8x64xf32, #tpu.memory_space<vmem>>, vector<8x64xf32>
    tpu.vector_store %arg12[%c0_172, %c0_173], %362 {strides = array<i32>} : memref<8x64xf32, #tpu.memory_space<vmem>>, vector<8x64xf32>,
    %365 = arith.subf %363, %344 : vector<8x64xf32>
    %366 = arith.mulf %365, %365 : vector<8x64xf32>
    %cst_174 = arith.constant dense<0.000000e+00> : vector<8xf32>
    %367 = vector.multi_reduction <add>, %366, %cst_174 [1] : vector<8x64xf32> to vector<8xf32>
    %cst_175 = arith.constant 6.400000e+01 : f32
    %368 = vector.broadcast %cst_175 : f32 to vector<8xf32>
    %369 = arith.divf %367, %368 : vector<8xf32>
    %370 = arith.index_cast %c10_i32 : i32 to index
    %c0_176 = arith.constant 0 : index
    %371 = vector.load %arg11[%370, %c0_176] : memref<16x8xf32, #tpu.memory_space<vmem>>, vector<1x8xf32>
    %372 = vector.shape_cast %371 : vector<1x8xf32> to vector<8xf32>
    %373 = vector.shape_cast %369 : vector<8xf32> to vector<1x8xf32>
    tpu.vector_store %arg11[%370, %c0_176], %373 {strides = array<i32>} : memref<16x8xf32, #tpu.memory_space<vmem>>, vector<1x8xf32>,
    %c11_i32 = arith.constant 11 : i32
    %374 = arith.index_cast %c11_i32 : i32 to index
    %c0_177 = arith.constant 0 : index
    %c0_178 = arith.constant 0 : index
    %375 = vector.load %arg4[%374, %c0_177, %c0_178] : memref<16x8x64xbf16, #tpu.memory_space<vmem>>, vector<1x8x64xbf16>
    %376 = vector.shape_cast %375 : vector<1x8x64xbf16> to vector<8x64xbf16>
    %377 = arith.extf %376 : vector<8x64xbf16> to vector<8x64xf32>
    %c0_179 = arith.constant 0 : index
    %c0_180 = arith.constant 0 : index
    %378 = vector.load %arg12[%c0_179, %c0_180] : memref<8x64xf32, #tpu.memory_space<vmem>>, vector<8x64xf32>
    %379 = arith.mulf %378, %5 : vector<8x64xf32>
    %cst_181 = arith.constant dense<0.000000e+00> : vector<8x32xf32>
    %380 = tpu.matmul %377, %6, %cst_181 {dimension_numbers = #tpu.dot_dimension_numbers<[1], [0], [0], [1], [0, 0, 1, 1], [], []>} : vector<8x64xf32>, vector<64x32xf32>, vector<8x32xf32> -> vector<8x32xf32>
    %cst_182 = arith.constant dense<0.000000e+00> : vector<8x32xf32>
    %381 = tpu.matmul %379, %7, %cst_182 {dimension_numbers = #tpu.dot_dimension_numbers<[1], [0], [0], [1], [0, 0, 1, 1], [], []>} : vector<8x64xf32>, vector<64x32xf32>, vector<8x32xf32> -> vector<8x32xf32>
    %382 = arith.addf %380, %381 : vector<8x32xf32>
    %383 = vector.broadcast %8 : vector<1x32xf32> to vector<8x32xf32>
    %384 = arith.addf %382, %383 : vector<8x32xf32>
    %cst_183 = arith.constant 0.000000e+00 : f32
    %385 = vector.broadcast %cst_183 : f32 to vector<8x32xf32>
    %386 = arith.maximumf %384, %385 : vector<8x32xf32>
    %cst_184 = arith.constant dense<0.000000e+00> : vector<8x128xf32>
    %387 = tpu.matmul %386, %9, %cst_184 {dimension_numbers = #tpu.dot_dimension_numbers<[1], [0], [0], [1], [0, 0, 1, 1], [], []>} : vector<8x32xf32>, vector<32x128xf32>, vector<8x128xf32> -> vector<8x128xf32>
    %388 = vector.broadcast %10 : vector<1x128xf32> to vector<8x128xf32>
    %389 = arith.addf %387, %388 : vector<8x128xf32>
    %390 = arith.truncf %389 : vector<8x128xf32> to vector<8x128xbf16>
    %391 = arith.index_cast %c11_i32 : i32 to index
    %c0_185 = arith.constant 0 : index
    %c0_186 = arith.constant 0 : index
    %392 = vector.load %arg10[%391, %c0_185, %c0_186] : memref<16x8x128xbf16, #tpu.memory_space<vmem>>, vector<1x8x128xbf16>
    %393 = vector.shape_cast %392 : vector<1x8x128xbf16> to vector<8x128xbf16>
    %394 = vector.shape_cast %390 : vector<8x128xbf16> to vector<1x8x128xbf16>
    tpu.vector_store %arg10[%391, %c0_185, %c0_186], %394 {strides = array<i32>} : memref<16x8x128xbf16, #tpu.memory_space<vmem>>, vector<1x8x128xbf16>,
    %395 = vector.extract_strided_slice %389 {offsets = [0, 0], sizes = [8, 64], strides = [1, 1]} : vector<8x128xf32> to vector<8x64xf32>
    %396 = vector.extract_strided_slice %389 {offsets = [0, 64], sizes = [8, 64], strides = [1, 1]} : vector<8x128xf32> to vector<8x64xf32>
    %c0_187 = arith.constant 0 : index
    %c0_188 = arith.constant 0 : index
    %397 = vector.load %arg12[%c0_187, %c0_188] : memref<8x64xf32, #tpu.memory_space<vmem>>, vector<8x64xf32>
    tpu.vector_store %arg12[%c0_187, %c0_188], %395 {strides = array<i32>} : memref<8x64xf32, #tpu.memory_space<vmem>>, vector<8x64xf32>,
    %398 = arith.subf %396, %377 : vector<8x64xf32>
    %399 = arith.mulf %398, %398 : vector<8x64xf32>
    %cst_189 = arith.constant dense<0.000000e+00> : vector<8xf32>
    %400 = vector.multi_reduction <add>, %399, %cst_189 [1] : vector<8x64xf32> to vector<8xf32>
    %cst_190 = arith.constant 6.400000e+01 : f32
    %401 = vector.broadcast %cst_190 : f32 to vector<8xf32>
    %402 = arith.divf %400, %401 : vector<8xf32>
    %403 = arith.index_cast %c11_i32 : i32 to index
    %c0_191 = arith.constant 0 : index
    %404 = vector.load %arg11[%403, %c0_191] : memref<16x8xf32, #tpu.memory_space<vmem>>, vector<1x8xf32>
    %405 = vector.shape_cast %404 : vector<1x8xf32> to vector<8xf32>
    %406 = vector.shape_cast %402 : vector<8xf32> to vector<1x8xf32>
    tpu.vector_store %arg11[%403, %c0_191], %406 {strides = array<i32>} : memref<16x8xf32, #tpu.memory_space<vmem>>, vector<1x8xf32>,
    %c12_i32 = arith.constant 12 : i32
    %407 = arith.index_cast %c12_i32 : i32 to index
    %c0_192 = arith.constant 0 : index
    %c0_193 = arith.constant 0 : index
    %408 = vector.load %arg4[%407, %c0_192, %c0_193] : memref<16x8x64xbf16, #tpu.memory_space<vmem>>, vector<1x8x64xbf16>
    %409 = vector.shape_cast %408 : vector<1x8x64xbf16> to vector<8x64xbf16>
    %410 = arith.extf %409 : vector<8x64xbf16> to vector<8x64xf32>
    %c0_194 = arith.constant 0 : index
    %c0_195 = arith.constant 0 : index
    %411 = vector.load %arg12[%c0_194, %c0_195] : memref<8x64xf32, #tpu.memory_space<vmem>>, vector<8x64xf32>
    %412 = arith.mulf %411, %5 : vector<8x64xf32>
    %cst_196 = arith.constant dense<0.000000e+00> : vector<8x32xf32>
    %413 = tpu.matmul %410, %6, %cst_196 {dimension_numbers = #tpu.dot_dimension_numbers<[1], [0], [0], [1], [0, 0, 1, 1], [], []>} : vector<8x64xf32>, vector<64x32xf32>, vector<8x32xf32> -> vector<8x32xf32>
    %cst_197 = arith.constant dense<0.000000e+00> : vector<8x32xf32>
    %414 = tpu.matmul %412, %7, %cst_197 {dimension_numbers = #tpu.dot_dimension_numbers<[1], [0], [0], [1], [0, 0, 1, 1], [], []>} : vector<8x64xf32>, vector<64x32xf32>, vector<8x32xf32> -> vector<8x32xf32>
    %415 = arith.addf %413, %414 : vector<8x32xf32>
    %416 = vector.broadcast %8 : vector<1x32xf32> to vector<8x32xf32>
    %417 = arith.addf %415, %416 : vector<8x32xf32>
    %cst_198 = arith.constant 0.000000e+00 : f32
    %418 = vector.broadcast %cst_198 : f32 to vector<8x32xf32>
    %419 = arith.maximumf %417, %418 : vector<8x32xf32>
    %cst_199 = arith.constant dense<0.000000e+00> : vector<8x128xf32>
    %420 = tpu.matmul %419, %9, %cst_199 {dimension_numbers = #tpu.dot_dimension_numbers<[1], [0], [0], [1], [0, 0, 1, 1], [], []>} : vector<8x32xf32>, vector<32x128xf32>, vector<8x128xf32> -> vector<8x128xf32>
    %421 = vector.broadcast %10 : vector<1x128xf32> to vector<8x128xf32>
    %422 = arith.addf %420, %421 : vector<8x128xf32>
    %423 = arith.truncf %422 : vector<8x128xf32> to vector<8x128xbf16>
    %424 = arith.index_cast %c12_i32 : i32 to index
    %c0_200 = arith.constant 0 : index
    %c0_201 = arith.constant 0 : index
    %425 = vector.load %arg10[%424, %c0_200, %c0_201] : memref<16x8x128xbf16, #tpu.memory_space<vmem>>, vector<1x8x128xbf16>
    %426 = vector.shape_cast %425 : vector<1x8x128xbf16> to vector<8x128xbf16>
    %427 = vector.shape_cast %423 : vector<8x128xbf16> to vector<1x8x128xbf16>
    tpu.vector_store %arg10[%424, %c0_200, %c0_201], %427 {strides = array<i32>} : memref<16x8x128xbf16, #tpu.memory_space<vmem>>, vector<1x8x128xbf16>,
    %428 = vector.extract_strided_slice %422 {offsets = [0, 0], sizes = [8, 64], strides = [1, 1]} : vector<8x128xf32> to vector<8x64xf32>
    %429 = vector.extract_strided_slice %422 {offsets = [0, 64], sizes = [8, 64], strides = [1, 1]} : vector<8x128xf32> to vector<8x64xf32>
    %c0_202 = arith.constant 0 : index
    %c0_203 = arith.constant 0 : index
    %430 = vector.load %arg12[%c0_202, %c0_203] : memref<8x64xf32, #tpu.memory_space<vmem>>, vector<8x64xf32>
    tpu.vector_store %arg12[%c0_202, %c0_203], %428 {strides = array<i32>} : memref<8x64xf32, #tpu.memory_space<vmem>>, vector<8x64xf32>,
    %431 = arith.subf %429, %410 : vector<8x64xf32>
    %432 = arith.mulf %431, %431 : vector<8x64xf32>
    %cst_204 = arith.constant dense<0.000000e+00> : vector<8xf32>
    %433 = vector.multi_reduction <add>, %432, %cst_204 [1] : vector<8x64xf32> to vector<8xf32>
    %cst_205 = arith.constant 6.400000e+01 : f32
    %434 = vector.broadcast %cst_205 : f32 to vector<8xf32>
    %435 = arith.divf %433, %434 : vector<8xf32>
    %436 = arith.index_cast %c12_i32 : i32 to index
    %c0_206 = arith.constant 0 : index
    %437 = vector.load %arg11[%436, %c0_206] : memref<16x8xf32, #tpu.memory_space<vmem>>, vector<1x8xf32>
    %438 = vector.shape_cast %437 : vector<1x8xf32> to vector<8xf32>
    %439 = vector.shape_cast %435 : vector<8xf32> to vector<1x8xf32>
    tpu.vector_store %arg11[%436, %c0_206], %439 {strides = array<i32>} : memref<16x8xf32, #tpu.memory_space<vmem>>, vector<1x8xf32>,
    %c13_i32 = arith.constant 13 : i32
    %440 = arith.index_cast %c13_i32 : i32 to index
    %c0_207 = arith.constant 0 : index
    %c0_208 = arith.constant 0 : index
    %441 = vector.load %arg4[%440, %c0_207, %c0_208] : memref<16x8x64xbf16, #tpu.memory_space<vmem>>, vector<1x8x64xbf16>
    %442 = vector.shape_cast %441 : vector<1x8x64xbf16> to vector<8x64xbf16>
    %443 = arith.extf %442 : vector<8x64xbf16> to vector<8x64xf32>
    %c0_209 = arith.constant 0 : index
    %c0_210 = arith.constant 0 : index
    %444 = vector.load %arg12[%c0_209, %c0_210] : memref<8x64xf32, #tpu.memory_space<vmem>>, vector<8x64xf32>
    %445 = arith.mulf %444, %5 : vector<8x64xf32>
    %cst_211 = arith.constant dense<0.000000e+00> : vector<8x32xf32>
    %446 = tpu.matmul %443, %6, %cst_211 {dimension_numbers = #tpu.dot_dimension_numbers<[1], [0], [0], [1], [0, 0, 1, 1], [], []>} : vector<8x64xf32>, vector<64x32xf32>, vector<8x32xf32> -> vector<8x32xf32>
    %cst_212 = arith.constant dense<0.000000e+00> : vector<8x32xf32>
    %447 = tpu.matmul %445, %7, %cst_212 {dimension_numbers = #tpu.dot_dimension_numbers<[1], [0], [0], [1], [0, 0, 1, 1], [], []>} : vector<8x64xf32>, vector<64x32xf32>, vector<8x32xf32> -> vector<8x32xf32>
    %448 = arith.addf %446, %447 : vector<8x32xf32>
    %449 = vector.broadcast %8 : vector<1x32xf32> to vector<8x32xf32>
    %450 = arith.addf %448, %449 : vector<8x32xf32>
    %cst_213 = arith.constant 0.000000e+00 : f32
    %451 = vector.broadcast %cst_213 : f32 to vector<8x32xf32>
    %452 = arith.maximumf %450, %451 : vector<8x32xf32>
    %cst_214 = arith.constant dense<0.000000e+00> : vector<8x128xf32>
    %453 = tpu.matmul %452, %9, %cst_214 {dimension_numbers = #tpu.dot_dimension_numbers<[1], [0], [0], [1], [0, 0, 1, 1], [], []>} : vector<8x32xf32>, vector<32x128xf32>, vector<8x128xf32> -> vector<8x128xf32>
    %454 = vector.broadcast %10 : vector<1x128xf32> to vector<8x128xf32>
    %455 = arith.addf %453, %454 : vector<8x128xf32>
    %456 = arith.truncf %455 : vector<8x128xf32> to vector<8x128xbf16>
    %457 = arith.index_cast %c13_i32 : i32 to index
    %c0_215 = arith.constant 0 : index
    %c0_216 = arith.constant 0 : index
    %458 = vector.load %arg10[%457, %c0_215, %c0_216] : memref<16x8x128xbf16, #tpu.memory_space<vmem>>, vector<1x8x128xbf16>
    %459 = vector.shape_cast %458 : vector<1x8x128xbf16> to vector<8x128xbf16>
    %460 = vector.shape_cast %456 : vector<8x128xbf16> to vector<1x8x128xbf16>
    tpu.vector_store %arg10[%457, %c0_215, %c0_216], %460 {strides = array<i32>} : memref<16x8x128xbf16, #tpu.memory_space<vmem>>, vector<1x8x128xbf16>,
    %461 = vector.extract_strided_slice %455 {offsets = [0, 0], sizes = [8, 64], strides = [1, 1]} : vector<8x128xf32> to vector<8x64xf32>
    %462 = vector.extract_strided_slice %455 {offsets = [0, 64], sizes = [8, 64], strides = [1, 1]} : vector<8x128xf32> to vector<8x64xf32>
    %c0_217 = arith.constant 0 : index
    %c0_218 = arith.constant 0 : index
    %463 = vector.load %arg12[%c0_217, %c0_218] : memref<8x64xf32, #tpu.memory_space<vmem>>, vector<8x64xf32>
    tpu.vector_store %arg12[%c0_217, %c0_218], %461 {strides = array<i32>} : memref<8x64xf32, #tpu.memory_space<vmem>>, vector<8x64xf32>,
    %464 = arith.subf %462, %443 : vector<8x64xf32>
    %465 = arith.mulf %464, %464 : vector<8x64xf32>
    %cst_219 = arith.constant dense<0.000000e+00> : vector<8xf32>
    %466 = vector.multi_reduction <add>, %465, %cst_219 [1] : vector<8x64xf32> to vector<8xf32>
    %cst_220 = arith.constant 6.400000e+01 : f32
    %467 = vector.broadcast %cst_220 : f32 to vector<8xf32>
    %468 = arith.divf %466, %467 : vector<8xf32>
    %469 = arith.index_cast %c13_i32 : i32 to index
    %c0_221 = arith.constant 0 : index
    %470 = vector.load %arg11[%469, %c0_221] : memref<16x8xf32, #tpu.memory_space<vmem>>, vector<1x8xf32>
    %471 = vector.shape_cast %470 : vector<1x8xf32> to vector<8xf32>
    %472 = vector.shape_cast %468 : vector<8xf32> to vector<1x8xf32>
    tpu.vector_store %arg11[%469, %c0_221], %472 {strides = array<i32>} : memref<16x8xf32, #tpu.memory_space<vmem>>, vector<1x8xf32>,
    %c14_i32 = arith.constant 14 : i32
    %473 = arith.index_cast %c14_i32 : i32 to index
    %c0_222 = arith.constant 0 : index
    %c0_223 = arith.constant 0 : index
    %474 = vector.load %arg4[%473, %c0_222, %c0_223] : memref<16x8x64xbf16, #tpu.memory_space<vmem>>, vector<1x8x64xbf16>
    %475 = vector.shape_cast %474 : vector<1x8x64xbf16> to vector<8x64xbf16>
    %476 = arith.extf %475 : vector<8x64xbf16> to vector<8x64xf32>
    %c0_224 = arith.constant 0 : index
    %c0_225 = arith.constant 0 : index
    %477 = vector.load %arg12[%c0_224, %c0_225] : memref<8x64xf32, #tpu.memory_space<vmem>>, vector<8x64xf32>
    %478 = arith.mulf %477, %5 : vector<8x64xf32>
    %cst_226 = arith.constant dense<0.000000e+00> : vector<8x32xf32>
    %479 = tpu.matmul %476, %6, %cst_226 {dimension_numbers = #tpu.dot_dimension_numbers<[1], [0], [0], [1], [0, 0, 1, 1], [], []>} : vector<8x64xf32>, vector<64x32xf32>, vector<8x32xf32> -> vector<8x32xf32>
    %cst_227 = arith.constant dense<0.000000e+00> : vector<8x32xf32>
    %480 = tpu.matmul %478, %7, %cst_227 {dimension_numbers = #tpu.dot_dimension_numbers<[1], [0], [0], [1], [0, 0, 1, 1], [], []>} : vector<8x64xf32>, vector<64x32xf32>, vector<8x32xf32> -> vector<8x32xf32>
    %481 = arith.addf %479, %480 : vector<8x32xf32>
    %482 = vector.broadcast %8 : vector<1x32xf32> to vector<8x32xf32>
    %483 = arith.addf %481, %482 : vector<8x32xf32>
    %cst_228 = arith.constant 0.000000e+00 : f32
    %484 = vector.broadcast %cst_228 : f32 to vector<8x32xf32>
    %485 = arith.maximumf %483, %484 : vector<8x32xf32>
    %cst_229 = arith.constant dense<0.000000e+00> : vector<8x128xf32>
    %486 = tpu.matmul %485, %9, %cst_229 {dimension_numbers = #tpu.dot_dimension_numbers<[1], [0], [0], [1], [0, 0, 1, 1], [], []>} : vector<8x32xf32>, vector<32x128xf32>, vector<8x128xf32> -> vector<8x128xf32>
    %487 = vector.broadcast %10 : vector<1x128xf32> to vector<8x128xf32>
    %488 = arith.addf %486, %487 : vector<8x128xf32>
    %489 = arith.truncf %488 : vector<8x128xf32> to vector<8x128xbf16>
    %490 = arith.index_cast %c14_i32 : i32 to index
    %c0_230 = arith.constant 0 : index
    %c0_231 = arith.constant 0 : index
    %491 = vector.load %arg10[%490, %c0_230, %c0_231] : memref<16x8x128xbf16, #tpu.memory_space<vmem>>, vector<1x8x128xbf16>
    %492 = vector.shape_cast %491 : vector<1x8x128xbf16> to vector<8x128xbf16>
    %493 = vector.shape_cast %489 : vector<8x128xbf16> to vector<1x8x128xbf16>
    tpu.vector_store %arg10[%490, %c0_230, %c0_231], %493 {strides = array<i32>} : memref<16x8x128xbf16, #tpu.memory_space<vmem>>, vector<1x8x128xbf16>,
    %494 = vector.extract_strided_slice %488 {offsets = [0, 0], sizes = [8, 64], strides = [1, 1]} : vector<8x128xf32> to vector<8x64xf32>
    %495 = vector.extract_strided_slice %488 {offsets = [0, 64], sizes = [8, 64], strides = [1, 1]} : vector<8x128xf32> to vector<8x64xf32>
    %c0_232 = arith.constant 0 : index
    %c0_233 = arith.constant 0 : index
    %496 = vector.load %arg12[%c0_232, %c0_233] : memref<8x64xf32, #tpu.memory_space<vmem>>, vector<8x64xf32>
    tpu.vector_store %arg12[%c0_232, %c0_233], %494 {strides = array<i32>} : memref<8x64xf32, #tpu.memory_space<vmem>>, vector<8x64xf32>,
    %497 = arith.subf %495, %476 : vector<8x64xf32>
    %498 = arith.mulf %497, %497 : vector<8x64xf32>
    %cst_234 = arith.constant dense<0.000000e+00> : vector<8xf32>
    %499 = vector.multi_reduction <add>, %498, %cst_234 [1] : vector<8x64xf32> to vector<8xf32>
    %cst_235 = arith.constant 6.400000e+01 : f32
    %500 = vector.broadcast %cst_235 : f32 to vector<8xf32>
    %501 = arith.divf %499, %500 : vector<8xf32>
    %502 = arith.index_cast %c14_i32 : i32 to index
    %c0_236 = arith.constant 0 : index
    %503 = vector.load %arg11[%502, %c0_236] : memref<16x8xf32, #tpu.memory_space<vmem>>, vector<1x8xf32>
    %504 = vector.shape_cast %503 : vector<1x8xf32> to vector<8xf32>
    %505 = vector.shape_cast %501 : vector<8xf32> to vector<1x8xf32>
    tpu.vector_store %arg11[%502, %c0_236], %505 {strides = array<i32>} : memref<16x8xf32, #tpu.memory_space<vmem>>, vector<1x8xf32>,
    %c15_i32 = arith.constant 15 : i32
    %506 = arith.index_cast %c15_i32 : i32 to index
    %c0_237 = arith.constant 0 : index
    %c0_238 = arith.constant 0 : index
    %507 = vector.load %arg4[%506, %c0_237, %c0_238] : memref<16x8x64xbf16, #tpu.memory_space<vmem>>, vector<1x8x64xbf16>
    %508 = vector.shape_cast %507 : vector<1x8x64xbf16> to vector<8x64xbf16>
    %509 = arith.extf %508 : vector<8x64xbf16> to vector<8x64xf32>
    %c0_239 = arith.constant 0 : index
    %c0_240 = arith.constant 0 : index
    %510 = vector.load %arg12[%c0_239, %c0_240] : memref<8x64xf32, #tpu.memory_space<vmem>>, vector<8x64xf32>
    %511 = arith.mulf %510, %5 : vector<8x64xf32>
    %cst_241 = arith.constant dense<0.000000e+00> : vector<8x32xf32>
    %512 = tpu.matmul %509, %6, %cst_241 {dimension_numbers = #tpu.dot_dimension_numbers<[1], [0], [0], [1], [0, 0, 1, 1], [], []>} : vector<8x64xf32>, vector<64x32xf32>, vector<8x32xf32> -> vector<8x32xf32>
    %cst_242 = arith.constant dense<0.000000e+00> : vector<8x32xf32>
    %513 = tpu.matmul %511, %7, %cst_242 {dimension_numbers = #tpu.dot_dimension_numbers<[1], [0], [0], [1], [0, 0, 1, 1], [], []>} : vector<8x64xf32>, vector<64x32xf32>, vector<8x32xf32> -> vector<8x32xf32>
    %514 = arith.addf %512, %513 : vector<8x32xf32>
    %515 = vector.broadcast %8 : vector<1x32xf32> to vector<8x32xf32>
    %516 = arith.addf %514, %515 : vector<8x32xf32>
    %cst_243 = arith.constant 0.000000e+00 : f32
    %517 = vector.broadcast %cst_243 : f32 to vector<8x32xf32>
    %518 = arith.maximumf %516, %517 : vector<8x32xf32>
    %cst_244 = arith.constant dense<0.000000e+00> : vector<8x128xf32>
    %519 = tpu.matmul %518, %9, %cst_244 {dimension_numbers = #tpu.dot_dimension_numbers<[1], [0], [0], [1], [0, 0, 1, 1], [], []>} : vector<8x32xf32>, vector<32x128xf32>, vector<8x128xf32> -> vector<8x128xf32>
    %520 = vector.broadcast %10 : vector<1x128xf32> to vector<8x128xf32>
    %521 = arith.addf %519, %520 : vector<8x128xf32>
    %522 = arith.truncf %521 : vector<8x128xf32> to vector<8x128xbf16>
    %523 = arith.index_cast %c15_i32 : i32 to index
    %c0_245 = arith.constant 0 : index
    %c0_246 = arith.constant 0 : index
    %524 = vector.load %arg10[%523, %c0_245, %c0_246] : memref<16x8x128xbf16, #tpu.memory_space<vmem>>, vector<1x8x128xbf16>
    %525 = vector.shape_cast %524 : vector<1x8x128xbf16> to vector<8x128xbf16>
    %526 = vector.shape_cast %522 : vector<8x128xbf16> to vector<1x8x128xbf16>
    tpu.vector_store %arg10[%523, %c0_245, %c0_246], %526 {strides = array<i32>} : memref<16x8x128xbf16, #tpu.memory_space<vmem>>, vector<1x8x128xbf16>,
    %527 = vector.extract_strided_slice %521 {offsets = [0, 0], sizes = [8, 64], strides = [1, 1]} : vector<8x128xf32> to vector<8x64xf32>
    %528 = vector.extract_strided_slice %521 {offsets = [0, 64], sizes = [8, 64], strides = [1, 1]} : vector<8x128xf32> to vector<8x64xf32>
    %c0_247 = arith.constant 0 : index
    %c0_248 = arith.constant 0 : index
    %529 = vector.load %arg12[%c0_247, %c0_248] : memref<8x64xf32, #tpu.memory_space<vmem>>, vector<8x64xf32>
    tpu.vector_store %arg12[%c0_247, %c0_248], %527 {strides = array<i32>} : memref<8x64xf32, #tpu.memory_space<vmem>>, vector<8x64xf32>,
    %530 = arith.subf %528, %509 : vector<8x64xf32>
    %531 = arith.mulf %530, %530 : vector<8x64xf32>
    %cst_249 = arith.constant dense<0.000000e+00> : vector<8xf32>
    %532 = vector.multi_reduction <add>, %531, %cst_249 [1] : vector<8x64xf32> to vector<8xf32>
    %cst_250 = arith.constant 6.400000e+01 : f32
    %533 = vector.broadcast %cst_250 : f32 to vector<8xf32>
    %534 = arith.divf %532, %533 : vector<8xf32>
    %535 = arith.index_cast %c15_i32 : i32 to index
    %c0_251 = arith.constant 0 : index
    %536 = vector.load %arg11[%535, %c0_251] : memref<16x8xf32, #tpu.memory_space<vmem>>, vector<1x8xf32>
    %537 = vector.shape_cast %536 : vector<1x8xf32> to vector<8xf32>
    %538 = vector.shape_cast %534 : vector<8xf32> to vector<1x8xf32>
    tpu.vector_store %arg11[%535, %c0_251], %538 {strides = array<i32>} : memref<16x8xf32, #tpu.memory_space<vmem>>, vector<1x8xf32>,
    %c16_i32 = arith.constant 16 : i32
    return
  }
  func.func @transform_0(%arg0: i32, %arg1: i32) -> (i32, i32) {
    %c0_i32 = arith.constant 0 : i32
    %c0_i32_0 = arith.constant 0 : i32
    %c0_i32_1 = arith.constant 0 : i32
    return %c0_i32, %c0_i32_0 : i32, i32
  }
  func.func @transform_1(%arg0: i32, %arg1: i32) -> (i32, i32) {
    %c0_i32 = arith.constant 0 : i32
    %c0_i32_0 = arith.constant 0 : i32
    return %arg0, %c0_i32 : i32, i32
  }
  func.func @transform_2(%arg0: i32, %arg1: i32) -> (i32, i32, i32) {
    %c0_i32 = arith.constant 0 : i32
    %c0_i32_0 = arith.constant 0 : i32
    return %arg1, %arg0, %c0_i32 : i32, i32, i32
  }
  func.func @transform_3(%arg0: i32, %arg1: i32) -> (i32, i32) {
    %c0_i32 = arith.constant 0 : i32
    %c0_i32_0 = arith.constant 0 : i32
    %c0_i32_1 = arith.constant 0 : i32
    return %c0_i32, %c0_i32_0 : i32, i32
  }
  func.func @transform_4(%arg0: i32, %arg1: i32) -> (i32, i32) {
    %c0_i32 = arith.constant 0 : i32
    %c0_i32_0 = arith.constant 0 : i32
    %c0_i32_1 = arith.constant 0 : i32
    return %c0_i32, %c0_i32_0 : i32, i32
  }
  func.func @transform_5(%arg0: i32, %arg1: i32) -> (i32, i32) {
    %c0_i32 = arith.constant 0 : i32
    %c0_i32_0 = arith.constant 0 : i32
    %c0_i32_1 = arith.constant 0 : i32
    return %c0_i32, %c0_i32_0 : i32, i32
  }
  func.func @transform_6(%arg0: i32, %arg1: i32) -> (i32, i32) {
    %c0_i32 = arith.constant 0 : i32
    %c0_i32_0 = arith.constant 0 : i32
    %c0_i32_1 = arith.constant 0 : i32
    return %c0_i32, %c0_i32_0 : i32, i32
  }
  func.func @transform_7(%arg0: i32, %arg1: i32) -> (i32, i32) {
    %c0_i32 = arith.constant 0 : i32
    %c0_i32_0 = arith.constant 0 : i32
    %c0_i32_1 = arith.constant 0 : i32
    return %c0_i32, %c0_i32_0 : i32, i32
  }
  func.func @transform_8(%arg0: i32, %arg1: i32) -> (i32, i32, i32) {
    %c0_i32 = arith.constant 0 : i32
    %c0_i32_0 = arith.constant 0 : i32
    return %arg1, %arg0, %c0_i32 : i32, i32, i32
  }
  func.func @transform_9(%arg0: i32, %arg1: i32) -> (i32, i32) {
    %c0_i32 = arith.constant 0 : i32
    return %arg1, %arg0 : i32, i32
  }
}

</mosaic_0001>

<llo_original>
// kernel: tpu_custom_call.1
$region0: #{tpu_custom_call.1}
  #allocation0 [shape = 'u32[]', space=smem, size = 0x4, offset = 0x4, fixed_abs, tag = 'smem constant byte address 0x4 - core index']
  #allocation1 [shape = 'u32[144,128]{1,0:T(1,128)}', space=vmem, size = 0x12000, scoped, tag = 'internal scratch']
  #allocation2 [shape = 'f32[8,64]{1,0:T(8,128)}', space=vmem, size = 0x1000, scoped, tag = 'scratch operand']
  #allocation3 [shape = 'f32[1,1]{1,0:T(1,128)S(1)}', space=vmem, size = 0x200, scoped, tag = 'scoped memory for tpu_custom_call.1']
  %s0 = inlined_call_operand.<no memory space> [shape: f32[1,1], index: 0, kind: input, shape index: {}]
  %s1 = inlined_call_operand.vmem [shape: f32[8,64], index: 1, kind: input, shape index: {}]
  %s2 = inlined_call_operand.vmem [shape: bf16[32,8,64], index: 2, kind: input, shape index: {}]
  %s3 = inlined_call_operand.vmem [shape: f32[64,32], index: 3, kind: input, shape index: {}]
  %s4 = inlined_call_operand.vmem [shape: f32[64,32], index: 4, kind: input, shape index: {}]
  %s5 = inlined_call_operand.vmem [shape: f32[1,32], index: 5, kind: input, shape index: {}]
  %s6 = inlined_call_operand.vmem [shape: f32[32,128], index: 6, kind: input, shape index: {}]
  %s7 = inlined_call_operand.vmem [shape: f32[1,128], index: 7, kind: input, shape index: {}]
  %s8 = inlined_call_operand.hbm [shape: bf16[32,8,128], index: 8, kind: output, shape index: {0}]
  %s9 = inlined_call_operand.vmem [shape: f32[32,8], index: 9, kind: output, shape index: {1}]
  %10 = xla_tuple %s8, %s9
  %s11 = sld [smem:[#allocation0]]
  $region77: #{tpu_custom_call.1} parent=0
    _
  %s13 = ssub.s32 1, %s11
  %s14 = scalar_select 0, %s13, %s11
  %v15 = vstv %s0
  %16 = vst [vmem:[#allocation3] sm:$0x1] %v15
  $region1: #{tpu_custom_call.1} parent=0
    #allocation4 [shape = 'u8[65536]{0}', space=vmem, size = 0x10000, scoped, tag = 'output window, operand 0']
    #allocation5 [shape = 's32[2]{0}', space=sflag, size = 0x8, scoped, tag = 'scoped memory for tpu_custom_call.1']
    %17 = vsyncpa [#allocation5], 0
    %s18 = scalar_lea.sflag [#allocation5], 1
    %19 = vsyncpa %s18, 0
    loop: start=0, step=1, limit=4
    $region2: #{tpu_custom_call.1} parent=1 // loop_pre_header
      _
    $region3: #{tpu_custom_call.1} parent=1 // loop_header
      %s21 = sphi 0, %s25
      %p22 = scmp.ge.s32.totalorder %s21, 4
      %s28 = sphi 0, %s40
      %s29 = sphi 0, %s36
      %s30 = sphi 0, %s28
      %s31 = sphi 0, %s29
      %s32 = sphi 0, %s30
      %s33 = sphi 0, %s31
      %s41 = sphi 0, %s41
      %s43 = sphi 0, %s41
      %s44 = sphi 0, %s43
      %s58 = sphi 0, %s44
      %s64 = sphi 0, %s66
      %s67 = sphi 0, %s64
      %s68 = sphi 0, %s67
      %s84 = sphi 0, %s68
      %s92 = sphi 0, %s94
      %s95 = sphi 0, %s92
      %s96 = sphi 0, %s95
      %s112 = sphi 0, %s96
      %s116 = sphi 0, %s116
      %s118 = sphi 0, %s116
      %s119 = sphi 0, %s118
      %s133 = sphi 0, %s119
      %s137 = sphi 0, %s137
      %s139 = sphi 0, %s137
      %s140 = sphi 0, %s139
      %s154 = sphi 0, %s140
      %s158 = sphi 0, %s158
      %s160 = sphi 0, %s158
      %s161 = sphi 0, %s160
      %s175 = sphi 0, %s161
      %s179 = sphi 0, %s179
      %s181 = sphi 0, %s179
      %s182 = sphi 0, %s181
      %s196 = sphi 0, %s182
      %s200 = sphi 0, %s200
      %s202 = sphi 0, %s200
      %s203 = sphi 0, %s202
      %s217 = sphi 0, %s203
      %s225 = sphi 0, %s227
      %s228 = sphi 0, %s225
      %s229 = sphi 0, %s228
      %s245 = sphi 0, %s229
      %s253 = sphi 0, %s255
      %s256 = sphi 0, %s253
      %s257 = sphi 0, %s256
      %s273 = sphi 0, %s257
    $region4: #{tpu_custom_call.1} parent=1 // loop_header_branch
      %24 = sbr.rel (%p22) target = $region8
    $region5: #{tpu_custom_call.1} parent=1 // loop_body
      %s26 = ssub.s32 %s21, 1
      %s27 = ssub.s32 %s21, 2
      %s34 = sadd.s32 1, %s29
      %p35 = scmp.ge.s32.totalorder %s34, 2
      %s36 = scalar_select %p35, 0, %s34
      %s37 = sadd.s32 1, %s28
      %s38 = scalar_select %p35, %s37, %s28
      %p39 = scmp.ge.s32.totalorder %s38, 1
      %s40 = scalar_select %p39, 0, %s38
      %s42 = sadd.s32 %s41, 1
      %p45 = scmp.eq.s32.totalorder %s21, 1
      %p46 = scmp.ne.s32.totalorder %s41, %s43
      %p47 = scmp.eq.s32.totalorder %s21, 0
      %p48 = por %p46, %p47
      %p49 = scmp.ne.s32.totalorder %s41, %s43
      %p50 = scmp.eq.s32.totalorder %s26, 1
      %p51 = por %p49, %p50
      %p52 = scmp.ne.s32.totalorder %s43, %s44
      %p53 = scmp.eq.s32.totalorder %s26, 0
      %p54 = por %p52, %p53
      %p55 = scmp.ne.s32.totalorder %s43, %s44
      %p56 = scmp.eq.s32.totalorder %s27, 1
      %p57 = por %p55, %p56
      %p59 = scmp.ne.s32.totalorder %s44, %s58
      %p60 = scmp.eq.s32.totalorder %s27, 0
      %p61 = por %p59, %p60
      %s62 = ssub.s32 %s28, %s40
      %p63 = scmp.eq.s32.totalorder %s62, 0
      %s65 = sadd.s32 %s64, 1
      %s66 = scalar_select %p63, %s64, %s65
      %p69 = pneg %p63
      %p70 = scmp.eq.s32.totalorder %s21, 1
      %p71 = por %p69, %p70
      %p72 = scmp.ne.s32.totalorder %s64, %s67
      %p73 = scmp.eq.s32.totalorder %s21, 0
      %p74 = por %p72, %p73
      %p75 = scmp.ne.s32.totalorder %s64, %s67
      %p76 = scmp.eq.s32.totalorder %s26, 1
      %p77 = por %p75, %p76
      %p78 = scmp.ne.s32.totalorder %s67, %s68
      %p79 = scmp.eq.s32.totalorder %s26, 0
      %p80 = por %p78, %p79
      %p81 = scmp.ne.s32.totalorder %s67, %s68
      %p82 = scmp.eq.s32.totalorder %s27, 1
      %p83 = por %p81, %p82
      %p85 = scmp.ne.s32.totalorder %s68, %s84
      %p86 = scmp.eq.s32.totalorder %s27, 0
      %p87 = por %p85, %p86
      %s88 = ssub.s32 %s29, %s36
      %s89 = ssub.s32 %s28, %s40
      %s90 = sor.u32 %s88, %s89
      %p91 = scmp.eq.s32.totalorder %s90, 0
      %s93 = sadd.s32 %s92, 1
      %s94 = scalar_select %p91, %s92, %s93
      %p97 = pneg %p91
      %p98 = scmp.eq.s32.totalorder %s21, 1
      %p99 = por %p97, %p98
      %p100 = scmp.ne.s32.totalorder %s92, %s95
      %p101 = scmp.eq.s32.totalorder %s21, 0
      %p102 = por %p100, %p101
      %p103 = scmp.ne.s32.totalorder %s92, %s95
      %p104 = scmp.eq.s32.totalorder %s26, 1
      %p105 = por %p103, %p104
      %p106 = scmp.ne.s32.totalorder %s95, %s96
      %p107 = scmp.eq.s32.totalorder %s26, 0
      %p108 = por %p106, %p107
      %p109 = scmp.ne.s32.totalorder %s95, %s96
      %p110 = scmp.eq.s32.totalorder %s27, 1
      %p111 = por %p109, %p110
      %p113 = scmp.ne.s32.totalorder %s96, %s112
      %p114 = scmp.eq.s32.totalorder %s27, 0
      %p115 = por %p113, %p114
      %s117 = sadd.s32 %s116, 1
      %p120 = scmp.eq.s32.totalorder %s21, 1
      %p121 = scmp.ne.s32.totalorder %s116, %s118
      %p122 = scmp.eq.s32.totalorder %s21, 0
      %p123 = por %p121, %p122
      %p124 = scmp.ne.s32.totalorder %s116, %s118
      %p125 = scmp.eq.s32.totalorder %s26, 1
      %p126 = por %p124, %p125
      %p127 = scmp.ne.s32.totalorder %s118, %s119
      %p128 = scmp.eq.s32.totalorder %s26, 0
      %p129 = por %p127, %p128
      %p130 = scmp.ne.s32.totalorder %s118, %s119
      %p131 = scmp.eq.s32.totalorder %s27, 1
      %p132 = por %p130, %p131
      %p134 = scmp.ne.s32.totalorder %s119, %s133
      %p135 = scmp.eq.s32.totalorder %s27, 0
      %p136 = por %p134, %p135
      %s138 = sadd.s32 %s137, 1
      %p141 = scmp.eq.s32.totalorder %s21, 1
      %p142 = scmp.ne.s32.totalorder %s137, %s139
      %p143 = scmp.eq.s32.totalorder %s21, 0
      %p144 = por %p142, %p143
      %p145 = scmp.ne.s32.totalorder %s137, %s139
      %p146 = scmp.eq.s32.totalorder %s26, 1
      %p147 = por %p145, %p146
      %p148 = scmp.ne.s32.totalorder %s139, %s140
      %p149 = scmp.eq.s32.totalorder %s26, 0
      %p150 = por %p148, %p149
      %p151 = scmp.ne.s32.totalorder %s139, %s140
      %p152 = scmp.eq.s32.totalorder %s27, 1
      %p153 = por %p151, %p152
      %p155 = scmp.ne.s32.totalorder %s140, %s154
      %p156 = scmp.eq.s32.totalorder %s27, 0
      %p157 = por %p155, %p156
      %s159 = sadd.s32 %s158, 1
      %p162 = scmp.eq.s32.totalorder %s21, 1
      %p163 = scmp.ne.s32.totalorder %s158, %s160
      %p164 = scmp.eq.s32.totalorder %s21, 0
      %p165 = por %p163, %p164
      %p166 = scmp.ne.s32.totalorder %s158, %s160
      %p167 = scmp.eq.s32.totalorder %s26, 1
      %p168 = por %p166, %p167
      %p169 = scmp.ne.s32.totalorder %s160, %s161
      %p170 = scmp.eq.s32.totalorder %s26, 0
      %p171 = por %p169, %p170
      %p172 = scmp.ne.s32.totalorder %s160, %s161
      %p173 = scmp.eq.s32.totalorder %s27, 1
      %p174 = por %p172, %p173
      %p176 = scmp.ne.s32.totalorder %s161, %s175
      %p177 = scmp.eq.s32.totalorder %s27, 0
      %p178 = por %p176, %p177
      %s180 = sadd.s32 %s179, 1
      %p183 = scmp.eq.s32.totalorder %s21, 1
      %p184 = scmp.ne.s32.totalorder %s179, %s181
      %p185 = scmp.eq.s32.totalorder %s21, 0
      %p186 = por %p184, %p185
      %p187 = scmp.ne.s32.totalorder %s179, %s181
      %p188 = scmp.eq.s32.totalorder %s26, 1
      %p189 = por %p187, %p188
      %p190 = scmp.ne.s32.totalorder %s181, %s182
      %p191 = scmp.eq.s32.totalorder %s26, 0
      %p192 = por %p190, %p191
      %p193 = scmp.ne.s32.totalorder %s181, %s182
      %p194 = scmp.eq.s32.totalorder %s27, 1
      %p195 = por %p193, %p194
      %p197 = scmp.ne.s32.totalorder %s182, %s196
      %p198 = scmp.eq.s32.totalorder %s27, 0
      %p199 = por %p197, %p198
      %s201 = sadd.s32 %s200, 1
      %p204 = scmp.eq.s32.totalorder %s21, 1
      %p205 = scmp.ne.s32.totalorder %s200, %s202
      %p206 = scmp.eq.s32.totalorder %s21, 0
      %p207 = por %p205, %p206
      %p208 = scmp.ne.s32.totalorder %s200, %s202
      %p209 = scmp.eq.s32.totalorder %s26, 1
      %p210 = por %p208, %p209
      %p211 = scmp.ne.s32.totalorder %s202, %s203
      %p212 = scmp.eq.s32.totalorder %s26, 0
      %p213 = por %p211, %p212
      %p214 = scmp.ne.s32.totalorder %s202, %s203
      %p215 = scmp.eq.s32.totalorder %s27, 1
      %p216 = por %p214, %p215
      %p218 = scmp.ne.s32.totalorder %s203, %s217
      %p219 = scmp.eq.s32.totalorder %s27, 0
      %p220 = por %p218, %p219
      %s221 = ssub.s32 %s29, %s36
      %s222 = ssub.s32 %s28, %s40
      %s223 = sor.u32 %s221, %s222
      %p224 = scmp.eq.s32.totalorder %s223, 0
      %s226 = sadd.s32 %s225, 1
      %s227 = scalar_select %p224, %s225, %s226
      %p230 = pneg %p224
      %p231 = scmp.eq.s32.totalorder %s21, 1
      %p232 = por %p230, %p231
      %p233 = scmp.ne.s32.totalorder %s225, %s228
      %p234 = scmp.eq.s32.totalorder %s21, 0
      %p235 = por %p233, %p234
      %p236 = scmp.ne.s32.totalorder %s225, %s228
      %p237 = scmp.eq.s32.totalorder %s26, 1
      %p238 = por %p236, %p237
      %p239 = scmp.ne.s32.totalorder %s228, %s229
      %p240 = scmp.eq.s32.totalorder %s26, 0
      %p241 = por %p239, %p240
      %p242 = scmp.ne.s32.totalorder %s228, %s229
      %p243 = scmp.eq.s32.totalorder %s27, 1
      %p244 = por %p242, %p243
      %p246 = scmp.ne.s32.totalorder %s229, %s245
      %p247 = scmp.eq.s32.totalorder %s27, 0
      %p248 = por %p246, %p247
      %s249 = ssub.s32 %s29, %s36
      %s250 = ssub.s32 %s28, %s40
      %s251 = sor.u32 %s249, %s250
      %p252 = scmp.eq.s32.totalorder %s251, 0
      %s254 = sadd.s32 %s253, 1
      %s255 = scalar_select %p252, %s253, %s254
      %p258 = pneg %p252
      %p259 = scmp.eq.s32.totalorder %s21, 1
      %p260 = por %p258, %p259
      %p261 = scmp.ne.s32.totalorder %s253, %s256
      %p262 = scmp.eq.s32.totalorder %s21, 0
      %p263 = por %p261, %p262
      %p264 = scmp.ne.s32.totalorder %s253, %s256
      %p265 = scmp.eq.s32.totalorder %s26, 1
      %p266 = por %p264, %p265
      %p267 = scmp.ne.s32.totalorder %s256, %s257
      %p268 = scmp.eq.s32.totalorder %s26, 0
      %p269 = por %p267, %p268
      %p270 = scmp.ne.s32.totalorder %s256, %s257
      %p271 = scmp.eq.s32.totalorder %s27, 1
      %p272 = por %p270, %p271
      %p274 = scmp.ne.s32.totalorder %s257, %s273
      %p275 = scmp.eq.s32.totalorder %s27, 0
      %p276 = por %p274, %p275
      %p277 = scmp.le.s32.totalorder 1, %s21
      %p278 = scmp.lt.s32.totalorder %s21, 3
      %p279 = pnand %p277, %p278
      %p280 = pneg %p279
      // Predicated region
      $region9: #{tpu_custom_call.1} parent=5 // pred_check
        _
      $region10: #{tpu_custom_call.1} parent=5 // pred_check_branch
        %282 = sbr.rel (%p279) target = $region12
      $region11: #{tpu_custom_call.1} parent=5 // pred_region
        %s283 = ssub.s32 %s21, 1
        // Predicated region
        $region13: #{tpu_custom_call.1} parent=11 // pred_check
          %p284 = pneg %p54
        $region14: #{tpu_custom_call.1} parent=11 // pred_check_branch
          %286 = sbr.rel (%p284) target = $region16
        $region15: #{tpu_custom_call.1} parent=11 // pred_region
          _
        $region16: #{tpu_custom_call.1} parent=11 // pred_fallthru
          _
        // Predicated region
        $region17: #{tpu_custom_call.1} parent=11 // pred_check
          %p287 = pneg %p80
        $region18: #{tpu_custom_call.1} parent=11 // pred_check_branch
          %289 = sbr.rel (%p287) target = $region20
        $region19: #{tpu_custom_call.1} parent=11 // pred_region
          %p290 = scmp.lt.s32.totalorder %s30, 0
          %s291 = scalar_select %p290, %s30, 0
          %s292 = smul.addr %s291, 8
          %s293 = scalar_lea.vmem %s1, %s292
        $region20: #{tpu_custom_call.1} parent=11 // pred_fallthru
          _
        // Predicated region
        $region21: #{tpu_custom_call.1} parent=11 // pred_check
          %p294 = pneg %p129
        $region22: #{tpu_custom_call.1} parent=11 // pred_check_branch
          %296 = sbr.rel (%p294) target = $region24
        $region23: #{tpu_custom_call.1} parent=11 // pred_region
          _
        $region24: #{tpu_custom_call.1} parent=11 // pred_fallthru
          _
        // Predicated region
        $region25: #{tpu_custom_call.1} parent=11 // pred_check
          %p297 = pneg %p150
        $region26: #{tpu_custom_call.1} parent=11 // pred_check_branch
          %299 = sbr.rel (%p297) target = $region28
        $region27: #{tpu_custom_call.1} parent=11 // pred_region
          _
        $region28: #{tpu_custom_call.1} parent=11 // pred_fallthru
          _
        // Predicated region
        $region29: #{tpu_custom_call.1} parent=11 // pred_check
          %p300 = pneg %p171
        $region30: #{tpu_custom_call.1} parent=11 // pred_check_branch
          %302 = sbr.rel (%p300) target = $region32
        $region31: #{tpu_custom_call.1} parent=11 // pred_region
          _
        $region32: #{tpu_custom_call.1} parent=11 // pred_fallthru
          _
        // Predicated region
        $region33: #{tpu_custom_call.1} parent=11 // pred_check
          %p303 = pneg %p192
        $region34: #{tpu_custom_call.1} parent=11 // pred_check_branch
          %305 = sbr.rel (%p303) target = $region36
        $region35: #{tpu_custom_call.1} parent=11 // pred_region
          _
        $region36: #{tpu_custom_call.1} parent=11 // pred_fallthru
          _
        // Predicated region
        $region37: #{tpu_custom_call.1} parent=11 // pred_check
          %p306 = pneg %p213
        $region38: #{tpu_custom_call.1} parent=11 // pred_check_branch
          %308 = sbr.rel (%p306) target = $region40
        $region39: #{tpu_custom_call.1} parent=11 // pred_region
          _
        $region40: #{tpu_custom_call.1} parent=11 // pred_fallthru
          _
      $region12: #{tpu_custom_call.1} parent=5 // pred_fallthru
        _
      %p309 = scmp.lt.s32.totalorder %s21, 2
      // Predicated region
      $region41: #{tpu_custom_call.1} parent=5 // pred_check
        %p310 = pneg %p309
      $region42: #{tpu_custom_call.1} parent=5 // pred_check_branch
        %312 = sbr.rel (%p310) target = $region44
      $region43: #{tpu_custom_call.1} parent=5 // pred_region
        // Predicated region
        $region45: #{tpu_custom_call.1} parent=43 // pred_check
          %p313 = pneg %p102
        $region46: #{tpu_custom_call.1} parent=43 // pred_check_branch
          %315 = sbr.rel (%p313) target = $region48
        $region47: #{tpu_custom_call.1} parent=43 // pred_region
          %s316 = smul.u32 16, %s29
          %p317 = scmp.lt.s32.totalorder %s316, 31
          %s318 = scalar_select %p317, %s316, 31
          %p319 = scmp.lt.s32.totalorder %s28, 0
          %s320 = scalar_select %p319, %s28, 0
          %s321 = sadd.s32 %s320, %s318
          %s322 = smul.addr %s321, 4
          %s323 = scalar_lea.vmem %s2, %s322
          %s324 = smul.u32 16, %s29
        $region48: #{tpu_custom_call.1} parent=43 // pred_fallthru
          _
      $region44: #{tpu_custom_call.1} parent=5 // pred_fallthru
        _
      %p325 = scmp.le.s32.totalorder 1, %s21
      %p326 = scmp.lt.s32.totalorder %s21, 3
      %p327 = pnand %p325, %p326
      %p328 = pneg %p327
      // Predicated region
      $region49: #{tpu_custom_call.1} parent=5 // pred_check
        _
      $region50: #{tpu_custom_call.1} parent=5 // pred_check_branch
        %330 = sbr.rel (%p327) target = $region52
      $region51: #{tpu_custom_call.1} parent=5 // pred_region
        %s331 = ssub.s32 %s21, 1
        %p332 = pneg %p54
        %p333 = pneg %p51
        %p334 = scmp.lt.s32.totalorder %s30, 0
        %s335 = scalar_select %p334, %s30, 0
        %s336 = smul.addr %s335, 8
        %s337 = scalar_lea.vmem %s1, %s336
        %p338 = pneg %p80
        %p339 = pneg %p77
        %s340 = smul.u32 16, %s31
        %p341 = scmp.lt.s32.totalorder %s340, 31
        %s342 = scalar_select %p341, %s340, 31
        %p343 = scmp.lt.s32.totalorder %s30, 0
        %s344 = scalar_select %p343, %s30, 0
        %s345 = sadd.s32 %s344, %s342
        %s346 = smul.addr %s345, 4
        %s347 = scalar_lea.vmem %s2, %s346
        %p348 = pneg %p108
        %p349 = pneg %p105
        %p350 = pneg %p129
        %p351 = pneg %p126
        %p352 = pneg %p150
        %p353 = pneg %p147
        %p354 = pneg %p171
        %p355 = pneg %p168
        %p356 = pneg %p192
        %p357 = pneg %p189
        %p358 = pneg %p213
        %p359 = pneg %p210
        %p360 = pneg %p241
        %p361 = pneg %p238
        %s362 = sand.u32 %s228, 1
        %s363 = scalar_lea.sflag [#allocation5], %s362
        %s364 = sand.u32 %s228, 1
        %s365 = smul.addr %s364, 64
        %s366 = scalar_lea.vmem [#allocation4], %s365
        %p367 = pneg %p269
        %p368 = pneg %p266
        %s369 = smul.u32 2, %s31
        %p370 = scmp.lt.s32.totalorder %s369, 3
        %s371 = scalar_select %p370, %s369, 3
        %p372 = scmp.lt.s32.totalorder %s30, 0
        %s373 = scalar_select %p372, %s30, 0
        %s374 = sadd.s32 %s373, %s371
        %s375 = smul.addr %s374, 8
        %s376 = scalar_lea.vmem %s9, %s375
        %p377 = scmp.lt.s32.totalorder %s30, 0
        %s378 = scalar_select %p377, %s30, 0
        %s379 = smul.addr %s378, 8
        %s380 = scalar_lea.vmem %s1, %s379
        %s381 = smul.u32 16, %s31
        %p382 = scmp.lt.s32.totalorder %s381, 31
        %s383 = scalar_select %p382, %s381, 31
        %p384 = scmp.lt.s32.totalorder %s30, 0
        %s385 = scalar_select %p384, %s30, 0
        %s386 = sadd.s32 %s385, %s383
        %s387 = smul.addr %s386, 4
        %s388 = scalar_lea.vmem %s2, %s387
        %s389 = smul.u32 16, %s31
        %s390 = smul.u32 16, %s31
        %s391 = smul.u32 2, %s31
        %p392 = scmp.lt.s32.totalorder %s391, 3
        %s393 = scalar_select %p392, %s391, 3
        %p394 = scmp.lt.s32.totalorder %s30, 0
        %s395 = scalar_select %p394, %s30, 0
        %s396 = sadd.s32 %s395, %s393
        %s397 = smul.addr %s396, 8
        %s398 = scalar_lea.vmem %s9, %s397
        %s399 = smul.u32 2, %s31
        %p400 = scmp.eq.s32.totalorder %s31, 0
        // Predicated region
        $region53: #{tpu_custom_call.1} parent=51 // pred_check
          %p401 = pneg %p400
        $region54: #{tpu_custom_call.1} parent=51 // pred_check_branch
          %403 = sbr.rel (%p401) target = $region56
        $region55: #{tpu_custom_call.1} parent=51 // pred_region
          %v404 = vld [vmem:[%s380] sm:$0xff]
          %vm405 = vcmask 523264
          %406 = vst.msk [vmem:[#allocation2] sm:$0xff] %vm405, %v404
        $region56: #{tpu_custom_call.1} parent=51 // pred_fallthru
          _
        %v407 = vld [vmem:[#allocation3] sm:$0x1]
        %v409 = vlaneseq
        %v410 = vshrl.u32 %v409, 7
        %v411 = vsub.s32 0, %v410
        %v412 = vrot.slane %v407, %v411
        %413 = vset.pattern.permute.xlu0 0
        %414 = vperm.xlu0 %413, %v412
        %v415 = vpop.permute.xlu0 %414
        %v417 = vld [vmem:[%s3] sm:$0xff]
        %v418 = vld [vmem:[%s3 + $0x8] sm:$0xff]
        %v419 = vld [vmem:[%s3 + $0x10] sm:$0xff]
        %v420 = vld [vmem:[%s3 + $0x18] sm:$0xff]
        %v421 = vld [vmem:[%s3 + $0x20] sm:$0xff]
        %v422 = vld [vmem:[%s3 + $0x28] sm:$0xff]
        %v423 = vld [vmem:[%s3 + $0x30] sm:$0xff]
        %v424 = vld [vmem:[%s3 + $0x38] sm:$0xff]
        %v425 = vld [vmem:[%s4] sm:$0xff]
        %v426 = vld [vmem:[%s4 + $0x8] sm:$0xff]
        %v427 = vld [vmem:[%s4 + $0x10] sm:$0xff]
        %v428 = vld [vmem:[%s4 + $0x18] sm:$0xff]
        %v429 = vld [vmem:[%s4 + $0x20] sm:$0xff]
        %v430 = vld [vmem:[%s4 + $0x28] sm:$0xff]
        %v431 = vld [vmem:[%s4 + $0x30] sm:$0xff]
        %v432 = vld [vmem:[%s4 + $0x38] sm:$0xff]
        %v433 = vld [vmem:[%s5] sm:$0x1]
        %v434 = vld [vmem:[%s6] sm:$0xff]
        %v435 = vld [vmem:[%s6 + $0x8] sm:$0xff]
        %v436 = vld [vmem:[%s6 + $0x10] sm:$0xff]
        %v437 = vld [vmem:[%s6 + $0x18] sm:$0xff]
        %v438 = vld [vmem:[%s7] sm:$0x1]
        %v439 = vld [vmem:[%s388] sm:$0xf]
        %v440 = vunpack.c.l.bf16 %v439
        %v441 = vld [vmem:[#allocation2] sm:$0xff]
        %v442 = vmul.f32 %v441, %v415
        %vm443 = vcmask 523264
        %v445 = vsel %vm443, %v442, 0
        %447 = vmatprep.subr.mxu0 0.0
        %448 = vmatpush1.msra.mxu0 %v425
        %449 = vmatprep.subr.mxu0 0.0
        %450 = vmatpush1.msra.mxu0 %v426
        %451 = vmatprep.subr.mxu0 0.0
        %452 = vmatpush1.msra.mxu0 %v427
        %453 = vmatprep.subr.mxu0 0.0
        %454 = vmatpush1.msra.mxu0 %v428
        %455 = vmatprep.subr.mxu0 0.0
        %456 = vmatpush1.msra.mxu0 %v429
        %457 = vmatprep.subr.mxu0 0.0
        %458 = vmatpush1.msra.mxu0 %v430
        %459 = vmatprep.subr.mxu0 0.0
        %460 = vmatpush1.msra.mxu0 %v431
        %461 = vmatprep.subr.mxu0 0.0
        %462 = vmatpush1.msra.mxu0 %v432
        %463 = vmatprep.subr.mxu0 0.0
        %464 = vmatpush1.msra.mxu0 0.0
        %465 = vmatprep.subr.mxu0 0.0
        %466 = vmatpush1.msra.mxu0 0.0
        %467 = vmatprep.subr.mxu0 0.0
        %468 = vmatpush1.msra.mxu0 0.0
        %469 = vmatprep.subr.mxu0 0.0
        %470 = vmatpush1.msra.mxu0 0.0
        %471 = vmatprep.subr.mxu0 0.0
        %472 = vmatpush1.msra.mxu0 0.0
        %473 = vmatprep.subr.mxu0 0.0
        %474 = vmatpush1.msra.mxu0 0.0
        %475 = vmatprep.subr.mxu0 0.0
        %476 = vmatpush1.msra.mxu0 0.0
        %477 = vmatprep.subr.mxu0 0.0
        %478 = vmatpush1.msra.mxu0 0.0
        %479 = vmatprep.subr.mxu0 0.0
        %480 = vmatpush1.msra.mxu0 0.0
        %481 = vmatprep.subr.mxu0 0.0
        %482 = vmatpush1.msra.mxu0 0.0
        %483 = vmatprep.subr.mxu0 0.0
        %484 = vmatpush1.msra.mxu0 0.0
        %485 = vmatprep.subr.mxu0 0.0
        %486 = vmatpush1.msra.mxu0 0.0
        %487 = vmatprep.subr.mxu0 0.0
        %488 = vmatpush1.msra.mxu0 0.0
        %489 = vmatprep.subr.mxu0 0.0
        %490 = vmatpush1.msra.mxu0 0.0
        %491 = vmatprep.subr.mxu0 0.0
        %492 = vmatpush1.msra.mxu0 0.0
        %493 = vmatprep.subr.mxu0 0.0
        %494 = vmatpush1.msra.mxu0 0.0
        %495 = vmatprep.subr.mxu0 0.0
        %496 = vmatpush1.msra.mxu0 0.0
        %497 = vmatprep.subr.mxu0 0.0
        %498 = vmatpush1.msra.mxu0 0.0
        %499 = vmatprep.subr.mxu0 0.0
        %500 = vmatpush1.msra.mxu0 0.0
        %501 = vmatprep.subr.mxu0 0.0
        %502 = vmatpush1.msra.mxu0 0.0
        %503 = vmatprep.subr.mxu0 0.0
        %504 = vmatpush1.msra.mxu0 0.0
        %505 = vmatprep.subr.mxu0 0.0
        %506 = vmatpush1.msra.mxu0 0.0
        %507 = vmatprep.subr.mxu0 0.0
        %508 = vmatpush1.msra.mxu0 0.0
        %509 = vmatprep.subr.mxu0 0.0
        %510 = vmatpush1.msra.mxu0 0.0
        %511 = vmatprep.mubr.f32.mxu0 0.0
        %512 = vmatmul.mubr.f32.gmra.mrb[0].mxu0 %v445
        %v513 = vpop.f32.mrb[0].mxu0
        %v514 = vadd.f32 0.0, %v513
        %v515 = vpop.f32.mrb[0].mxu0
        %516 = vdwg.mxu0
        %v518 = vsel %vm443, %v440, 0
        %520 = vmatprep.subr.mxu0 0.0
        %521 = vmatpush1.msra.mxu0 %v417
        %522 = vmatprep.subr.mxu0 0.0
        %523 = vmatpush1.msra.mxu0 %v418
        %524 = vmatprep.subr.mxu0 0.0
        %525 = vmatpush1.msra.mxu0 %v419
        %526 = vmatprep.subr.mxu0 0.0
        %527 = vmatpush1.msra.mxu0 %v420
        %528 = vmatprep.subr.mxu0 0.0
        %529 = vmatpush1.msra.mxu0 %v421
        %530 = vmatprep.subr.mxu0 0.0
        %531 = vmatpush1.msra.mxu0 %v422
        %532 = vmatprep.subr.mxu0 0.0
        %533 = vmatpush1.msra.mxu0 %v423
        %534 = vmatprep.subr.mxu0 0.0
        %535 = vmatpush1.msra.mxu0 %v424
        %536 = vmatprep.subr.mxu0 0.0
        %537 = vmatpush1.msra.mxu0 0.0
        %538 = vmatprep.subr.mxu0 0.0
        %539 = vmatpush1.msra.mxu0 0.0
        %540 = vmatprep.subr.mxu0 0.0
        %541 = vmatpush1.msra.mxu0 0.0
        %542 = vmatprep.subr.mxu0 0.0
        %543 = vmatpush1.msra.mxu0 0.0
        %544 = vmatprep.subr.mxu0 0.0
        %545 = vmatpush1.msra.mxu0 0.0
        %546 = vmatprep.subr.mxu0 0.0
        %547 = vmatpush1.msra.mxu0 0.0
        %548 = vmatprep.subr.mxu0 0.0
        %549 = vmatpush1.msra.mxu0 0.0
        %550 = vmatprep.subr.mxu0 0.0
        %551 = vmatpush1.msra.mxu0 0.0
        %552 = vmatprep.subr.mxu0 0.0
        %553 = vmatpush1.msra.mxu0 0.0
        %554 = vmatprep.subr.mxu0 0.0
        %555 = vmatpush1.msra.mxu0 0.0
        %556 = vmatprep.subr.mxu0 0.0
        %557 = vmatpush1.msra.mxu0 0.0
        %558 = vmatprep.subr.mxu0 0.0
        %559 = vmatpush1.msra.mxu0 0.0
        %560 = vmatprep.subr.mxu0 0.0
        %561 = vmatpush1.msra.mxu0 0.0
        %562 = vmatprep.subr.mxu0 0.0
        %563 = vmatpush1.msra.mxu0 0.0
        %564 = vmatprep.subr.mxu0 0.0
        %565 = vmatpush1.msra.mxu0 0.0
        %566 = vmatprep.subr.mxu0 0.0
        %567 = vmatpush1.msra.mxu0 0.0
        %568 = vmatprep.subr.mxu0 0.0
        %569 = vmatpush1.msra.mxu0 0.0
        %570 = vmatprep.subr.mxu0 0.0
        %571 = vmatpush1.msra.mxu0 0.0
        %572 = vmatprep.subr.mxu0 0.0
        %573 = vmatpush1.msra.mxu0 0.0
        %574 = vmatprep.subr.mxu0 0.0
        %575 = vmatpush1.msra.mxu0 0.0
        %576 = vmatprep.subr.mxu0 0.0
        %577 = vmatpush1.msra.mxu0 0.0
        %578 = vmatprep.subr.mxu0 0.0
        %579 = vmatpush1.msra.mxu0 0.0
        %580 = vmatprep.subr.mxu0 0.0
        %581 = vmatpush1.msra.mxu0 0.0
        %582 = vmatprep.subr.mxu0 0.0
        %583 = vmatpush1.msra.mxu0 0.0
        %584 = vmatprep.mubr.f32.mxu0 0.0
        %585 = vmatmul.mubr.f32.gmra.mrb[0].mxu0 %v518
        %v586 = vpop.f32.mrb[0].mxu0
        %v587 = vadd.f32 %v514, %v586
        %v588 = vpop.f32.mrb[0].mxu0
        %589 = vdwg.mxu0
        %v591 = vlaneseq
        %v592 = vshrl.u32 %v591, 7
        %v593 = vsub.s32 0, %v592
        %v594 = vrot.slane %v433, %v593
        %v596 = vadd.f32 %v587, %v594
        %v597 = vmax.f32 %v596, 0.0
        %v599 = vlaneseq
        %v600 = vshrl.u32 %v599, 7
        %v601 = vsub.s32 0, %v600
        %v602 = vrot.slane %v438, %v601
        %vm604 = vcmask 261120
        %v606 = vsel %vm604, %v597, 0
        %608 = vmatprep.subr.mxu0 0.0
        %609 = vmatpush1.msra.mxu0 %v434
        %610 = vmatprep.subr.mxu0 0.0
        %611 = vmatpush1.msra.mxu0 %v435
        %612 = vmatprep.subr.mxu0 0.0
        %613 = vmatpush1.msra.mxu0 %v436
        %614 = vmatprep.subr.mxu0 0.0
        %615 = vmatpush1.msra.mxu0 %v437
        %616 = vmatprep.subr.mxu0 0.0
        %617 = vmatpush1.msra.mxu0 0.0
        %618 = vmatprep.subr.mxu0 0.0
        %619 = vmatpush1.msra.mxu0 0.0
        %620 = vmatprep.subr.mxu0 0.0
        %621 = vmatpush1.msra.mxu0 0.0
        %622 = vmatprep.subr.mxu0 0.0
        %623 = vmatpush1.msra.mxu0 0.0
        %624 = vmatprep.subr.mxu0 0.0
        %625 = vmatpush1.msra.mxu0 0.0
        %626 = vmatprep.subr.mxu0 0.0
        %627 = vmatpush1.msra.mxu0 0.0
        %628 = vmatprep.subr.mxu0 0.0
        %629 = vmatpush1.msra.mxu0 0.0
        %630 = vmatprep.subr.mxu0 0.0
        %631 = vmatpush1.msra.mxu0 0.0
        %632 = vmatprep.subr.mxu0 0.0
        %633 = vmatpush1.msra.mxu0 0.0
        %634 = vmatprep.subr.mxu0 0.0
        %635 = vmatpush1.msra.mxu0 0.0
        %636 = vmatprep.subr.mxu0 0.0
        %637 = vmatpush1.msra.mxu0 0.0
        %638 = vmatprep.subr.mxu0 0.0
        %639 = vmatpush1.msra.mxu0 0.0
        %640 = vmatprep.subr.mxu0 0.0
        %641 = vmatpush1.msra.mxu0 0.0
        %642 = vmatprep.subr.mxu0 0.0
        %643 = vmatpush1.msra.mxu0 0.0
        %644 = vmatprep.subr.mxu0 0.0
        %645 = vmatpush1.msra.mxu0 0.0
        %646 = vmatprep.subr.mxu0 0.0
        %647 = vmatpush1.msra.mxu0 0.0
        %648 = vmatprep.subr.mxu0 0.0
        %649 = vmatpush1.msra.mxu0 0.0
        %650 = vmatprep.subr.mxu0 0.0
        %651 = vmatpush1.msra.mxu0 0.0
        %652 = vmatprep.subr.mxu0 0.0
        %653 = vmatpush1.msra.mxu0 0.0
        %654 = vmatprep.subr.mxu0 0.0
        %655 = vmatpush1.msra.mxu0 0.0
        %656 = vmatprep.subr.mxu0 0.0
        %657 = vmatpush1.msra.mxu0 0.0
        %658 = vmatprep.subr.mxu0 0.0
        %659 = vmatpush1.msra.mxu0 0.0
        %660 = vmatprep.subr.mxu0 0.0
        %661 = vmatpush1.msra.mxu0 0.0
        %662 = vmatprep.subr.mxu0 0.0
        %663 = vmatpush1.msra.mxu0 0.0
        %664 = vmatprep.subr.mxu0 0.0
        %665 = vmatpush1.msra.mxu0 0.0
        %666 = vmatprep.subr.mxu0 0.0
        %667 = vmatpush1.msra.mxu0 0.0
        %668 = vmatprep.subr.mxu0 0.0
        %669 = vmatpush1.msra.mxu0 0.0
        %670 = vmatprep.subr.mxu0 0.0
        %671 = vmatpush1.msra.mxu0 0.0
        %672 = vmatprep.mubr.f32.mxu0 0.0
        %673 = vmatmul.mubr.f32.gmra.mrb[0].mxu0 %v606
        %v674 = vpop.f32.mrb[0].mxu0
        %v675 = vadd.f32 %v602, %v674
        %v676 = vpop.f32.mrb[0].mxu0
        %677 = vdwg.mxu0
        %v678 = vpack.c.bf16 %v675, %v675
        %679 = vst [vmem:[%s366] sm:$0xf] %v678
        %680 = vst.msk [vmem:[#allocation2] sm:$0xff] %vm443, %v675
        %681 = vrot.lane.b32.xlu0 %v440, 64
        %v682 = vpop.permute.xlu0 %681
        %v684 = vsub.f32 %v675, %v682
        %v685 = vmul.f32 %v684, %v684
        %687 = vrot.lane.b32.xlu0 %v685, 64
        %v688 = vpop.permute.xlu0 %687
        %v690 = vsel %vm443, %v688, 0.0
        %691 = vadd.xlane.f32.xlu0 %v690
        %v692 = vpop.xlane.xlu0 %691
        %v693 = vrcp.pop 64.0
        %v694 = vmul.f32 %v692, %v693
        %v696 = vlaneseq
        %v697 = vand.u32 %v696, 127
        %v698 = vlaneseq
        %v699 = vshrl.u32 %v698, 7
        %v700 = vsub.s32 %v697, %v699
        %v701 = vrot.slane %v694, %v700
        %vm703 = vcmask 57344
        %704 = vst.msk [vmem:[%s398] sm:$0x1] %vm703, %v701
        %s705 = scalar_lea.vmem %s388, 4
        %v706 = vld [vmem:[%s705] sm:$0xf]
        %v707 = vunpack.c.l.bf16 %v706
        %v708 = vld [vmem:[#allocation2] sm:$0xff]
        %v709 = vmul.f32 %v708, %v415
        %v711 = vsel %vm443, %v709, 0
        %713 = vmatprep.subr.mxu0 0.0
        %714 = vmatpush1.msra.mxu0 %v425
        %715 = vmatprep.subr.mxu0 0.0
        %716 = vmatpush1.msra.mxu0 %v426
        %717 = vmatprep.subr.mxu0 0.0
        %718 = vmatpush1.msra.mxu0 %v427
        %719 = vmatprep.subr.mxu0 0.0
        %720 = vmatpush1.msra.mxu0 %v428
        %721 = vmatprep.subr.mxu0 0.0
        %722 = vmatpush1.msra.mxu0 %v429
        %723 = vmatprep.subr.mxu0 0.0
        %724 = vmatpush1.msra.mxu0 %v430
        %725 = vmatprep.subr.mxu0 0.0
        %726 = vmatpush1.msra.mxu0 %v431
        %727 = vmatprep.subr.mxu0 0.0
        %728 = vmatpush1.msra.mxu0 %v432
        %729 = vmatprep.subr.mxu0 0.0
        %730 = vmatpush1.msra.mxu0 0.0
        %731 = vmatprep.subr.mxu0 0.0
        %732 = vmatpush1.msra.mxu0 0.0
        %733 = vmatprep.subr.mxu0 0.0
        %734 = vmatpush1.msra.mxu0 0.0
        %735 = vmatprep.subr.mxu0 0.0
        %736 = vmatpush1.msra.mxu0 0.0
        %737 = vmatprep.subr.mxu0 0.0
        %738 = vmatpush1.msra.mxu0 0.0
        %739 = vmatprep.subr.mxu0 0.0
        %740 = vmatpush1.msra.mxu0 0.0
        %741 = vmatprep.subr.mxu0 0.0
        %742 = vmatpush1.msra.mxu0 0.0
        %743 = vmatprep.subr.mxu0 0.0
        %744 = vmatpush1.msra.mxu0 0.0
        %745 = vmatprep.subr.mxu0 0.0
        %746 = vmatpush1.msra.mxu0 0.0
        %747 = vmatprep.subr.mxu0 0.0
        %748 = vmatpush1.msra.mxu0 0.0
        %749 = vmatprep.subr.mxu0 0.0
        %750 = vmatpush1.msra.mxu0 0.0
        %751 = vmatprep.subr.mxu0 0.0
        %752 = vmatpush1.msra.mxu0 0.0
        %753 = vmatprep.subr.mxu0 0.0
        %754 = vmatpush1.msra.mxu0 0.0
        %755 = vmatprep.subr.mxu0 0.0
        %756 = vmatpush1.msra.mxu0 0.0
        %757 = vmatprep.subr.mxu0 0.0
        %758 = vmatpush1.msra.mxu0 0.0
        %759 = vmatprep.subr.mxu0 0.0
        %760 = vmatpush1.msra.mxu0 0.0
        %761 = vmatprep.subr.mxu0 0.0
        %762 = vmatpush1.msra.mxu0 0.0
        %763 = vmatprep.subr.mxu0 0.0
        %764 = vmatpush1.msra.mxu0 0.0
        %765 = vmatprep.subr.mxu0 0.0
        %766 = vmatpush1.msra.mxu0 0.0
        %767 = vmatprep.subr.mxu0 0.0
        %768 = vmatpush1.msra.mxu0 0.0
        %769 = vmatprep.subr.mxu0 0.0
        %770 = vmatpush1.msra.mxu0 0.0
        %771 = vmatprep.subr.mxu0 0.0
        %772 = vmatpush1.msra.mxu0 0.0
        %773 = vmatprep.subr.mxu0 0.0
        %774 = vmatpush1.msra.mxu0 0.0
        %775 = vmatprep.subr.mxu0 0.0
        %776 = vmatpush1.msra.mxu0 0.0
        %777 = vmatprep.mubr.f32.mxu0 0.0
        %778 = vmatmul.mubr.f32.gmra.mrb[0].mxu0 %v711
        %v779 = vpop.f32.mrb[0].mxu0
        %v780 = vadd.f32 0.0, %v779
        %v781 = vpop.f32.mrb[0].mxu0
        %782 = vdwg.mxu0
        %v784 = vsel %vm443, %v707, 0
        %786 = vmatprep.subr.mxu0 0.0
        %787 = vmatpush1.msra.mxu0 %v417
        %788 = vmatprep.subr.mxu0 0.0
        %789 = vmatpush1.msra.mxu0 %v418
        %790 = vmatprep.subr.mxu0 0.0
        %791 = vmatpush1.msra.mxu0 %v419
        %792 = vmatprep.subr.mxu0 0.0
        %793 = vmatpush1.msra.mxu0 %v420
        %794 = vmatprep.subr.mxu0 0.0
        %795 = vmatpush1.msra.mxu0 %v421
        %796 = vmatprep.subr.mxu0 0.0
        %797 = vmatpush1.msra.mxu0 %v422
        %798 = vmatprep.subr.mxu0 0.0
        %799 = vmatpush1.msra.mxu0 %v423
        %800 = vmatprep.subr.mxu0 0.0
        %801 = vmatpush1.msra.mxu0 %v424
        %802 = vmatprep.subr.mxu0 0.0
        %803 = vmatpush1.msra.mxu0 0.0
        %804 = vmatprep.subr.mxu0 0.0
        %805 = vmatpush1.msra.mxu0 0.0
        %806 = vmatprep.subr.mxu0 0.0
        %807 = vmatpush1.msra.mxu0 0.0
        %808 = vmatprep.subr.mxu0 0.0
        %809 = vmatpush1.msra.mxu0 0.0
        %810 = vmatprep.subr.mxu0 0.0
        %811 = vmatpush1.msra.mxu0 0.0
        %812 = vmatprep.subr.mxu0 0.0
        %813 = vmatpush1.msra.mxu0 0.0
        %814 = vmatprep.subr.mxu0 0.0
        %815 = vmatpush1.msra.mxu0 0.0
        %816 = vmatprep.subr.mxu0 0.0
        %817 = vmatpush1.msra.mxu0 0.0
        %818 = vmatprep.subr.mxu0 0.0
        %819 = vmatpush1.msra.mxu0 0.0
        %820 = vmatprep.subr.mxu0 0.0
        %821 = vmatpush1.msra.mxu0 0.0
        %822 = vmatprep.subr.mxu0 0.0
        %823 = vmatpush1.msra.mxu0 0.0
        %824 = vmatprep.subr.mxu0 0.0
        %825 = vmatpush1.msra.mxu0 0.0
        %826 = vmatprep.subr.mxu0 0.0
        %827 = vmatpush1.msra.mxu0 0.0
        %828 = vmatprep.subr.mxu0 0.0
        %829 = vmatpush1.msra.mxu0 0.0
        %830 = vmatprep.subr.mxu0 0.0
        %831 = vmatpush1.msra.mxu0 0.0
        %832 = vmatprep.subr.mxu0 0.0
        %833 = vmatpush1.msra.mxu0 0.0
        %834 = vmatprep.subr.mxu0 0.0
        %835 = vmatpush1.msra.mxu0 0.0
        %836 = vmatprep.subr.mxu0 0.0
        %837 = vmatpush1.msra.mxu0 0.0
        %838 = vmatprep.subr.mxu0 0.0
        %839 = vmatpush1.msra.mxu0 0.0
        %840 = vmatprep.subr.mxu0 0.0
        %841 = vmatpush1.msra.mxu0 0.0
        %842 = vmatprep.subr.mxu0 0.0
        %843 = vmatpush1.msra.mxu0 0.0
        %844 = vmatprep.subr.mxu0 0.0
        %845 = vmatpush1.msra.mxu0 0.0
        %846 = vmatprep.subr.mxu0 0.0
        %847 = vmatpush1.msra.mxu0 0.0
        %848 = vmatprep.subr.mxu0 0.0
        %849 = vmatpush1.msra.mxu0 0.0
        %850 = vmatprep.mubr.f32.mxu0 0.0
        %851 = vmatmul.mubr.f32.gmra.mrb[0].mxu0 %v784
        %v852 = vpop.f32.mrb[0].mxu0
        %v853 = vadd.f32 %v780, %v852
        %v854 = vpop.f32.mrb[0].mxu0
        %855 = vdwg.mxu0
        %v856 = vadd.f32 %v853, %v594
        %v857 = vmax.f32 %v856, 0.0
        %v859 = vsel %vm604, %v857, 0
        %861 = vmatprep.subr.mxu0 0.0
        %862 = vmatpush1.msra.mxu0 %v434
        %863 = vmatprep.subr.mxu0 0.0
        %864 = vmatpush1.msra.mxu0 %v435
        %865 = vmatprep.subr.mxu0 0.0
        %866 = vmatpush1.msra.mxu0 %v436
        %867 = vmatprep.subr.mxu0 0.0
        %868 = vmatpush1.msra.mxu0 %v437
        %869 = vmatprep.subr.mxu0 0.0
        %870 = vmatpush1.msra.mxu0 0.0
        %871 = vmatprep.subr.mxu0 0.0
        %872 = vmatpush1.msra.mxu0 0.0
        %873 = vmatprep.subr.mxu0 0.0
        %874 = vmatpush1.msra.mxu0 0.0
        %875 = vmatprep.subr.mxu0 0.0
        %876 = vmatpush1.msra.mxu0 0.0
        %877 = vmatprep.subr.mxu0 0.0
        %878 = vmatpush1.msra.mxu0 0.0
        %879 = vmatprep.subr.mxu0 0.0
        %880 = vmatpush1.msra.mxu0 0.0
        %881 = vmatprep.subr.mxu0 0.0
        %882 = vmatpush1.msra.mxu0 0.0
        %883 = vmatprep.subr.mxu0 0.0
        %884 = vmatpush1.msra.mxu0 0.0
        %885 = vmatprep.subr.mxu0 0.0
        %886 = vmatpush1.msra.mxu0 0.0
        %887 = vmatprep.subr.mxu0 0.0
        %888 = vmatpush1.msra.mxu0 0.0
        %889 = vmatprep.subr.mxu0 0.0
        %890 = vmatpush1.msra.mxu0 0.0
        %891 = vmatprep.subr.mxu0 0.0
        %892 = vmatpush1.msra.mxu0 0.0
        %893 = vmatprep.subr.mxu0 0.0
        %894 = vmatpush1.msra.mxu0 0.0
        %895 = vmatprep.subr.mxu0 0.0
        %896 = vmatpush1.msra.mxu0 0.0
        %897 = vmatprep.subr.mxu0 0.0
        %898 = vmatpush1.msra.mxu0 0.0
        %899 = vmatprep.subr.mxu0 0.0
        %900 = vmatpush1.msra.mxu0 0.0
        %901 = vmatprep.subr.mxu0 0.0
        %902 = vmatpush1.msra.mxu0 0.0
        %903 = vmatprep.subr.mxu0 0.0
        %904 = vmatpush1.msra.mxu0 0.0
        %905 = vmatprep.subr.mxu0 0.0
        %906 = vmatpush1.msra.mxu0 0.0
        %907 = vmatprep.subr.mxu0 0.0
        %908 = vmatpush1.msra.mxu0 0.0
        %909 = vmatprep.subr.mxu0 0.0
        %910 = vmatpush1.msra.mxu0 0.0
        %911 = vmatprep.subr.mxu0 0.0
        %912 = vmatpush1.msra.mxu0 0.0
        %913 = vmatprep.subr.mxu0 0.0
        %914 = vmatpush1.msra.mxu0 0.0
        %915 = vmatprep.subr.mxu0 0.0
        %916 = vmatpush1.msra.mxu0 0.0
        %917 = vmatprep.subr.mxu0 0.0
        %918 = vmatpush1.msra.mxu0 0.0
        %919 = vmatprep.subr.mxu0 0.0
        %920 = vmatpush1.msra.mxu0 0.0
        %921 = vmatprep.subr.mxu0 0.0
        %922 = vmatpush1.msra.mxu0 0.0
        %923 = vmatprep.subr.mxu0 0.0
        %924 = vmatpush1.msra.mxu0 0.0
        %925 = vmatprep.mubr.f32.mxu0 0.0
        %926 = vmatmul.mubr.f32.gmra.mrb[0].mxu0 %v859
        %v927 = vpop.f32.mrb[0].mxu0
        %v928 = vadd.f32 %v602, %v927
        %v929 = vpop.f32.mrb[0].mxu0
        %930 = vdwg.mxu0
        %v931 = vpack.c.bf16 %v928, %v928
        %s932 = scalar_lea.vmem %s366, 4 [#allocation4]
        %933 = vst [vmem:[%s932] sm:$0xf] %v931
        %934 = vst.msk [vmem:[#allocation2] sm:$0xff] %vm443, %v928
        %935 = vrot.lane.b32.xlu0 %v707, 64
        %v936 = vpop.permute.xlu0 %935
        %v938 = vsub.f32 %v928, %v936
        %v939 = vmul.f32 %v938, %v938
        %941 = vrot.lane.b32.xlu0 %v939, 64
        %v942 = vpop.permute.xlu0 %941
        %v944 = vsel %vm443, %v942, 0.0
        %945 = vadd.xlane.f32.xlu0 %v944
        %v946 = vpop.xlane.xlu0 %945
        %v947 = vmul.f32 %v946, %v693
        %v949 = vlaneseq
        %v950 = vshrl.u32 %v949, 7
        %v951 = vsub.s32 %v697, %v950
        %v952 = vrot.slane %v947, %v951
        %954 = vst.msk [vmem:[%s398 + $0x1] sm:$0x1] %vm703, %v952
        %s955 = scalar_lea.vmem %s388, 8
        %v956 = vld [vmem:[%s955] sm:$0xf]
        %v957 = vunpack.c.l.bf16 %v956
        %v958 = vld [vmem:[#allocation2] sm:$0xff]
        %v959 = vmul.f32 %v958, %v415
        %v961 = vsel %vm443, %v959, 0
        %963 = vmatprep.subr.mxu0 0.0
        %964 = vmatpush1.msra.mxu0 %v425
        %965 = vmatprep.subr.mxu0 0.0
        %966 = vmatpush1.msra.mxu0 %v426
        %967 = vmatprep.subr.mxu0 0.0
        %968 = vmatpush1.msra.mxu0 %v427
        %969 = vmatprep.subr.mxu0 0.0
        %970 = vmatpush1.msra.mxu0 %v428
        %971 = vmatprep.subr.mxu0 0.0
        %972 = vmatpush1.msra.mxu0 %v429
        %973 = vmatprep.subr.mxu0 0.0
        %974 = vmatpush1.msra.mxu0 %v430
        %975 = vmatprep.subr.mxu0 0.0
        %976 = vmatpush1.msra.mxu0 %v431
        %977 = vmatprep.subr.mxu0 0.0
        %978 = vmatpush1.msra.mxu0 %v432
        %979 = vmatprep.subr.mxu0 0.0
        %980 = vmatpush1.msra.mxu0 0.0
        %981 = vmatprep.subr.mxu0 0.0
        %982 = vmatpush1.msra.mxu0 0.0
        %983 = vmatprep.subr.mxu0 0.0
        %984 = vmatpush1.msra.mxu0 0.0
        %985 = vmatprep.subr.mxu0 0.0
        %986 = vmatpush1.msra.mxu0 0.0
        %987 = vmatprep.subr.mxu0 0.0
        %988 = vmatpush1.msra.mxu0 0.0
        %989 = vmatprep.subr.mxu0 0.0
        %990 = vmatpush1.msra.mxu0 0.0
        %991 = vmatprep.subr.mxu0 0.0
        %992 = vmatpush1.msra.mxu0 0.0
        %993 = vmatprep.subr.mxu0 0.0
        %994 = vmatpush1.msra.mxu0 0.0
        %995 = vmatprep.subr.mxu0 0.0
        %996 = vmatpush1.msra.mxu0 0.0
        %997 = vmatprep.subr.mxu0 0.0
        %998 = vmatpush1.msra.mxu0 0.0
        %999 = vmatprep.subr.mxu0 0.0
        %1000 = vmatpush1.msra.mxu0 0.0
        %1001 = vmatprep.subr.mxu0 0.0
        %1002 = vmatpush1.msra.mxu0 0.0
        %1003 = vmatprep.subr.mxu0 0.0
        %1004 = vmatpush1.msra.mxu0 0.0
        %1005 = vmatprep.subr.mxu0 0.0
        %1006 = vmatpush1.msra.mxu0 0.0
        %1007 = vmatprep.subr.mxu0 0.0
        %1008 = vmatpush1.msra.mxu0 0.0
        %1009 = vmatprep.subr.mxu0 0.0
        %1010 = vmatpush1.msra.mxu0 0.0
        %1011 = vmatprep.subr.mxu0 0.0
        %1012 = vmatpush1.msra.mxu0 0.0
        %1013 = vmatprep.subr.mxu0 0.0
        %1014 = vmatpush1.msra.mxu0 0.0
        %1015 = vmatprep.subr.mxu0 0.0
        %1016 = vmatpush1.msra.mxu0 0.0
        %1017 = vmatprep.subr.mxu0 0.0
        %1018 = vmatpush1.msra.mxu0 0.0
        %1019 = vmatprep.subr.mxu0 0.0
        %1020 = vmatpush1.msra.mxu0 0.0
        %1021 = vmatprep.subr.mxu0 0.0
        %1022 = vmatpush1.msra.mxu0 0.0
        %1023 = vmatprep.subr.mxu0 0.0
        %1024 = vmatpush1.msra.mxu0 0.0
        %1025 = vmatprep.subr.mxu0 0.0
        %1026 = vmatpush1.msra.mxu0 0.0
        %1027 = vmatprep.mubr.f32.mxu0 0.0
        %1028 = vmatmul.mubr.f32.gmra.mrb[0].mxu0 %v961
        %v1029 = vpop.f32.mrb[0].mxu0
        %v1030 = vadd.f32 0.0, %v1029
        %v1031 = vpop.f32.mrb[0].mxu0
        %1032 = vdwg.mxu0
        %v1034 = vsel %vm443, %v957, 0
        %1036 = vmatprep.subr.mxu0 0.0
        %1037 = vmatpush1.msra.mxu0 %v417
        %1038 = vmatprep.subr.mxu0 0.0
        %1039 = vmatpush1.msra.mxu0 %v418
        %1040 = vmatprep.subr.mxu0 0.0
        %1041 = vmatpush1.msra.mxu0 %v419
        %1042 = vmatprep.subr.mxu0 0.0
        %1043 = vmatpush1.msra.mxu0 %v420
        %1044 = vmatprep.subr.mxu0 0.0
        %1045 = vmatpush1.msra.mxu0 %v421
        %1046 = vmatprep.subr.mxu0 0.0
        %1047 = vmatpush1.msra.mxu0 %v422
        %1048 = vmatprep.subr.mxu0 0.0
        %1049 = vmatpush1.msra.mxu0 %v423
        %1050 = vmatprep.subr.mxu0 0.0
        %1051 = vmatpush1.msra.mxu0 %v424
        %1052 = vmatprep.subr.mxu0 0.0
        %1053 = vmatpush1.msra.mxu0 0.0
        %1054 = vmatprep.subr.mxu0 0.0
        %1055 = vmatpush1.msra.mxu0 0.0
        %1056 = vmatprep.subr.mxu0 0.0
        %1057 = vmatpush1.msra.mxu0 0.0
        %1058 = vmatprep.subr.mxu0 0.0
        %1059 = vmatpush1.msra.mxu0 0.0
        %1060 = vmatprep.subr.mxu0 0.0
        %1061 = vmatpush1.msra.mxu0 0.0
        %1062 = vmatprep.subr.mxu0 0.0
        %1063 = vmatpush1.msra.mxu0 0.0
        %1064 = vmatprep.subr.mxu0 0.0
        %1065 = vmatpush1.msra.mxu0 0.0
        %1066 = vmatprep.subr.mxu0 0.0
        %1067 = vmatpush1.msra.mxu0 0.0
        %1068 = vmatprep.subr.mxu0 0.0
        %1069 = vmatpush1.msra.mxu0 0.0
        %1070 = vmatprep.subr.mxu0 0.0
        %1071 = vmatpush1.msra.mxu0 0.0
        %1072 = vmatprep.subr.mxu0 0.0
        %1073 = vmatpush1.msra.mxu0 0.0
        %1074 = vmatprep.subr.mxu0 0.0
        %1075 = vmatpush1.msra.mxu0 0.0
        %1076 = vmatprep.subr.mxu0 0.0
        %1077 = vmatpush1.msra.mxu0 0.0
        %1078 = vmatprep.subr.mxu0 0.0
        %1079 = vmatpush1.msra.mxu0 0.0
        %1080 = vmatprep.subr.mxu0 0.0
        %1081 = vmatpush1.msra.mxu0 0.0
        %1082 = vmatprep.subr.mxu0 0.0
        %1083 = vmatpush1.msra.mxu0 0.0
        %1084 = vmatprep.subr.mxu0 0.0
        %1085 = vmatpush1.msra.mxu0 0.0
        %1086 = vmatprep.subr.mxu0 0.0
        %1087 = vmatpush1.msra.mxu0 0.0
        %1088 = vmatprep.subr.mxu0 0.0
        %1089 = vmatpush1.msra.mxu0 0.0
        %1090 = vmatprep.subr.mxu0 0.0
        %1091 = vmatpush1.msra.mxu0 0.0
        %1092 = vmatprep.subr.mxu0 0.0
        %1093 = vmatpush1.msra.mxu0 0.0
        %1094 = vmatprep.subr.mxu0 0.0
        %1095 = vmatpush1.msra.mxu0 0.0
        %1096 = vmatprep.subr.mxu0 0.0
        %1097 = vmatpush1.msra.mxu0 0.0
        %1098 = vmatprep.subr.mxu0 0.0
        %1099 = vmatpush1.msra.mxu0 0.0
        %1100 = vmatprep.mubr.f32.mxu0 0.0
        %1101 = vmatmul.mubr.f32.gmra.mrb[0].mxu0 %v1034
        %v1102 = vpop.f32.mrb[0].mxu0
        %v1103 = vadd.f32 %v1030, %v1102
        %v1104 = vpop.f32.mrb[0].mxu0
        %1105 = vdwg.mxu0
        %v1106 = vadd.f32 %v1103, %v594
        %v1107 = vmax.f32 %v1106, 0.0
        %v1109 = vsel %vm604, %v1107, 0
        %1111 = vmatprep.subr.mxu0 0.0
        %1112 = vmatpush1.msra.mxu0 %v434
        %1113 = vmatprep.subr.mxu0 0.0
        %1114 = vmatpush1.msra.mxu0 %v435
        %1115 = vmatprep.subr.mxu0 0.0
        %1116 = vmatpush1.msra.mxu0 %v436
        %1117 = vmatprep.subr.mxu0 0.0
        %1118 = vmatpush1.msra.mxu0 %v437
        %1119 = vmatprep.subr.mxu0 0.0
        %1120 = vmatpush1.msra.mxu0 0.0
        %1121 = vmatprep.subr.mxu0 0.0
        %1122 = vmatpush1.msra.mxu0 0.0
        %1123 = vmatprep.subr.mxu0 0.0
        %1124 = vmatpush1.msra.mxu0 0.0
        %1125 = vmatprep.subr.mxu0 0.0
        %1126 = vmatpush1.msra.mxu0 0.0
        %1127 = vmatprep.subr.mxu0 0.0
        %1128 = vmatpush1.msra.mxu0 0.0
        %1129 = vmatprep.subr.mxu0 0.0
        %1130 = vmatpush1.msra.mxu0 0.0
        %1131 = vmatprep.subr.mxu0 0.0
        %1132 = vmatpush1.msra.mxu0 0.0
        %1133 = vmatprep.subr.mxu0 0.0
        %1134 = vmatpush1.msra.mxu0 0.0
        %1135 = vmatprep.subr.mxu0 0.0
        %1136 = vmatpush1.msra.mxu0 0.0
        %1137 = vmatprep.subr.mxu0 0.0
        %1138 = vmatpush1.msra.mxu0 0.0
        %1139 = vmatprep.subr.mxu0 0.0
        %1140 = vmatpush1.msra.mxu0 0.0
        %1141 = vmatprep.subr.mxu0 0.0
        %1142 = vmatpush1.msra.mxu0 0.0
        %1143 = vmatprep.subr.mxu0 0.0
        %1144 = vmatpush1.msra.mxu0 0.0
        %1145 = vmatprep.subr.mxu0 0.0
        %1146 = vmatpush1.msra.mxu0 0.0
        %1147 = vmatprep.subr.mxu0 0.0
        %1148 = vmatpush1.msra.mxu0 0.0
        %1149 = vmatprep.subr.mxu0 0.0
        %1150 = vmatpush1.msra.mxu0 0.0
        %1151 = vmatprep.subr.mxu0 0.0
        %1152 = vmatpush1.msra.mxu0 0.0
        %1153 = vmatprep.subr.mxu0 0.0
        %1154 = vmatpush1.msra.mxu0 0.0
        %1155 = vmatprep.subr.mxu0 0.0
        %1156 = vmatpush1.msra.mxu0 0.0
        %1157 = vmatprep.subr.mxu0 0.0
        %1158 = vmatpush1.msra.mxu0 0.0
        %1159 = vmatprep.subr.mxu0 0.0
        %1160 = vmatpush1.msra.mxu0 0.0
        %1161 = vmatprep.subr.mxu0 0.0
        %1162 = vmatpush1.msra.mxu0 0.0
        %1163 = vmatprep.subr.mxu0 0.0
        %1164 = vmatpush1.msra.mxu0 0.0
        %1165 = vmatprep.subr.mxu0 0.0
        %1166 = vmatpush1.msra.mxu0 0.0
        %1167 = vmatprep.subr.mxu0 0.0
        %1168 = vmatpush1.msra.mxu0 0.0
        %1169 = vmatprep.subr.mxu0 0.0
        %1170 = vmatpush1.msra.mxu0 0.0
        %1171 = vmatprep.subr.mxu0 0.0
        %1172 = vmatpush1.msra.mxu0 0.0
        %1173 = vmatprep.subr.mxu0 0.0
        %1174 = vmatpush1.msra.mxu0 0.0
        %1175 = vmatprep.mubr.f32.mxu0 0.0
        %1176 = vmatmul.mubr.f32.gmra.mrb[0].mxu0 %v1109
        %v1177 = vpop.f32.mrb[0].mxu0
        %v1178 = vadd.f32 %v602, %v1177
        %v1179 = vpop.f32.mrb[0].mxu0
        %1180 = vdwg.mxu0
        %v1181 = vpack.c.bf16 %v1178, %v1178
        %s1182 = scalar_lea.vmem %s366, 8 [#allocation4]
        %1183 = vst [vmem:[%s1182] sm:$0xf] %v1181
        %1184 = vst.msk [vmem:[#allocation2] sm:$0xff] %vm443, %v1178
        %1185 = vrot.lane.b32.xlu0 %v957, 64
        %v1186 = vpop.permute.xlu0 %1185
        %v1188 = vsub.f32 %v1178, %v1186
        %v1189 = vmul.f32 %v1188, %v1188
        %1191 = vrot.lane.b32.xlu0 %v1189, 64
        %v1192 = vpop.permute.xlu0 %1191
        %v1194 = vsel %vm443, %v1192, 0.0
        %1195 = vadd.xlane.f32.xlu0 %v1194
        %v1196 = vpop.xlane.xlu0 %1195
        %v1197 = vmul.f32 %v1196, %v693
        %v1199 = vlaneseq
        %v1200 = vshrl.u32 %v1199, 7
        %v1201 = vsub.s32 %v697, %v1200
        %v1202 = vrot.slane %v1197, %v1201
        %1204 = vst.msk [vmem:[%s398 + $0x2] sm:$0x1] %vm703, %v1202
        %s1205 = scalar_lea.vmem %s388, 12
        %v1206 = vld [vmem:[%s1205] sm:$0xf]
        %v1207 = vunpack.c.l.bf16 %v1206
        %v1208 = vld [vmem:[#allocation2] sm:$0xff]
        %v1209 = vmul.f32 %v1208, %v415
        %v1211 = vsel %vm443, %v1209, 0
        %1213 = vmatprep.subr.mxu0 0.0
        %1214 = vmatpush1.msra.mxu0 %v425
        %1215 = vmatprep.subr.mxu0 0.0
        %1216 = vmatpush1.msra.mxu0 %v426
        %1217 = vmatprep.subr.mxu0 0.0
        %1218 = vmatpush1.msra.mxu0 %v427
        %1219 = vmatprep.subr.mxu0 0.0
        %1220 = vmatpush1.msra.mxu0 %v428
        %1221 = vmatprep.subr.mxu0 0.0
        %1222 = vmatpush1.msra.mxu0 %v429
        %1223 = vmatprep.subr.mxu0 0.0
        %1224 = vmatpush1.msra.mxu0 %v430
        %1225 = vmatprep.subr.mxu0 0.0
        %1226 = vmatpush1.msra.mxu0 %v431
        %1227 = vmatprep.subr.mxu0 0.0
        %1228 = vmatpush1.msra.mxu0 %v432
        %1229 = vmatprep.subr.mxu0 0.0
        %1230 = vmatpush1.msra.mxu0 0.0
        %1231 = vmatprep.subr.mxu0 0.0
        %1232 = vmatpush1.msra.mxu0 0.0
        %1233 = vmatprep.subr.mxu0 0.0
        %1234 = vmatpush1.msra.mxu0 0.0
        %1235 = vmatprep.subr.mxu0 0.0
        %1236 = vmatpush1.msra.mxu0 0.0
        %1237 = vmatprep.subr.mxu0 0.0
        %1238 = vmatpush1.msra.mxu0 0.0
        %1239 = vmatprep.subr.mxu0 0.0
        %1240 = vmatpush1.msra.mxu0 0.0
        %1241 = vmatprep.subr.mxu0 0.0
        %1242 = vmatpush1.msra.mxu0 0.0
        %1243 = vmatprep.subr.mxu0 0.0
        %1244 = vmatpush1.msra.mxu0 0.0
        %1245 = vmatprep.subr.mxu0 0.0
        %1246 = vmatpush1.msra.mxu0 0.0
        %1247 = vmatprep.subr.mxu0 0.0
        %1248 = vmatpush1.msra.mxu0 0.0
        %1249 = vmatprep.subr.mxu0 0.0
        %1250 = vmatpush1.msra.mxu0 0.0
        %1251 = vmatprep.subr.mxu0 0.0
        %1252 = vmatpush1.msra.mxu0 0.0
        %1253 = vmatprep.subr.mxu0 0.0
        %1254 = vmatpush1.msra.mxu0 0.0
        %1255 = vmatprep.subr.mxu0 0.0
        %1256 = vmatpush1.msra.mxu0 0.0
        %1257 = vmatprep.subr.mxu0 0.0
        %1258 = vmatpush1.msra.mxu0 0.0
        %1259 = vmatprep.subr.mxu0 0.0
        %1260 = vmatpush1.msra.mxu0 0.0
        %1261 = vmatprep.subr.mxu0 0.0
        %1262 = vmatpush1.msra.mxu0 0.0
        %1263 = vmatprep.subr.mxu0 0.0
        %1264 = vmatpush1.msra.mxu0 0.0
        %1265 = vmatprep.subr.mxu0 0.0
        %1266 = vmatpush1.msra.mxu0 0.0
        %1267 = vmatprep.subr.mxu0 0.0
        %1268 = vmatpush1.msra.mxu0 0.0
        %1269 = vmatprep.subr.mxu0 0.0
        %1270 = vmatpush1.msra.mxu0 0.0
        %1271 = vmatprep.subr.mxu0 0.0
        %1272 = vmatpush1.msra.mxu0 0.0
        %1273 = vmatprep.subr.mxu0 0.0
        %1274 = vmatpush1.msra.mxu0 0.0
        %1275 = vmatprep.subr.mxu0 0.0
        %1276 = vmatpush1.msra.mxu0 0.0
        %1277 = vmatprep.mubr.f32.mxu0 0.0
        %1278 = vmatmul.mubr.f32.gmra.mrb[0].mxu0 %v1211
        %v1279 = vpop.f32.mrb[0].mxu0
        %v1280 = vadd.f32 0.0, %v1279
        %v1281 = vpop.f32.mrb[0].mxu0
        %1282 = vdwg.mxu0
        %v1284 = vsel %vm443, %v1207, 0
        %1286 = vmatprep.subr.mxu0 0.0
        %1287 = vmatpush1.msra.mxu0 %v417
        %1288 = vmatprep.subr.mxu0 0.0
        %1289 = vmatpush1.msra.mxu0 %v418
        %1290 = vmatprep.subr.mxu0 0.0
        %1291 = vmatpush1.msra.mxu0 %v419
        %1292 = vmatprep.subr.mxu0 0.0
        %1293 = vmatpush1.msra.mxu0 %v420
        %1294 = vmatprep.subr.mxu0 0.0
        %1295 = vmatpush1.msra.mxu0 %v421
        %1296 = vmatprep.subr.mxu0 0.0
        %1297 = vmatpush1.msra.mxu0 %v422
        %1298 = vmatprep.subr.mxu0 0.0
        %1299 = vmatpush1.msra.mxu0 %v423
        %1300 = vmatprep.subr.mxu0 0.0
        %1301 = vmatpush1.msra.mxu0 %v424
        %1302 = vmatprep.subr.mxu0 0.0
        %1303 = vmatpush1.msra.mxu0 0.0
        %1304 = vmatprep.subr.mxu0 0.0
        %1305 = vmatpush1.msra.mxu0 0.0
        %1306 = vmatprep.subr.mxu0 0.0
        %1307 = vmatpush1.msra.mxu0 0.0
        %1308 = vmatprep.subr.mxu0 0.0
        %1309 = vmatpush1.msra.mxu0 0.0
        %1310 = vmatprep.subr.mxu0 0.0
        %1311 = vmatpush1.msra.mxu0 0.0
        %1312 = vmatprep.subr.mxu0 0.0
        %1313 = vmatpush1.msra.mxu0 0.0
        %1314 = vmatprep.subr.mxu0 0.0
        %1315 = vmatpush1.msra.mxu0 0.0
        %1316 = vmatprep.subr.mxu0 0.0
        %1317 = vmatpush1.msra.mxu0 0.0
        %1318 = vmatprep.subr.mxu0 0.0
        %1319 = vmatpush1.msra.mxu0 0.0
        %1320 = vmatprep.subr.mxu0 0.0
        %1321 = vmatpush1.msra.mxu0 0.0
        %1322 = vmatprep.subr.mxu0 0.0
        %1323 = vmatpush1.msra.mxu0 0.0
        %1324 = vmatprep.subr.mxu0 0.0
        %1325 = vmatpush1.msra.mxu0 0.0
        %1326 = vmatprep.subr.mxu0 0.0
        %1327 = vmatpush1.msra.mxu0 0.0
        %1328 = vmatprep.subr.mxu0 0.0
        %1329 = vmatpush1.msra.mxu0 0.0
        %1330 = vmatprep.subr.mxu0 0.0
        %1331 = vmatpush1.msra.mxu0 0.0
        %1332 = vmatprep.subr.mxu0 0.0
        %1333 = vmatpush1.msra.mxu0 0.0
        %1334 = vmatprep.subr.mxu0 0.0
        %1335 = vmatpush1.msra.mxu0 0.0
        %1336 = vmatprep.subr.mxu0 0.0
        %1337 = vmatpush1.msra.mxu0 0.0
        %1338 = vmatprep.subr.mxu0 0.0
        %1339 = vmatpush1.msra.mxu0 0.0
        %1340 = vmatprep.subr.mxu0 0.0
        %1341 = vmatpush1.msra.mxu0 0.0
        %1342 = vmatprep.subr.mxu0 0.0
        %1343 = vmatpush1.msra.mxu0 0.0
        %1344 = vmatprep.subr.mxu0 0.0
        %1345 = vmatpush1.msra.mxu0 0.0
        %1346 = vmatprep.subr.mxu0 0.0
        %1347 = vmatpush1.msra.mxu0 0.0
        %1348 = vmatprep.subr.mxu0 0.0
        %1349 = vmatpush1.msra.mxu0 0.0
        %1350 = vmatprep.mubr.f32.mxu0 0.0
        %1351 = vmatmul.mubr.f32.gmra.mrb[0].mxu0 %v1284
        %v1352 = vpop.f32.mrb[0].mxu0
        %v1353 = vadd.f32 %v1280, %v1352
        %v1354 = vpop.f32.mrb[0].mxu0
        %1355 = vdwg.mxu0
        %v1356 = vadd.f32 %v1353, %v594
        %v1357 = vmax.f32 %v1356, 0.0
        %v1359 = vsel %vm604, %v1357, 0
        %1361 = vmatprep.subr.mxu0 0.0
        %1362 = vmatpush1.msra.mxu0 %v434
        %1363 = vmatprep.subr.mxu0 0.0
        %1364 = vmatpush1.msra.mxu0 %v435
        %1365 = vmatprep.subr.mxu0 0.0
        %1366 = vmatpush1.msra.mxu0 %v436
        %1367 = vmatprep.subr.mxu0 0.0
        %1368 = vmatpush1.msra.mxu0 %v437
        %1369 = vmatprep.subr.mxu0 0.0
        %1370 = vmatpush1.msra.mxu0 0.0
        %1371 = vmatprep.subr.mxu0 0.0
        %1372 = vmatpush1.msra.mxu0 0.0
        %1373 = vmatprep.subr.mxu0 0.0
        %1374 = vmatpush1.msra.mxu0 0.0
        %1375 = vmatprep.subr.mxu0 0.0
        %1376 = vmatpush1.msra.mxu0 0.0
        %1377 = vmatprep.subr.mxu0 0.0
        %1378 = vmatpush1.msra.mxu0 0.0
        %1379 = vmatprep.subr.mxu0 0.0
        %1380 = vmatpush1.msra.mxu0 0.0
        %1381 = vmatprep.subr.mxu0 0.0
        %1382 = vmatpush1.msra.mxu0 0.0
        %1383 = vmatprep.subr.mxu0 0.0
        %1384 = vmatpush1.msra.mxu0 0.0
        %1385 = vmatprep.subr.mxu0 0.0
        %1386 = vmatpush1.msra.mxu0 0.0
        %1387 = vmatprep.subr.mxu0 0.0
        %1388 = vmatpush1.msra.mxu0 0.0
        %1389 = vmatprep.subr.mxu0 0.0
        %1390 = vmatpush1.msra.mxu0 0.0
        %1391 = vmatprep.subr.mxu0 0.0
        %1392 = vmatpush1.msra.mxu0 0.0
        %1393 = vmatprep.subr.mxu0 0.0
        %1394 = vmatpush1.msra.mxu0 0.0
        %1395 = vmatprep.subr.mxu0 0.0
        %1396 = vmatpush1.msra.mxu0 0.0
        %1397 = vmatprep.subr.mxu0 0.0
        %1398 = vmatpush1.msra.mxu0 0.0
        %1399 = vmatprep.subr.mxu0 0.0
        %1400 = vmatpush1.msra.mxu0 0.0
        %1401 = vmatprep.subr.mxu0 0.0
        %1402 = vmatpush1.msra.mxu0 0.0
        %1403 = vmatprep.subr.mxu0 0.0
        %1404 = vmatpush1.msra.mxu0 0.0
        %1405 = vmatprep.subr.mxu0 0.0
        %1406 = vmatpush1.msra.mxu0 0.0
        %1407 = vmatprep.subr.mxu0 0.0
        %1408 = vmatpush1.msra.mxu0 0.0
        %1409 = vmatprep.subr.mxu0 0.0
        %1410 = vmatpush1.msra.mxu0 0.0
        %1411 = vmatprep.subr.mxu0 0.0
        %1412 = vmatpush1.msra.mxu0 0.0
        %1413 = vmatprep.subr.mxu0 0.0
        %1414 = vmatpush1.msra.mxu0 0.0
        %1415 = vmatprep.subr.mxu0 0.0
        %1416 = vmatpush1.msra.mxu0 0.0
        %1417 = vmatprep.subr.mxu0 0.0
        %1418 = vmatpush1.msra.mxu0 0.0
        %1419 = vmatprep.subr.mxu0 0.0
        %1420 = vmatpush1.msra.mxu0 0.0
        %1421 = vmatprep.subr.mxu0 0.0
        %1422 = vmatpush1.msra.mxu0 0.0
        %1423 = vmatprep.subr.mxu0 0.0
        %1424 = vmatpush1.msra.mxu0 0.0
        %1425 = vmatprep.mubr.f32.mxu0 0.0
        %1426 = vmatmul.mubr.f32.gmra.mrb[0].mxu0 %v1359
        %v1427 = vpop.f32.mrb[0].mxu0
        %v1428 = vadd.f32 %v602, %v1427
        %v1429 = vpop.f32.mrb[0].mxu0
        %1430 = vdwg.mxu0
        %v1431 = vpack.c.bf16 %v1428, %v1428
        %s1432 = scalar_lea.vmem %s366, 12 [#allocation4]
        %1433 = vst [vmem:[%s1432] sm:$0xf] %v1431
        %1434 = vst.msk [vmem:[#allocation2] sm:$0xff] %vm443, %v1428
        %1435 = vrot.lane.b32.xlu0 %v1207, 64
        %v1436 = vpop.permute.xlu0 %1435
        %v1438 = vsub.f32 %v1428, %v1436
        %v1439 = vmul.f32 %v1438, %v1438
        %1441 = vrot.lane.b32.xlu0 %v1439, 64
        %v1442 = vpop.permute.xlu0 %1441
        %v1444 = vsel %vm443, %v1442, 0.0
        %1445 = vadd.xlane.f32.xlu0 %v1444
        %v1446 = vpop.xlane.xlu0 %1445
        %v1447 = vmul.f32 %v1446, %v693
        %v1449 = vlaneseq
        %v1450 = vshrl.u32 %v1449, 7
        %v1451 = vsub.s32 %v697, %v1450
        %v1452 = vrot.slane %v1447, %v1451
        %1454 = vst.msk [vmem:[%s398 + $0x3] sm:$0x1] %vm703, %v1452
        %s1455 = scalar_lea.vmem %s388, 16
        %v1456 = vld [vmem:[%s1455] sm:$0xf]
        %v1457 = vunpack.c.l.bf16 %v1456
        %v1458 = vld [vmem:[#allocation2] sm:$0xff]
        %v1459 = vmul.f32 %v1458, %v415
        %v1461 = vsel %vm443, %v1459, 0
        %1463 = vmatprep.subr.mxu0 0.0
        %1464 = vmatpush1.msra.mxu0 %v425
        %1465 = vmatprep.subr.mxu0 0.0
        %1466 = vmatpush1.msra.mxu0 %v426
        %1467 = vmatprep.subr.mxu0 0.0
        %1468 = vmatpush1.msra.mxu0 %v427
        %1469 = vmatprep.subr.mxu0 0.0
        %1470 = vmatpush1.msra.mxu0 %v428
        %1471 = vmatprep.subr.mxu0 0.0
        %1472 = vmatpush1.msra.mxu0 %v429
        %1473 = vmatprep.subr.mxu0 0.0
        %1474 = vmatpush1.msra.mxu0 %v430
        %1475 = vmatprep.subr.mxu0 0.0
        %1476 = vmatpush1.msra.mxu0 %v431
        %1477 = vmatprep.subr.mxu0 0.0
        %1478 = vmatpush1.msra.mxu0 %v432
        %1479 = vmatprep.subr.mxu0 0.0
        %1480 = vmatpush1.msra.mxu0 0.0
        %1481 = vmatprep.subr.mxu0 0.0
        %1482 = vmatpush1.msra.mxu0 0.0
        %1483 = vmatprep.subr.mxu0 0.0
        %1484 = vmatpush1.msra.mxu0 0.0
        %1485 = vmatprep.subr.mxu0 0.0
        %1486 = vmatpush1.msra.mxu0 0.0
        %1487 = vmatprep.subr.mxu0 0.0
        %1488 = vmatpush1.msra.mxu0 0.0
        %1489 = vmatprep.subr.mxu0 0.0
        %1490 = vmatpush1.msra.mxu0 0.0
        %1491 = vmatprep.subr.mxu0 0.0
        %1492 = vmatpush1.msra.mxu0 0.0
        %1493 = vmatprep.subr.mxu0 0.0
        %1494 = vmatpush1.msra.mxu0 0.0
        %1495 = vmatprep.subr.mxu0 0.0
        %1496 = vmatpush1.msra.mxu0 0.0
        %1497 = vmatprep.subr.mxu0 0.0
        %1498 = vmatpush1.msra.mxu0 0.0
        %1499 = vmatprep.subr.mxu0 0.0
        %1500 = vmatpush1.msra.mxu0 0.0
        %1501 = vmatprep.subr.mxu0 0.0
        %1502 = vmatpush1.msra.mxu0 0.0
        %1503 = vmatprep.subr.mxu0 0.0
        %1504 = vmatpush1.msra.mxu0 0.0
        %1505 = vmatprep.subr.mxu0 0.0
        %1506 = vmatpush1.msra.mxu0 0.0
        %1507 = vmatprep.subr.mxu0 0.0
        %1508 = vmatpush1.msra.mxu0 0.0
        %1509 = vmatprep.subr.mxu0 0.0
        %1510 = vmatpush1.msra.mxu0 0.0
        %1511 = vmatprep.subr.mxu0 0.0
        %1512 = vmatpush1.msra.mxu0 0.0
        %1513 = vmatprep.subr.mxu0 0.0
        %1514 = vmatpush1.msra.mxu0 0.0
        %1515 = vmatprep.subr.mxu0 0.0
        %1516 = vmatpush1.msra.mxu0 0.0
        %1517 = vmatprep.subr.mxu0 0.0
        %1518 = vmatpush1.msra.mxu0 0.0
        %1519 = vmatprep.subr.mxu0 0.0
        %1520 = vmatpush1.msra.mxu0 0.0
        %1521 = vmatprep.subr.mxu0 0.0
        %1522 = vmatpush1.msra.mxu0 0.0
        %1523 = vmatprep.subr.mxu0 0.0
        %1524 = vmatpush1.msra.mxu0 0.0
        %1525 = vmatprep.subr.mxu0 0.0
        %1526 = vmatpush1.msra.mxu0 0.0
        %1527 = vmatprep.mubr.f32.mxu0 0.0
        %1528 = vmatmul.mubr.f32.gmra.mrb[0].mxu0 %v1461
        %v1529 = vpop.f32.mrb[0].mxu0
        %v1530 = vadd.f32 0.0, %v1529
        %v1531 = vpop.f32.mrb[0].mxu0
        %1532 = vdwg.mxu0
        %v1534 = vsel %vm443, %v1457, 0
        %1536 = vmatprep.subr.mxu0 0.0
        %1537 = vmatpush1.msra.mxu0 %v417
        %1538 = vmatprep.subr.mxu0 0.0
        %1539 = vmatpush1.msra.mxu0 %v418
        %1540 = vmatprep.subr.mxu0 0.0
        %1541 = vmatpush1.msra.mxu0 %v419
        %1542 = vmatprep.subr.mxu0 0.0
        %1543 = vmatpush1.msra.mxu0 %v420
        %1544 = vmatprep.subr.mxu0 0.0
        %1545 = vmatpush1.msra.mxu0 %v421
        %1546 = vmatprep.subr.mxu0 0.0
        %1547 = vmatpush1.msra.mxu0 %v422
        %1548 = vmatprep.subr.mxu0 0.0
        %1549 = vmatpush1.msra.mxu0 %v423
        %1550 = vmatprep.subr.mxu0 0.0
        %1551 = vmatpush1.msra.mxu0 %v424
        %1552 = vmatprep.subr.mxu0 0.0
        %1553 = vmatpush1.msra.mxu0 0.0
        %1554 = vmatprep.subr.mxu0 0.0
        %1555 = vmatpush1.msra.mxu0 0.0
        %1556 = vmatprep.subr.mxu0 0.0
        %1557 = vmatpush1.msra.mxu0 0.0
        %1558 = vmatprep.subr.mxu0 0.0
        %1559 = vmatpush1.msra.mxu0 0.0
        %1560 = vmatprep.subr.mxu0 0.0
        %1561 = vmatpush1.msra.mxu0 0.0
        %1562 = vmatprep.subr.mxu0 0.0
        %1563 = vmatpush1.msra.mxu0 0.0
        %1564 = vmatprep.subr.mxu0 0.0
        %1565 = vmatpush1.msra.mxu0 0.0
        %1566 = vmatprep.subr.mxu0 0.0
        %1567 = vmatpush1.msra.mxu0 0.0
        %1568 = vmatprep.subr.mxu0 0.0
        %1569 = vmatpush1.msra.mxu0 0.0
        %1570 = vmatprep.subr.mxu0 0.0
        %1571 = vmatpush1.msra.mxu0 0.0
        %1572 = vmatprep.subr.mxu0 0.0
        %1573 = vmatpush1.msra.mxu0 0.0
        %1574 = vmatprep.subr.mxu0 0.0
        %1575 = vmatpush1.msra.mxu0 0.0
        %1576 = vmatprep.subr.mxu0 0.0
        %1577 = vmatpush1.msra.mxu0 0.0
        %1578 = vmatprep.subr.mxu0 0.0
        %1579 = vmatpush1.msra.mxu0 0.0
        %1580 = vmatprep.subr.mxu0 0.0
        %1581 = vmatpush1.msra.mxu0 0.0
        %1582 = vmatprep.subr.mxu0 0.0
        %1583 = vmatpush1.msra.mxu0 0.0
        %1584 = vmatprep.subr.mxu0 0.0
        %1585 = vmatpush1.msra.mxu0 0.0
        %1586 = vmatprep.subr.mxu0 0.0
        %1587 = vmatpush1.msra.mxu0 0.0
        %1588 = vmatprep.subr.mxu0 0.0
        %1589 = vmatpush1.msra.mxu0 0.0
        %1590 = vmatprep.subr.mxu0 0.0
        %1591 = vmatpush1.msra.mxu0 0.0
        %1592 = vmatprep.subr.mxu0 0.0
        %1593 = vmatpush1.msra.mxu0 0.0
        %1594 = vmatprep.subr.mxu0 0.0
        %1595 = vmatpush1.msra.mxu0 0.0
        %1596 = vmatprep.subr.mxu0 0.0
        %1597 = vmatpush1.msra.mxu0 0.0
        %1598 = vmatprep.subr.mxu0 0.0
        %1599 = vmatpush1.msra.mxu0 0.0
        %1600 = vmatprep.mubr.f32.mxu0 0.0
        %1601 = vmatmul.mubr.f32.gmra.mrb[0].mxu0 %v1534
        %v1602 = vpop.f32.mrb[0].mxu0
        %v1603 = vadd.f32 %v1530, %v1602
        %v1604 = vpop.f32.mrb[0].mxu0
        %1605 = vdwg.mxu0
        %v1606 = vadd.f32 %v1603, %v594
        %v1607 = vmax.f32 %v1606, 0.0
        %v1609 = vsel %vm604, %v1607, 0
        %1611 = vmatprep.subr.mxu0 0.0
        %1612 = vmatpush1.msra.mxu0 %v434
        %1613 = vmatprep.subr.mxu0 0.0
        %1614 = vmatpush1.msra.mxu0 %v435
        %1615 = vmatprep.subr.mxu0 0.0
        %1616 = vmatpush1.msra.mxu0 %v436
        %1617 = vmatprep.subr.mxu0 0.0
        %1618 = vmatpush1.msra.mxu0 %v437
        %1619 = vmatprep.subr.mxu0 0.0
        %1620 = vmatpush1.msra.mxu0 0.0
        %1621 = vmatprep.subr.mxu0 0.0
        %1622 = vmatpush1.msra.mxu0 0.0
        %1623 = vmatprep.subr.mxu0 0.0
        %1624 = vmatpush1.msra.mxu0 0.0
        %1625 = vmatprep.subr.mxu0 0.0
        %1626 = vmatpush1.msra.mxu0 0.0
        %1627 = vmatprep.subr.mxu0 0.0
        %1628 = vmatpush1.msra.mxu0 0.0
        %1629 = vmatprep.subr.mxu0 0.0
        %1630 = vmatpush1.msra.mxu0 0.0
        %1631 = vmatprep.subr.mxu0 0.0
        %1632 = vmatpush1.msra.mxu0 0.0
        %1633 = vmatprep.subr.mxu0 0.0
        %1634 = vmatpush1.msra.mxu0 0.0
        %1635 = vmatprep.subr.mxu0 0.0
        %1636 = vmatpush1.msra.mxu0 0.0
        %1637 = vmatprep.subr.mxu0 0.0
        %1638 = vmatpush1.msra.mxu0 0.0
        %1639 = vmatprep.subr.mxu0 0.0
        %1640 = vmatpush1.msra.mxu0 0.0
        %1641 = vmatprep.subr.mxu0 0.0
        %1642 = vmatpush1.msra.mxu0 0.0
        %1643 = vmatprep.subr.mxu0 0.0
        %1644 = vmatpush1.msra.mxu0 0.0
        %1645 = vmatprep.subr.mxu0 0.0
        %1646 = vmatpush1.msra.mxu0 0.0
        %1647 = vmatprep.subr.mxu0 0.0
        %1648 = vmatpush1.msra.mxu0 0.0
        %1649 = vmatprep.subr.mxu0 0.0
        %1650 = vmatpush1.msra.mxu0 0.0
        %1651 = vmatprep.subr.mxu0 0.0
        %1652 = vmatpush1.msra.mxu0 0.0
        %1653 = vmatprep.subr.mxu0 0.0
        %1654 = vmatpush1.msra.mxu0 0.0
        %1655 = vmatprep.subr.mxu0 0.0
        %1656 = vmatpush1.msra.mxu0 0.0
        %1657 = vmatprep.subr.mxu0 0.0
        %1658 = vmatpush1.msra.mxu0 0.0
        %1659 = vmatprep.subr.mxu0 0.0
        %1660 = vmatpush1.msra.mxu0 0.0
        %1661 = vmatprep.subr.mxu0 0.0
        %1662 = vmatpush1.msra.mxu0 0.0
        %1663 = vmatprep.subr.mxu0 0.0
        %1664 = vmatpush1.msra.mxu0 0.0
        %1665 = vmatprep.subr.mxu0 0.0
        %1666 = vmatpush1.msra.mxu0 0.0
        %1667 = vmatprep.subr.mxu0 0.0
        %1668 = vmatpush1.msra.mxu0 0.0
        %1669 = vmatprep.subr.mxu0 0.0
        %1670 = vmatpush1.msra.mxu0 0.0
        %1671 = vmatprep.subr.mxu0 0.0
        %1672 = vmatpush1.msra.mxu0 0.0
        %1673 = vmatprep.subr.mxu0 0.0
        %1674 = vmatpush1.msra.mxu0 0.0
        %1675 = vmatprep.mubr.f32.mxu0 0.0
        %1676 = vmatmul.mubr.f32.gmra.mrb[0].mxu0 %v1609
        %v1677 = vpop.f32.mrb[0].mxu0
        %v1678 = vadd.f32 %v602, %v1677
        %v1679 = vpop.f32.mrb[0].mxu0
        %1680 = vdwg.mxu0
        %v1681 = vpack.c.bf16 %v1678, %v1678
        %s1682 = scalar_lea.vmem %s366, 16 [#allocation4]
        %1683 = vst [vmem:[%s1682] sm:$0xf] %v1681
        %1684 = vst.msk [vmem:[#allocation2] sm:$0xff] %vm443, %v1678
        %1685 = vrot.lane.b32.xlu0 %v1457, 64
        %v1686 = vpop.permute.xlu0 %1685
        %v1688 = vsub.f32 %v1678, %v1686
        %v1689 = vmul.f32 %v1688, %v1688
        %1691 = vrot.lane.b32.xlu0 %v1689, 64
        %v1692 = vpop.permute.xlu0 %1691
        %v1694 = vsel %vm443, %v1692, 0.0
        %1695 = vadd.xlane.f32.xlu0 %v1694
        %v1696 = vpop.xlane.xlu0 %1695
        %v1697 = vmul.f32 %v1696, %v693
        %v1699 = vlaneseq
        %v1700 = vshrl.u32 %v1699, 7
        %v1701 = vsub.s32 %v697, %v1700
        %v1702 = vrot.slane %v1697, %v1701
        %1704 = vst.msk [vmem:[%s398 + $0x4] sm:$0x1] %vm703, %v1702
        %s1705 = scalar_lea.vmem %s388, 20
        %v1706 = vld [vmem:[%s1705] sm:$0xf]
        %v1707 = vunpack.c.l.bf16 %v1706
        %v1708 = vld [vmem:[#allocation2] sm:$0xff]
        %v1709 = vmul.f32 %v1708, %v415
        %v1711 = vsel %vm443, %v1709, 0
        %1713 = vmatprep.subr.mxu0 0.0
        %1714 = vmatpush1.msra.mxu0 %v425
        %1715 = vmatprep.subr.mxu0 0.0
        %1716 = vmatpush1.msra.mxu0 %v426
        %1717 = vmatprep.subr.mxu0 0.0
        %1718 = vmatpush1.msra.mxu0 %v427
        %1719 = vmatprep.subr.mxu0 0.0
        %1720 = vmatpush1.msra.mxu0 %v428
        %1721 = vmatprep.subr.mxu0 0.0
        %1722 = vmatpush1.msra.mxu0 %v429
        %1723 = vmatprep.subr.mxu0 0.0
        %1724 = vmatpush1.msra.mxu0 %v430
        %1725 = vmatprep.subr.mxu0 0.0
        %1726 = vmatpush1.msra.mxu0 %v431
        %1727 = vmatprep.subr.mxu0 0.0
        %1728 = vmatpush1.msra.mxu0 %v432
        %1729 = vmatprep.subr.mxu0 0.0
        %1730 = vmatpush1.msra.mxu0 0.0
        %1731 = vmatprep.subr.mxu0 0.0
        %1732 = vmatpush1.msra.mxu0 0.0
        %1733 = vmatprep.subr.mxu0 0.0
        %1734 = vmatpush1.msra.mxu0 0.0
        %1735 = vmatprep.subr.mxu0 0.0
        %1736 = vmatpush1.msra.mxu0 0.0
        %1737 = vmatprep.subr.mxu0 0.0
        %1738 = vmatpush1.msra.mxu0 0.0
        %1739 = vmatprep.subr.mxu0 0.0
        %1740 = vmatpush1.msra.mxu0 0.0
        %1741 = vmatprep.subr.mxu0 0.0
        %1742 = vmatpush1.msra.mxu0 0.0
        %1743 = vmatprep.subr.mxu0 0.0
        %1744 = vmatpush1.msra.mxu0 0.0
        %1745 = vmatprep.subr.mxu0 0.0
        %1746 = vmatpush1.msra.mxu0 0.0
        %1747 = vmatprep.subr.mxu0 0.0
        %1748 = vmatpush1.msra.mxu0 0.0
        %1749 = vmatprep.subr.mxu0 0.0
        %1750 = vmatpush1.msra.mxu0 0.0
        %1751 = vmatprep.subr.mxu0 0.0
        %1752 = vmatpush1.msra.mxu0 0.0
        %1753 = vmatprep.subr.mxu0 0.0
        %1754 = vmatpush1.msra.mxu0 0.0
        %1755 = vmatprep.subr.mxu0 0.0
        %1756 = vmatpush1.msra.mxu0 0.0
        %1757 = vmatprep.subr.mxu0 0.0
        %1758 = vmatpush1.msra.mxu0 0.0
        %1759 = vmatprep.subr.mxu0 0.0
        %1760 = vmatpush1.msra.mxu0 0.0
        %1761 = vmatprep.subr.mxu0 0.0
        %1762 = vmatpush1.msra.mxu0 0.0
        %1763 = vmatprep.subr.mxu0 0.0
        %1764 = vmatpush1.msra.mxu0 0.0
        %1765 = vmatprep.subr.mxu0 0.0
        %1766 = vmatpush1.msra.mxu0 0.0
        %1767 = vmatprep.subr.mxu0 0.0
        %1768 = vmatpush1.msra.mxu0 0.0
        %1769 = vmatprep.subr.mxu0 0.0
        %1770 = vmatpush1.msra.mxu0 0.0
        %1771 = vmatprep.subr.mxu0 0.0
        %1772 = vmatpush1.msra.mxu0 0.0
        %1773 = vmatprep.subr.mxu0 0.0
        %1774 = vmatpush1.msra.mxu0 0.0
        %1775 = vmatprep.subr.mxu0 0.0
        %1776 = vmatpush1.msra.mxu0 0.0
        %1777 = vmatprep.mubr.f32.mxu0 0.0
        %1778 = vmatmul.mubr.f32.gmra.mrb[0].mxu0 %v1711
        %v1779 = vpop.f32.mrb[0].mxu0
        %v1780 = vadd.f32 0.0, %v1779
        %v1781 = vpop.f32.mrb[0].mxu0
        %1782 = vdwg.mxu0
        %v1784 = vsel %vm443, %v1707, 0
        %1786 = vmatprep.subr.mxu0 0.0
        %1787 = vmatpush1.msra.mxu0 %v417
        %1788 = vmatprep.subr.mxu0 0.0
        %1789 = vmatpush1.msra.mxu0 %v418
        %1790 = vmatprep.subr.mxu0 0.0
        %1791 = vmatpush1.msra.mxu0 %v419
        %1792 = vmatprep.subr.mxu0 0.0
        %1793 = vmatpush1.msra.mxu0 %v420
        %1794 = vmatprep.subr.mxu0 0.0
        %1795 = vmatpush1.msra.mxu0 %v421
        %1796 = vmatprep.subr.mxu0 0.0
        %1797 = vmatpush1.msra.mxu0 %v422
        %1798 = vmatprep.subr.mxu0 0.0
        %1799 = vmatpush1.msra.mxu0 %v423
        %1800 = vmatprep.subr.mxu0 0.0
        %1801 = vmatpush1.msra.mxu0 %v424
        %1802 = vmatprep.subr.mxu0 0.0
        %1803 = vmatpush1.msra.mxu0 0.0
        %1804 = vmatprep.subr.mxu0 0.0
        %1805 = vmatpush1.msra.mxu0 0.0
        %1806 = vmatprep.subr.mxu0 0.0
        %1807 = vmatpush1.msra.mxu0 0.0
        %1808 = vmatprep.subr.mxu0 0.0
        %1809 = vmatpush1.msra.mxu0 0.0
        %1810 = vmatprep.subr.mxu0 0.0
        %1811 = vmatpush1.msra.mxu0 0.0
        %1812 = vmatprep.subr.mxu0 0.0
        %1813 = vmatpush1.msra.mxu0 0.0
        %1814 = vmatprep.subr.mxu0 0.0
        %1815 = vmatpush1.msra.mxu0 0.0
        %1816 = vmatprep.subr.mxu0 0.0
        %1817 = vmatpush1.msra.mxu0 0.0
        %1818 = vmatprep.subr.mxu0 0.0
        %1819 = vmatpush1.msra.mxu0 0.0
        %1820 = vmatprep.subr.mxu0 0.0
        %1821 = vmatpush1.msra.mxu0 0.0
        %1822 = vmatprep.subr.mxu0 0.0
        %1823 = vmatpush1.msra.mxu0 0.0
        %1824 = vmatprep.subr.mxu0 0.0
        %1825 = vmatpush1.msra.mxu0 0.0
        %1826 = vmatprep.subr.mxu0 0.0
        %1827 = vmatpush1.msra.mxu0 0.0
        %1828 = vmatprep.subr.mxu0 0.0
        %1829 = vmatpush1.msra.mxu0 0.0
        %1830 = vmatprep.subr.mxu0 0.0
        %1831 = vmatpush1.msra.mxu0 0.0
        %1832 = vmatprep.subr.mxu0 0.0
        %1833 = vmatpush1.msra.mxu0 0.0
        %1834 = vmatprep.subr.mxu0 0.0
        %1835 = vmatpush1.msra.mxu0 0.0
        %1836 = vmatprep.subr.mxu0 0.0
        %1837 = vmatpush1.msra.mxu0 0.0
        %1838 = vmatprep.subr.mxu0 0.0
        %1839 = vmatpush1.msra.mxu0 0.0
        %1840 = vmatprep.subr.mxu0 0.0
        %1841 = vmatpush1.msra.mxu0 0.0
        %1842 = vmatprep.subr.mxu0 0.0
        %1843 = vmatpush1.msra.mxu0 0.0
        %1844 = vmatprep.subr.mxu0 0.0
        %1845 = vmatpush1.msra.mxu0 0.0
        %1846 = vmatprep.subr.mxu0 0.0
        %1847 = vmatpush1.msra.mxu0 0.0
        %1848 = vmatprep.subr.mxu0 0.0
        %1849 = vmatpush1.msra.mxu0 0.0
        %1850 = vmatprep.mubr.f32.mxu0 0.0
        %1851 = vmatmul.mubr.f32.gmra.mrb[0].mxu0 %v1784
        %v1852 = vpop.f32.mrb[0].mxu0
        %v1853 = vadd.f32 %v1780, %v1852
        %v1854 = vpop.f32.mrb[0].mxu0
        %1855 = vdwg.mxu0
        %v1856 = vadd.f32 %v1853, %v594
        %v1857 = vmax.f32 %v1856, 0.0
        %v1859 = vsel %vm604, %v1857, 0
        %1861 = vmatprep.subr.mxu0 0.0
        %1862 = vmatpush1.msra.mxu0 %v434
        %1863 = vmatprep.subr.mxu0 0.0
        %1864 = vmatpush1.msra.mxu0 %v435
        %1865 = vmatprep.subr.mxu0 0.0
        %1866 = vmatpush1.msra.mxu0 %v436
        %1867 = vmatprep.subr.mxu0 0.0
        %1868 = vmatpush1.msra.mxu0 %v437
        %1869 = vmatprep.subr.mxu0 0.0
        %1870 = vmatpush1.msra.mxu0 0.0
        %1871 = vmatprep.subr.mxu0 0.0
        %1872 = vmatpush1.msra.mxu0 0.0
        %1873 = vmatprep.subr.mxu0 0.0
        %1874 = vmatpush1.msra.mxu0 0.0
        %1875 = vmatprep.subr.mxu0 0.0
        %1876 = vmatpush1.msra.mxu0 0.0
        %1877 = vmatprep.subr.mxu0 0.0
        %1878 = vmatpush1.msra.mxu0 0.0
        %1879 = vmatprep.subr.mxu0 0.0
        %1880 = vmatpush1.msra.mxu0 0.0
        %1881 = vmatprep.subr.mxu0 0.0
        %1882 = vmatpush1.msra.mxu0 0.0
        %1883 = vmatprep.subr.mxu0 0.0
        %1884 = vmatpush1.msra.mxu0 0.0
        %1885 = vmatprep.subr.mxu0 0.0
        %1886 = vmatpush1.msra.mxu0 0.0
        %1887 = vmatprep.subr.mxu0 0.0
        %1888 = vmatpush1.msra.mxu0 0.0
        %1889 = vmatprep.subr.mxu0 0.0
        %1890 = vmatpush1.msra.mxu0 0.0
        %1891 = vmatprep.subr.mxu0 0.0
        %1892 = vmatpush1.msra.mxu0 0.0
        %1893 = vmatprep.subr.mxu0 0.0
        %1894 = vmatpush1.msra.mxu0 0.0
        %1895 = vmatprep.subr.mxu0 0.0
        %1896 = vmatpush1.msra.mxu0 0.0
        %1897 = vmatprep.subr.mxu0 0.0
        %1898 = vmatpush1.msra.mxu0 0.0
        %1899 = vmatprep.subr.mxu0 0.0
        %1900 = vmatpush1.msra.mxu0 0.0
        %1901 = vmatprep.subr.mxu0 0.0
        %1902 = vmatpush1.msra.mxu0 0.0
        %1903 = vmatprep.subr.mxu0 0.0
        %1904 = vmatpush1.msra.mxu0 0.0
        %1905 = vmatprep.subr.mxu0 0.0
        %1906 = vmatpush1.msra.mxu0 0.0
        %1907 = vmatprep.subr.mxu0 0.0
        %1908 = vmatpush1.msra.mxu0 0.0
        %1909 = vmatprep.subr.mxu0 0.0
        %1910 = vmatpush1.msra.mxu0 0.0
        %1911 = vmatprep.subr.mxu0 0.0
        %1912 = vmatpush1.msra.mxu0 0.0
        %1913 = vmatprep.subr.mxu0 0.0
        %1914 = vmatpush1.msra.mxu0 0.0
        %1915 = vmatprep.subr.mxu0 0.0
        %1916 = vmatpush1.msra.mxu0 0.0
        %1917 = vmatprep.subr.mxu0 0.0
        %1918 = vmatpush1.msra.mxu0 0.0
        %1919 = vmatprep.subr.mxu0 0.0
        %1920 = vmatpush1.msra.mxu0 0.0
        %1921 = vmatprep.subr.mxu0 0.0
        %1922 = vmatpush1.msra.mxu0 0.0
        %1923 = vmatprep.subr.mxu0 0.0
        %1924 = vmatpush1.msra.mxu0 0.0
        %1925 = vmatprep.mubr.f32.mxu0 0.0
        %1926 = vmatmul.mubr.f32.gmra.mrb[0].mxu0 %v1859
        %v1927 = vpop.f32.mrb[0].mxu0
        %v1928 = vadd.f32 %v602, %v1927
        %v1929 = vpop.f32.mrb[0].mxu0
        %1930 = vdwg.mxu0
        %v1931 = vpack.c.bf16 %v1928, %v1928
        %s1932 = scalar_lea.vmem %s366, 20 [#allocation4]
        %1933 = vst [vmem:[%s1932] sm:$0xf] %v1931
        %1934 = vst.msk [vmem:[#allocation2] sm:$0xff] %vm443, %v1928
        %1935 = vrot.lane.b32.xlu0 %v1707, 64
        %v1936 = vpop.permute.xlu0 %1935
        %v1938 = vsub.f32 %v1928, %v1936
        %v1939 = vmul.f32 %v1938, %v1938
        %1941 = vrot.lane.b32.xlu0 %v1939, 64
        %v1942 = vpop.permute.xlu0 %1941
        %v1944 = vsel %vm443, %v1942, 0.0
        %1945 = vadd.xlane.f32.xlu0 %v1944
        %v1946 = vpop.xlane.xlu0 %1945
        %v1947 = vmul.f32 %v1946, %v693
        %v1949 = vlaneseq
        %v1950 = vshrl.u32 %v1949, 7
        %v1951 = vsub.s32 %v697, %v1950
        %v1952 = vrot.slane %v1947, %v1951
        %1954 = vst.msk [vmem:[%s398 + $0x5] sm:$0x1] %vm703, %v1952
        %s1955 = scalar_lea.vmem %s388, 24
        %v1956 = vld [vmem:[%s1955] sm:$0xf]
        %v1957 = vunpack.c.l.bf16 %v1956
        %v1958 = vld [vmem:[#allocation2] sm:$0xff]
        %v1959 = vmul.f32 %v1958, %v415
        %v1961 = vsel %vm443, %v1959, 0
        %1963 = vmatprep.subr.mxu0 0.0
        %1964 = vmatpush1.msra.mxu0 %v425
        %1965 = vmatprep.subr.mxu0 0.0
        %1966 = vmatpush1.msra.mxu0 %v426
        %1967 = vmatprep.subr.mxu0 0.0
        %1968 = vmatpush1.msra.mxu0 %v427
        %1969 = vmatprep.subr.mxu0 0.0
        %1970 = vmatpush1.msra.mxu0 %v428
        %1971 = vmatprep.subr.mxu0 0.0
        %1972 = vmatpush1.msra.mxu0 %v429
        %1973 = vmatprep.subr.mxu0 0.0
        %1974 = vmatpush1.msra.mxu0 %v430
        %1975 = vmatprep.subr.mxu0 0.0
        %1976 = vmatpush1.msra.mxu0 %v431
        %1977 = vmatprep.subr.mxu0 0.0
        %1978 = vmatpush1.msra.mxu0 %v432
        %1979 = vmatprep.subr.mxu0 0.0
        %1980 = vmatpush1.msra.mxu0 0.0
        %1981 = vmatprep.subr.mxu0 0.0
        %1982 = vmatpush1.msra.mxu0 0.0
        %1983 = vmatprep.subr.mxu0 0.0
        %1984 = vmatpush1.msra.mxu0 0.0
        %1985 = vmatprep.subr.mxu0 0.0
        %1986 = vmatpush1.msra.mxu0 0.0
        %1987 = vmatprep.subr.mxu0 0.0
        %1988 = vmatpush1.msra.mxu0 0.0
        %1989 = vmatprep.subr.mxu0 0.0
        %1990 = vmatpush1.msra.mxu0 0.0
        %1991 = vmatprep.subr.mxu0 0.0
        %1992 = vmatpush1.msra.mxu0 0.0
        %1993 = vmatprep.subr.mxu0 0.0
        %1994 = vmatpush1.msra.mxu0 0.0
        %1995 = vmatprep.subr.mxu0 0.0
        %1996 = vmatpush1.msra.mxu0 0.0
        %1997 = vmatprep.subr.mxu0 0.0
        %1998 = vmatpush1.msra.mxu0 0.0
        %1999 = vmatprep.subr.mxu0 0.0
        %2000 = vmatpush1.msra.mxu0 0.0
        %2001 = vmatprep.subr.mxu0 0.0
        %2002 = vmatpush1.msra.mxu0 0.0
        %2003 = vmatprep.subr.mxu0 0.0
        %2004 = vmatpush1.msra.mxu0 0.0
        %2005 = vmatprep.subr.mxu0 0.0
        %2006 = vmatpush1.msra.mxu0 0.0
        %2007 = vmatprep.subr.mxu0 0.0
        %2008 = vmatpush1.msra.mxu0 0.0
        %2009 = vmatprep.subr.mxu0 0.0
        %2010 = vmatpush1.msra.mxu0 0.0
        %2011 = vmatprep.subr.mxu0 0.0
        %2012 = vmatpush1.msra.mxu0 0.0
        %2013 = vmatprep.subr.mxu0 0.0
        %2014 = vmatpush1.msra.mxu0 0.0
        %2015 = vmatprep.subr.mxu0 0.0
        %2016 = vmatpush1.msra.mxu0 0.0
        %2017 = vmatprep.subr.mxu0 0.0
        %2018 = vmatpush1.msra.mxu0 0.0
        %2019 = vmatprep.subr.mxu0 0.0
        %2020 = vmatpush1.msra.mxu0 0.0
        %2021 = vmatprep.subr.mxu0 0.0
        %2022 = vmatpush1.msra.mxu0 0.0
        %2023 = vmatprep.subr.mxu0 0.0
        %2024 = vmatpush1.msra.mxu0 0.0
        %2025 = vmatprep.subr.mxu0 0.0
        %2026 = vmatpush1.msra.mxu0 0.0
        %2027 = vmatprep.mubr.f32.mxu0 0.0
        %2028 = vmatmul.mubr.f32.gmra.mrb[0].mxu0 %v1961
        %v2029 = vpop.f32.mrb[0].mxu0
        %v2030 = vadd.f32 0.0, %v2029
        %v2031 = vpop.f32.mrb[0].mxu0
        %2032 = vdwg.mxu0
        %v2034 = vsel %vm443, %v1957, 0
        %2036 = vmatprep.subr.mxu0 0.0
        %2037 = vmatpush1.msra.mxu0 %v417
        %2038 = vmatprep.subr.mxu0 0.0
        %2039 = vmatpush1.msra.mxu0 %v418
        %2040 = vmatprep.subr.mxu0 0.0
        %2041 = vmatpush1.msra.mxu0 %v419
        %2042 = vmatprep.subr.mxu0 0.0
        %2043 = vmatpush1.msra.mxu0 %v420
        %2044 = vmatprep.subr.mxu0 0.0
        %2045 = vmatpush1.msra.mxu0 %v421
        %2046 = vmatprep.subr.mxu0 0.0
        %2047 = vmatpush1.msra.mxu0 %v422
        %2048 = vmatprep.subr.mxu0 0.0
        %2049 = vmatpush1.msra.mxu0 %v423
        %2050 = vmatprep.subr.mxu0 0.0
        %2051 = vmatpush1.msra.mxu0 %v424
        %2052 = vmatprep.subr.mxu0 0.0
        %2053 = vmatpush1.msra.mxu0 0.0
        %2054 = vmatprep.subr.mxu0 0.0
        %2055 = vmatpush1.msra.mxu0 0.0
        %2056 = vmatprep.subr.mxu0 0.0
        %2057 = vmatpush1.msra.mxu0 0.0
        %2058 = vmatprep.subr.mxu0 0.0
        %2059 = vmatpush1.msra.mxu0 0.0
        %2060 = vmatprep.subr.mxu0 0.0
        %2061 = vmatpush1.msra.mxu0 0.0
        %2062 = vmatprep.subr.mxu0 0.0
        %2063 = vmatpush1.msra.mxu0 0.0
        %2064 = vmatprep.subr.mxu0 0.0
        %2065 = vmatpush1.msra.mxu0 0.0
        %2066 = vmatprep.subr.mxu0 0.0
        %2067 = vmatpush1.msra.mxu0 0.0
        %2068 = vmatprep.subr.mxu0 0.0
        %2069 = vmatpush1.msra.mxu0 0.0
        %2070 = vmatprep.subr.mxu0 0.0
        %2071 = vmatpush1.msra.mxu0 0.0
        %2072 = vmatprep.subr.mxu0 0.0
        %2073 = vmatpush1.msra.mxu0 0.0
        %2074 = vmatprep.subr.mxu0 0.0
        %2075 = vmatpush1.msra.mxu0 0.0
        %2076 = vmatprep.subr.mxu0 0.0
        %2077 = vmatpush1.msra.mxu0 0.0
        %2078 = vmatprep.subr.mxu0 0.0
        %2079 = vmatpush1.msra.mxu0 0.0
        %2080 = vmatprep.subr.mxu0 0.0
        %2081 = vmatpush1.msra.mxu0 0.0
        %2082 = vmatprep.subr.mxu0 0.0
        %2083 = vmatpush1.msra.mxu0 0.0
        %2084 = vmatprep.subr.mxu0 0.0
        %2085 = vmatpush1.msra.mxu0 0.0
        %2086 = vmatprep.subr.mxu0 0.0
        %2087 = vmatpush1.msra.mxu0 0.0
        %2088 = vmatprep.subr.mxu0 0.0
        %2089 = vmatpush1.msra.mxu0 0.0
        %2090 = vmatprep.subr.mxu0 0.0
        %2091 = vmatpush1.msra.mxu0 0.0
        %2092 = vmatprep.subr.mxu0 0.0
        %2093 = vmatpush1.msra.mxu0 0.0
        %2094 = vmatprep.subr.mxu0 0.0
        %2095 = vmatpush1.msra.mxu0 0.0
        %2096 = vmatprep.subr.mxu0 0.0
        %2097 = vmatpush1.msra.mxu0 0.0
        %2098 = vmatprep.subr.mxu0 0.0
        %2099 = vmatpush1.msra.mxu0 0.0
        %2100 = vmatprep.mubr.f32.mxu0 0.0
        %2101 = vmatmul.mubr.f32.gmra.mrb[0].mxu0 %v2034
        %v2102 = vpop.f32.mrb[0].mxu0
        %v2103 = vadd.f32 %v2030, %v2102
        %v2104 = vpop.f32.mrb[0].mxu0
        %2105 = vdwg.mxu0
        %v2106 = vadd.f32 %v2103, %v594
        %v2107 = vmax.f32 %v2106, 0.0
        %v2109 = vsel %vm604, %v2107, 0
        %2111 = vmatprep.subr.mxu0 0.0
        %2112 = vmatpush1.msra.mxu0 %v434
        %2113 = vmatprep.subr.mxu0 0.0
        %2114 = vmatpush1.msra.mxu0 %v435
        %2115 = vmatprep.subr.mxu0 0.0
        %2116 = vmatpush1.msra.mxu0 %v436
        %2117 = vmatprep.subr.mxu0 0.0
        %2118 = vmatpush1.msra.mxu0 %v437
        %2119 = vmatprep.subr.mxu0 0.0
        %2120 = vmatpush1.msra.mxu0 0.0
        %2121 = vmatprep.subr.mxu0 0.0
        %2122 = vmatpush1.msra.mxu0 0.0
        %2123 = vmatprep.subr.mxu0 0.0
        %2124 = vmatpush1.msra.mxu0 0.0
        %2125 = vmatprep.subr.mxu0 0.0
        %2126 = vmatpush1.msra.mxu0 0.0
        %2127 = vmatprep.subr.mxu0 0.0
        %2128 = vmatpush1.msra.mxu0 0.0
        %2129 = vmatprep.subr.mxu0 0.0
        %2130 = vmatpush1.msra.mxu0 0.0
        %2131 = vmatprep.subr.mxu0 0.0
        %2132 = vmatpush1.msra.mxu0 0.0
        %2133 = vmatprep.subr.mxu0 0.0
        %2134 = vmatpush1.msra.mxu0 0.0
        %2135 = vmatprep.subr.mxu0 0.0
        %2136 = vmatpush1.msra.mxu0 0.0
        %2137 = vmatprep.subr.mxu0 0.0
        %2138 = vmatpush1.msra.mxu0 0.0
        %2139 = vmatprep.subr.mxu0 0.0
        %2140 = vmatpush1.msra.mxu0 0.0
        %2141 = vmatprep.subr.mxu0 0.0
        %2142 = vmatpush1.msra.mxu0 0.0
        %2143 = vmatprep.subr.mxu0 0.0
        %2144 = vmatpush1.msra.mxu0 0.0
        %2145 = vmatprep.subr.mxu0 0.0
        %2146 = vmatpush1.msra.mxu0 0.0
        %2147 = vmatprep.subr.mxu0 0.0
        %2148 = vmatpush1.msra.mxu0 0.0
        %2149 = vmatprep.subr.mxu0 0.0
        %2150 = vmatpush1.msra.mxu0 0.0
        %2151 = vmatprep.subr.mxu0 0.0
        %2152 = vmatpush1.msra.mxu0 0.0
        %2153 = vmatprep.subr.mxu0 0.0
        %2154 = vmatpush1.msra.mxu0 0.0
        %2155 = vmatprep.subr.mxu0 0.0
        %2156 = vmatpush1.msra.mxu0 0.0
        %2157 = vmatprep.subr.mxu0 0.0
        %2158 = vmatpush1.msra.mxu0 0.0
        %2159 = vmatprep.subr.mxu0 0.0
        %2160 = vmatpush1.msra.mxu0 0.0
        %2161 = vmatprep.subr.mxu0 0.0
        %2162 = vmatpush1.msra.mxu0 0.0
        %2163 = vmatprep.subr.mxu0 0.0
        %2164 = vmatpush1.msra.mxu0 0.0
        %2165 = vmatprep.subr.mxu0 0.0
        %2166 = vmatpush1.msra.mxu0 0.0
        %2167 = vmatprep.subr.mxu0 0.0
        %2168 = vmatpush1.msra.mxu0 0.0
        %2169 = vmatprep.subr.mxu0 0.0
        %2170 = vmatpush1.msra.mxu0 0.0
        %2171 = vmatprep.subr.mxu0 0.0
        %2172 = vmatpush1.msra.mxu0 0.0
        %2173 = vmatprep.subr.mxu0 0.0
        %2174 = vmatpush1.msra.mxu0 0.0
        %2175 = vmatprep.mubr.f32.mxu0 0.0
        %2176 = vmatmul.mubr.f32.gmra.mrb[0].mxu0 %v2109
        %v2177 = vpop.f32.mrb[0].mxu0
        %v2178 = vadd.f32 %v602, %v2177
        %v2179 = vpop.f32.mrb[0].mxu0
        %2180 = vdwg.mxu0
        %v2181 = vpack.c.bf16 %v2178, %v2178
        %s2182 = scalar_lea.vmem %s366, 24 [#allocation4]
        %2183 = vst [vmem:[%s2182] sm:$0xf] %v2181
        %2184 = vst.msk [vmem:[#allocation2] sm:$0xff] %vm443, %v2178
        %2185 = vrot.lane.b32.xlu0 %v1957, 64
        %v2186 = vpop.permute.xlu0 %2185
        %v2188 = vsub.f32 %v2178, %v2186
        %v2189 = vmul.f32 %v2188, %v2188
        %2191 = vrot.lane.b32.xlu0 %v2189, 64
        %v2192 = vpop.permute.xlu0 %2191
        %v2194 = vsel %vm443, %v2192, 0.0
        %2195 = vadd.xlane.f32.xlu0 %v2194
        %v2196 = vpop.xlane.xlu0 %2195
        %v2197 = vmul.f32 %v2196, %v693
        %v2199 = vlaneseq
        %v2200 = vshrl.u32 %v2199, 7
        %v2201 = vsub.s32 %v697, %v2200
        %v2202 = vrot.slane %v2197, %v2201
        %2204 = vst.msk [vmem:[%s398 + $0x6] sm:$0x1] %vm703, %v2202
        %s2205 = scalar_lea.vmem %s388, 28
        %v2206 = vld [vmem:[%s2205] sm:$0xf]
        %v2207 = vunpack.c.l.bf16 %v2206
        %v2208 = vld [vmem:[#allocation2] sm:$0xff]
        %v2209 = vmul.f32 %v2208, %v415
        %v2211 = vsel %vm443, %v2209, 0
        %2213 = vmatprep.subr.mxu0 0.0
        %2214 = vmatpush1.msra.mxu0 %v425
        %2215 = vmatprep.subr.mxu0 0.0
        %2216 = vmatpush1.msra.mxu0 %v426
        %2217 = vmatprep.subr.mxu0 0.0
        %2218 = vmatpush1.msra.mxu0 %v427
        %2219 = vmatprep.subr.mxu0 0.0
        %2220 = vmatpush1.msra.mxu0 %v428
        %2221 = vmatprep.subr.mxu0 0.0
        %2222 = vmatpush1.msra.mxu0 %v429
        %2223 = vmatprep.subr.mxu0 0.0
        %2224 = vmatpush1.msra.mxu0 %v430
        %2225 = vmatprep.subr.mxu0 0.0
        %2226 = vmatpush1.msra.mxu0 %v431
        %2227 = vmatprep.subr.mxu0 0.0
        %2228 = vmatpush1.msra.mxu0 %v432
        %2229 = vmatprep.subr.mxu0 0.0
        %2230 = vmatpush1.msra.mxu0 0.0
        %2231 = vmatprep.subr.mxu0 0.0
        %2232 = vmatpush1.msra.mxu0 0.0
        %2233 = vmatprep.subr.mxu0 0.0
        %2234 = vmatpush1.msra.mxu0 0.0
        %2235 = vmatprep.subr.mxu0 0.0
        %2236 = vmatpush1.msra.mxu0 0.0
        %2237 = vmatprep.subr.mxu0 0.0
        %2238 = vmatpush1.msra.mxu0 0.0
        %2239 = vmatprep.subr.mxu0 0.0
        %2240 = vmatpush1.msra.mxu0 0.0
        %2241 = vmatprep.subr.mxu0 0.0
        %2242 = vmatpush1.msra.mxu0 0.0
        %2243 = vmatprep.subr.mxu0 0.0
        %2244 = vmatpush1.msra.mxu0 0.0
        %2245 = vmatprep.subr.mxu0 0.0
        %2246 = vmatpush1.msra.mxu0 0.0
        %2247 = vmatprep.subr.mxu0 0.0
        %2248 = vmatpush1.msra.mxu0 0.0
        %2249 = vmatprep.subr.mxu0 0.0
        %2250 = vmatpush1.msra.mxu0 0.0
        %2251 = vmatprep.subr.mxu0 0.0
        %2252 = vmatpush1.msra.mxu0 0.0
        %2253 = vmatprep.subr.mxu0 0.0
        %2254 = vmatpush1.msra.mxu0 0.0
        %2255 = vmatprep.subr.mxu0 0.0
        %2256 = vmatpush1.msra.mxu0 0.0
        %2257 = vmatprep.subr.mxu0 0.0
        %2258 = vmatpush1.msra.mxu0 0.0
        %2259 = vmatprep.subr.mxu0 0.0
        %2260 = vmatpush1.msra.mxu0 0.0
        %2261 = vmatprep.subr.mxu0 0.0
        %2262 = vmatpush1.msra.mxu0 0.0
        %2263 = vmatprep.subr.mxu0 0.0
        %2264 = vmatpush1.msra.mxu0 0.0
        %2265 = vmatprep.subr.mxu0 0.0
        %2266 = vmatpush1.msra.mxu0 0.0
        %2267 = vmatprep.subr.mxu0 0.0
        %2268 = vmatpush1.msra.mxu0 0.0
        %2269 = vmatprep.subr.mxu0 0.0
        %2270 = vmatpush1.msra.mxu0 0.0
        %2271 = vmatprep.subr.mxu0 0.0
        %2272 = vmatpush1.msra.mxu0 0.0
        %2273 = vmatprep.subr.mxu0 0.0
        %2274 = vmatpush1.msra.mxu0 0.0
        %2275 = vmatprep.subr.mxu0 0.0
        %2276 = vmatpush1.msra.mxu0 0.0
        %2277 = vmatprep.mubr.f32.mxu0 0.0
        %2278 = vmatmul.mubr.f32.gmra.mrb[0].mxu0 %v2211
        %v2279 = vpop.f32.mrb[0].mxu0
        %v2280 = vadd.f32 0.0, %v2279
        %v2281 = vpop.f32.mrb[0].mxu0
        %2282 = vdwg.mxu0
        %v2284 = vsel %vm443, %v2207, 0
        %2286 = vmatprep.subr.mxu0 0.0
        %2287 = vmatpush1.msra.mxu0 %v417
        %2288 = vmatprep.subr.mxu0 0.0
        %2289 = vmatpush1.msra.mxu0 %v418
        %2290 = vmatprep.subr.mxu0 0.0
        %2291 = vmatpush1.msra.mxu0 %v419
        %2292 = vmatprep.subr.mxu0 0.0
        %2293 = vmatpush1.msra.mxu0 %v420
        %2294 = vmatprep.subr.mxu0 0.0
        %2295 = vmatpush1.msra.mxu0 %v421
        %2296 = vmatprep.subr.mxu0 0.0
        %2297 = vmatpush1.msra.mxu0 %v422
        %2298 = vmatprep.subr.mxu0 0.0
        %2299 = vmatpush1.msra.mxu0 %v423
        %2300 = vmatprep.subr.mxu0 0.0
        %2301 = vmatpush1.msra.mxu0 %v424
        %2302 = vmatprep.subr.mxu0 0.0
        %2303 = vmatpush1.msra.mxu0 0.0
        %2304 = vmatprep.subr.mxu0 0.0
        %2305 = vmatpush1.msra.mxu0 0.0
        %2306 = vmatprep.subr.mxu0 0.0
        %2307 = vmatpush1.msra.mxu0 0.0
        %2308 = vmatprep.subr.mxu0 0.0
        %2309 = vmatpush1.msra.mxu0 0.0
        %2310 = vmatprep.subr.mxu0 0.0
        %2311 = vmatpush1.msra.mxu0 0.0
        %2312 = vmatprep.subr.mxu0 0.0
        %2313 = vmatpush1.msra.mxu0 0.0
        %2314 = vmatprep.subr.mxu0 0.0
        %2315 = vmatpush1.msra.mxu0 0.0
        %2316 = vmatprep.subr.mxu0 0.0
        %2317 = vmatpush1.msra.mxu0 0.0
        %2318 = vmatprep.subr.mxu0 0.0
        %2319 = vmatpush1.msra.mxu0 0.0
        %2320 = vmatprep.subr.mxu0 0.0
        %2321 = vmatpush1.msra.mxu0 0.0
        %2322 = vmatprep.subr.mxu0 0.0
        %2323 = vmatpush1.msra.mxu0 0.0
        %2324 = vmatprep.subr.mxu0 0.0
        %2325 = vmatpush1.msra.mxu0 0.0
        %2326 = vmatprep.subr.mxu0 0.0
        %2327 = vmatpush1.msra.mxu0 0.0
        %2328 = vmatprep.subr.mxu0 0.0
        %2329 = vmatpush1.msra.mxu0 0.0
        %2330 = vmatprep.subr.mxu0 0.0
        %2331 = vmatpush1.msra.mxu0 0.0
        %2332 = vmatprep.subr.mxu0 0.0
        %2333 = vmatpush1.msra.mxu0 0.0
        %2334 = vmatprep.subr.mxu0 0.0
        %2335 = vmatpush1.msra.mxu0 0.0
        %2336 = vmatprep.subr.mxu0 0.0
        %2337 = vmatpush1.msra.mxu0 0.0
        %2338 = vmatprep.subr.mxu0 0.0
        %2339 = vmatpush1.msra.mxu0 0.0
        %2340 = vmatprep.subr.mxu0 0.0
        %2341 = vmatpush1.msra.mxu0 0.0
        %2342 = vmatprep.subr.mxu0 0.0
        %2343 = vmatpush1.msra.mxu0 0.0
        %2344 = vmatprep.subr.mxu0 0.0
        %2345 = vmatpush1.msra.mxu0 0.0
        %2346 = vmatprep.subr.mxu0 0.0
        %2347 = vmatpush1.msra.mxu0 0.0
        %2348 = vmatprep.subr.mxu0 0.0
        %2349 = vmatpush1.msra.mxu0 0.0
        %2350 = vmatprep.mubr.f32.mxu0 0.0
        %2351 = vmatmul.mubr.f32.gmra.mrb[0].mxu0 %v2284
        %v2352 = vpop.f32.mrb[0].mxu0
        %v2353 = vadd.f32 %v2280, %v2352
        %v2354 = vpop.f32.mrb[0].mxu0
        %2355 = vdwg.mxu0
        %v2356 = vadd.f32 %v2353, %v594
        %v2357 = vmax.f32 %v2356, 0.0
        %v2359 = vsel %vm604, %v2357, 0
        %2361 = vmatprep.subr.mxu0 0.0
        %2362 = vmatpush1.msra.mxu0 %v434
        %2363 = vmatprep.subr.mxu0 0.0
        %2364 = vmatpush1.msra.mxu0 %v435
        %2365 = vmatprep.subr.mxu0 0.0
        %2366 = vmatpush1.msra.mxu0 %v436
        %2367 = vmatprep.subr.mxu0 0.0
        %2368 = vmatpush1.msra.mxu0 %v437
        %2369 = vmatprep.subr.mxu0 0.0
        %2370 = vmatpush1.msra.mxu0 0.0
        %2371 = vmatprep.subr.mxu0 0.0
        %2372 = vmatpush1.msra.mxu0 0.0
        %2373 = vmatprep.subr.mxu0 0.0
        %2374 = vmatpush1.msra.mxu0 0.0
        %2375 = vmatprep.subr.mxu0 0.0
        %2376 = vmatpush1.msra.mxu0 0.0
        %2377 = vmatprep.subr.mxu0 0.0
        %2378 = vmatpush1.msra.mxu0 0.0
        %2379 = vmatprep.subr.mxu0 0.0
        %2380 = vmatpush1.msra.mxu0 0.0
        %2381 = vmatprep.subr.mxu0 0.0
        %2382 = vmatpush1.msra.mxu0 0.0
        %2383 = vmatprep.subr.mxu0 0.0
        %2384 = vmatpush1.msra.mxu0 0.0
        %2385 = vmatprep.subr.mxu0 0.0
        %2386 = vmatpush1.msra.mxu0 0.0
        %2387 = vmatprep.subr.mxu0 0.0
        %2388 = vmatpush1.msra.mxu0 0.0
        %2389 = vmatprep.subr.mxu0 0.0
        %2390 = vmatpush1.msra.mxu0 0.0
        %2391 = vmatprep.subr.mxu0 0.0
        %2392 = vmatpush1.msra.mxu0 0.0
        %2393 = vmatprep.subr.mxu0 0.0
        %2394 = vmatpush1.msra.mxu0 0.0
        %2395 = vmatprep.subr.mxu0 0.0
        %2396 = vmatpush1.msra.mxu0 0.0
        %2397 = vmatprep.subr.mxu0 0.0
        %2398 = vmatpush1.msra.mxu0 0.0
        %2399 = vmatprep.subr.mxu0 0.0
        %2400 = vmatpush1.msra.mxu0 0.0
        %2401 = vmatprep.subr.mxu0 0.0
        %2402 = vmatpush1.msra.mxu0 0.0
        %2403 = vmatprep.subr.mxu0 0.0
        %2404 = vmatpush1.msra.mxu0 0.0
        %2405 = vmatprep.subr.mxu0 0.0
        %2406 = vmatpush1.msra.mxu0 0.0
        %2407 = vmatprep.subr.mxu0 0.0
        %2408 = vmatpush1.msra.mxu0 0.0
        %2409 = vmatprep.subr.mxu0 0.0
        %2410 = vmatpush1.msra.mxu0 0.0
        %2411 = vmatprep.subr.mxu0 0.0
        %2412 = vmatpush1.msra.mxu0 0.0
        %2413 = vmatprep.subr.mxu0 0.0
        %2414 = vmatpush1.msra.mxu0 0.0
        %2415 = vmatprep.subr.mxu0 0.0
        %2416 = vmatpush1.msra.mxu0 0.0
        %2417 = vmatprep.subr.mxu0 0.0
        %2418 = vmatpush1.msra.mxu0 0.0
        %2419 = vmatprep.subr.mxu0 0.0
        %2420 = vmatpush1.msra.mxu0 0.0
        %2421 = vmatprep.subr.mxu0 0.0
        %2422 = vmatpush1.msra.mxu0 0.0
        %2423 = vmatprep.subr.mxu0 0.0
        %2424 = vmatpush1.msra.mxu0 0.0
        %2425 = vmatprep.mubr.f32.mxu0 0.0
        %2426 = vmatmul.mubr.f32.gmra.mrb[0].mxu0 %v2359
        %v2427 = vpop.f32.mrb[0].mxu0
        %v2428 = vadd.f32 %v602, %v2427
        %v2429 = vpop.f32.mrb[0].mxu0
        %2430 = vdwg.mxu0
        %v2431 = vpack.c.bf16 %v2428, %v2428
        %s2432 = scalar_lea.vmem %s366, 28 [#allocation4]
        %2433 = vst [vmem:[%s2432] sm:$0xf] %v2431
        %2434 = vst.msk [vmem:[#allocation2] sm:$0xff] %vm443, %v2428
        %2435 = vrot.lane.b32.xlu0 %v2207, 64
        %v2436 = vpop.permute.xlu0 %2435
        %v2438 = vsub.f32 %v2428, %v2436
        %v2439 = vmul.f32 %v2438, %v2438
        %2441 = vrot.lane.b32.xlu0 %v2439, 64
        %v2442 = vpop.permute.xlu0 %2441
        %v2444 = vsel %vm443, %v2442, 0.0
        %2445 = vadd.xlane.f32.xlu0 %v2444
        %v2446 = vpop.xlane.xlu0 %2445
        %v2447 = vmul.f32 %v2446, %v693
        %v2449 = vlaneseq
        %v2450 = vshrl.u32 %v2449, 7
        %v2451 = vsub.s32 %v697, %v2450
        %v2452 = vrot.slane %v2447, %v2451
        %2454 = vst.msk [vmem:[%s398 + $0x7] sm:$0x1] %vm703, %v2452
        %s2455 = scalar_lea.vmem %s388, 32
        %v2456 = vld [vmem:[%s2455] sm:$0xf]
        %v2457 = vunpack.c.l.bf16 %v2456
        %v2458 = vld [vmem:[#allocation2] sm:$0xff]
        %v2459 = vmul.f32 %v2458, %v415
        %v2461 = vsel %vm443, %v2459, 0
        %2463 = vmatprep.subr.mxu0 0.0
        %2464 = vmatpush1.msra.mxu0 %v425
        %2465 = vmatprep.subr.mxu0 0.0
        %2466 = vmatpush1.msra.mxu0 %v426
        %2467 = vmatprep.subr.mxu0 0.0
        %2468 = vmatpush1.msra.mxu0 %v427
        %2469 = vmatprep.subr.mxu0 0.0
        %2470 = vmatpush1.msra.mxu0 %v428
        %2471 = vmatprep.subr.mxu0 0.0
        %2472 = vmatpush1.msra.mxu0 %v429
        %2473 = vmatprep.subr.mxu0 0.0
        %2474 = vmatpush1.msra.mxu0 %v430
        %2475 = vmatprep.subr.mxu0 0.0
        %2476 = vmatpush1.msra.mxu0 %v431
        %2477 = vmatprep.subr.mxu0 0.0
        %2478 = vmatpush1.msra.mxu0 %v432
        %2479 = vmatprep.subr.mxu0 0.0
        %2480 = vmatpush1.msra.mxu0 0.0
        %2481 = vmatprep.subr.mxu0 0.0
        %2482 = vmatpush1.msra.mxu0 0.0
        %2483 = vmatprep.subr.mxu0 0.0
        %2484 = vmatpush1.msra.mxu0 0.0
        %2485 = vmatprep.subr.mxu0 0.0
        %2486 = vmatpush1.msra.mxu0 0.0
        %2487 = vmatprep.subr.mxu0 0.0
        %2488 = vmatpush1.msra.mxu0 0.0
        %2489 = vmatprep.subr.mxu0 0.0
        %2490 = vmatpush1.msra.mxu0 0.0
        %2491 = vmatprep.subr.mxu0 0.0
        %2492 = vmatpush1.msra.mxu0 0.0
        %2493 = vmatprep.subr.mxu0 0.0
        %2494 = vmatpush1.msra.mxu0 0.0
        %2495 = vmatprep.subr.mxu0 0.0
        %2496 = vmatpush1.msra.mxu0 0.0
        %2497 = vmatprep.subr.mxu0 0.0
        %2498 = vmatpush1.msra.mxu0 0.0
        %2499 = vmatprep.subr.mxu0 0.0
        %2500 = vmatpush1.msra.mxu0 0.0
        %2501 = vmatprep.subr.mxu0 0.0
        %2502 = vmatpush1.msra.mxu0 0.0
        %2503 = vmatprep.subr.mxu0 0.0
        %2504 = vmatpush1.msra.mxu0 0.0
        %2505 = vmatprep.subr.mxu0 0.0
        %2506 = vmatpush1.msra.mxu0 0.0
        %2507 = vmatprep.subr.mxu0 0.0
        %2508 = vmatpush1.msra.mxu0 0.0
        %2509 = vmatprep.subr.mxu0 0.0
        %2510 = vmatpush1.msra.mxu0 0.0
        %2511 = vmatprep.subr.mxu0 0.0
        %2512 = vmatpush1.msra.mxu0 0.0
        %2513 = vmatprep.subr.mxu0 0.0
        %2514 = vmatpush1.msra.mxu0 0.0
        %2515 = vmatprep.subr.mxu0 0.0
        %2516 = vmatpush1.msra.mxu0 0.0
        %2517 = vmatprep.subr.mxu0 0.0
        %2518 = vmatpush1.msra.mxu0 0.0
        %2519 = vmatprep.subr.mxu0 0.0
        %2520 = vmatpush1.msra.mxu0 0.0
        %2521 = vmatprep.subr.mxu0 0.0
        %2522 = vmatpush1.msra.mxu0 0.0
        %2523 = vmatprep.subr.mxu0 0.0
        %2524 = vmatpush1.msra.mxu0 0.0
        %2525 = vmatprep.subr.mxu0 0.0
        %2526 = vmatpush1.msra.mxu0 0.0
        %2527 = vmatprep.mubr.f32.mxu0 0.0
        %2528 = vmatmul.mubr.f32.gmra.mrb[0].mxu0 %v2461
        %v2529 = vpop.f32.mrb[0].mxu0
        %v2530 = vadd.f32 0.0, %v2529
        %v2531 = vpop.f32.mrb[0].mxu0
        %2532 = vdwg.mxu0
        %v2534 = vsel %vm443, %v2457, 0
        %2536 = vmatprep.subr.mxu0 0.0
        %2537 = vmatpush1.msra.mxu0 %v417
        %2538 = vmatprep.subr.mxu0 0.0
        %2539 = vmatpush1.msra.mxu0 %v418
        %2540 = vmatprep.subr.mxu0 0.0
        %2541 = vmatpush1.msra.mxu0 %v419
        %2542 = vmatprep.subr.mxu0 0.0
        %2543 = vmatpush1.msra.mxu0 %v420
        %2544 = vmatprep.subr.mxu0 0.0
        %2545 = vmatpush1.msra.mxu0 %v421
        %2546 = vmatprep.subr.mxu0 0.0
        %2547 = vmatpush1.msra.mxu0 %v422
        %2548 = vmatprep.subr.mxu0 0.0
        %2549 = vmatpush1.msra.mxu0 %v423
        %2550 = vmatprep.subr.mxu0 0.0
        %2551 = vmatpush1.msra.mxu0 %v424
        %2552 = vmatprep.subr.mxu0 0.0
        %2553 = vmatpush1.msra.mxu0 0.0
        %2554 = vmatprep.subr.mxu0 0.0
        %2555 = vmatpush1.msra.mxu0 0.0
        %2556 = vmatprep.subr.mxu0 0.0
        %2557 = vmatpush1.msra.mxu0 0.0
        %2558 = vmatprep.subr.mxu0 0.0
        %2559 = vmatpush1.msra.mxu0 0.0
        %2560 = vmatprep.subr.mxu0 0.0
        %2561 = vmatpush1.msra.mxu0 0.0
        %2562 = vmatprep.subr.mxu0 0.0
        %2563 = vmatpush1.msra.mxu0 0.0
        %2564 = vmatprep.subr.mxu0 0.0
        %2565 = vmatpush1.msra.mxu0 0.0
        %2566 = vmatprep.subr.mxu0 0.0
        %2567 = vmatpush1.msra.mxu0 0.0
        %2568 = vmatprep.subr.mxu0 0.0
        %2569 = vmatpush1.msra.mxu0 0.0
        %2570 = vmatprep.subr.mxu0 0.0
        %2571 = vmatpush1.msra.mxu0 0.0
        %2572 = vmatprep.subr.mxu0 0.0
        %2573 = vmatpush1.msra.mxu0 0.0
        %2574 = vmatprep.subr.mxu0 0.0
        %2575 = vmatpush1.msra.mxu0 0.0
        %2576 = vmatprep.subr.mxu0 0.0
        %2577 = vmatpush1.msra.mxu0 0.0
        %2578 = vmatprep.subr.mxu0 0.0
        %2579 = vmatpush1.msra.mxu0 0.0
        %2580 = vmatprep.subr.mxu0 0.0
        %2581 = vmatpush1.msra.mxu0 0.0
        %2582 = vmatprep.subr.mxu0 0.0
        %2583 = vmatpush1.msra.mxu0 0.0
        %2584 = vmatprep.subr.mxu0 0.0
        %2585 = vmatpush1.msra.mxu0 0.0
        %2586 = vmatprep.subr.mxu0 0.0
        %2587 = vmatpush1.msra.mxu0 0.0
        %2588 = vmatprep.subr.mxu0 0.0
        %2589 = vmatpush1.msra.mxu0 0.0
        %2590 = vmatprep.subr.mxu0 0.0
        %2591 = vmatpush1.msra.mxu0 0.0
        %2592 = vmatprep.subr.mxu0 0.0
        %2593 = vmatpush1.msra.mxu0 0.0
        %2594 = vmatprep.subr.mxu0 0.0
        %2595 = vmatpush1.msra.mxu0 0.0
        %2596 = vmatprep.subr.mxu0 0.0
        %2597 = vmatpush1.msra.mxu0 0.0
        %2598 = vmatprep.subr.mxu0 0.0
        %2599 = vmatpush1.msra.mxu0 0.0
        %2600 = vmatprep.mubr.f32.mxu0 0.0
        %2601 = vmatmul.mubr.f32.gmra.mrb[0].mxu0 %v2534
        %v2602 = vpop.f32.mrb[0].mxu0
        %v2603 = vadd.f32 %v2530, %v2602
        %v2604 = vpop.f32.mrb[0].mxu0
        %2605 = vdwg.mxu0
        %v2606 = vadd.f32 %v2603, %v594
        %v2607 = vmax.f32 %v2606, 0.0
        %v2609 = vsel %vm604, %v2607, 0
        %2611 = vmatprep.subr.mxu0 0.0
        %2612 = vmatpush1.msra.mxu0 %v434
        %2613 = vmatprep.subr.mxu0 0.0
        %2614 = vmatpush1.msra.mxu0 %v435
        %2615 = vmatprep.subr.mxu0 0.0
        %2616 = vmatpush1.msra.mxu0 %v436
        %2617 = vmatprep.subr.mxu0 0.0
        %2618 = vmatpush1.msra.mxu0 %v437
        %2619 = vmatprep.subr.mxu0 0.0
        %2620 = vmatpush1.msra.mxu0 0.0
        %2621 = vmatprep.subr.mxu0 0.0
        %2622 = vmatpush1.msra.mxu0 0.0
        %2623 = vmatprep.subr.mxu0 0.0
        %2624 = vmatpush1.msra.mxu0 0.0
        %2625 = vmatprep.subr.mxu0 0.0
        %2626 = vmatpush1.msra.mxu0 0.0
        %2627 = vmatprep.subr.mxu0 0.0
        %2628 = vmatpush1.msra.mxu0 0.0
        %2629 = vmatprep.subr.mxu0 0.0
        %2630 = vmatpush1.msra.mxu0 0.0
        %2631 = vmatprep.subr.mxu0 0.0
        %2632 = vmatpush1.msra.mxu0 0.0
        %2633 = vmatprep.subr.mxu0 0.0
        %2634 = vmatpush1.msra.mxu0 0.0
        %2635 = vmatprep.subr.mxu0 0.0
        %2636 = vmatpush1.msra.mxu0 0.0
        %2637 = vmatprep.subr.mxu0 0.0
        %2638 = vmatpush1.msra.mxu0 0.0
        %2639 = vmatprep.subr.mxu0 0.0
        %2640 = vmatpush1.msra.mxu0 0.0
        %2641 = vmatprep.subr.mxu0 0.0
        %2642 = vmatpush1.msra.mxu0 0.0
        %2643 = vmatprep.subr.mxu0 0.0
        %2644 = vmatpush1.msra.mxu0 0.0
        %2645 = vmatprep.subr.mxu0 0.0
        %2646 = vmatpush1.msra.mxu0 0.0
        %2647 = vmatprep.subr.mxu0 0.0
        %2648 = vmatpush1.msra.mxu0 0.0
        %2649 = vmatprep.subr.mxu0 0.0
        %2650 = vmatpush1.msra.mxu0 0.0
        %2651 = vmatprep.subr.mxu0 0.0
        %2652 = vmatpush1.msra.mxu0 0.0
        %2653 = vmatprep.subr.mxu0 0.0
        %2654 = vmatpush1.msra.mxu0 0.0
        %2655 = vmatprep.subr.mxu0 0.0
        %2656 = vmatpush1.msra.mxu0 0.0
        %2657 = vmatprep.subr.mxu0 0.0
        %2658 = vmatpush1.msra.mxu0 0.0
        %2659 = vmatprep.subr.mxu0 0.0
        %2660 = vmatpush1.msra.mxu0 0.0
        %2661 = vmatprep.subr.mxu0 0.0
        %2662 = vmatpush1.msra.mxu0 0.0
        %2663 = vmatprep.subr.mxu0 0.0
        %2664 = vmatpush1.msra.mxu0 0.0
        %2665 = vmatprep.subr.mxu0 0.0
        %2666 = vmatpush1.msra.mxu0 0.0
        %2667 = vmatprep.subr.mxu0 0.0
        %2668 = vmatpush1.msra.mxu0 0.0
        %2669 = vmatprep.subr.mxu0 0.0
        %2670 = vmatpush1.msra.mxu0 0.0
        %2671 = vmatprep.subr.mxu0 0.0
        %2672 = vmatpush1.msra.mxu0 0.0
        %2673 = vmatprep.subr.mxu0 0.0
        %2674 = vmatpush1.msra.mxu0 0.0
        %2675 = vmatprep.mubr.f32.mxu0 0.0
        %2676 = vmatmul.mubr.f32.gmra.mrb[0].mxu0 %v2609
        %v2677 = vpop.f32.mrb[0].mxu0
        %v2678 = vadd.f32 %v602, %v2677
        %v2679 = vpop.f32.mrb[0].mxu0
        %2680 = vdwg.mxu0
        %v2681 = vpack.c.bf16 %v2678, %v2678
        %s2682 = scalar_lea.vmem %s366, 32 [#allocation4]
        %2683 = vst [vmem:[%s2682] sm:$0xf] %v2681
        %2684 = vst.msk [vmem:[#allocation2] sm:$0xff] %vm443, %v2678
        %2685 = vrot.lane.b32.xlu0 %v2457, 64
        %v2686 = vpop.permute.xlu0 %2685
        %v2688 = vsub.f32 %v2678, %v2686
        %v2689 = vmul.f32 %v2688, %v2688
        %2691 = vrot.lane.b32.xlu0 %v2689, 64
        %v2692 = vpop.permute.xlu0 %2691
        %v2694 = vsel %vm443, %v2692, 0.0
        %2695 = vadd.xlane.f32.xlu0 %v2694
        %v2696 = vpop.xlane.xlu0 %2695
        %v2697 = vmul.f32 %v2696, %v693
        %v2699 = vlaneseq
        %v2700 = vshrl.u32 %v2699, 7
        %v2701 = vsub.s32 %v697, %v2700
        %v2702 = vrot.slane %v2697, %v2701
        %2704 = vst.msk [vmem:[%s398 + $0x8] sm:$0x1] %vm703, %v2702
        %s2705 = scalar_lea.vmem %s388, 36
        %v2706 = vld [vmem:[%s2705] sm:$0xf]
        %v2707 = vunpack.c.l.bf16 %v2706
        %v2708 = vld [vmem:[#allocation2] sm:$0xff]
        %v2709 = vmul.f32 %v2708, %v415
        %v2711 = vsel %vm443, %v2709, 0
        %2713 = vmatprep.subr.mxu0 0.0
        %2714 = vmatpush1.msra.mxu0 %v425
        %2715 = vmatprep.subr.mxu0 0.0
        %2716 = vmatpush1.msra.mxu0 %v426
        %2717 = vmatprep.subr.mxu0 0.0
        %2718 = vmatpush1.msra.mxu0 %v427
        %2719 = vmatprep.subr.mxu0 0.0
        %2720 = vmatpush1.msra.mxu0 %v428
        %2721 = vmatprep.subr.mxu0 0.0
        %2722 = vmatpush1.msra.mxu0 %v429
        %2723 = vmatprep.subr.mxu0 0.0
        %2724 = vmatpush1.msra.mxu0 %v430
        %2725 = vmatprep.subr.mxu0 0.0
        %2726 = vmatpush1.msra.mxu0 %v431
        %2727 = vmatprep.subr.mxu0 0.0
        %2728 = vmatpush1.msra.mxu0 %v432
        %2729 = vmatprep.subr.mxu0 0.0
        %2730 = vmatpush1.msra.mxu0 0.0
        %2731 = vmatprep.subr.mxu0 0.0
        %2732 = vmatpush1.msra.mxu0 0.0
        %2733 = vmatprep.subr.mxu0 0.0
        %2734 = vmatpush1.msra.mxu0 0.0
        %2735 = vmatprep.subr.mxu0 0.0
        %2736 = vmatpush1.msra.mxu0 0.0
        %2737 = vmatprep.subr.mxu0 0.0
        %2738 = vmatpush1.msra.mxu0 0.0
        %2739 = vmatprep.subr.mxu0 0.0
        %2740 = vmatpush1.msra.mxu0 0.0
        %2741 = vmatprep.subr.mxu0 0.0
        %2742 = vmatpush1.msra.mxu0 0.0
        %2743 = vmatprep.subr.mxu0 0.0
        %2744 = vmatpush1.msra.mxu0 0.0
        %2745 = vmatprep.subr.mxu0 0.0
        %2746 = vmatpush1.msra.mxu0 0.0
        %2747 = vmatprep.subr.mxu0 0.0
        %2748 = vmatpush1.msra.mxu0 0.0
        %2749 = vmatprep.subr.mxu0 0.0
        %2750 = vmatpush1.msra.mxu0 0.0
        %2751 = vmatprep.subr.mxu0 0.0
        %2752 = vmatpush1.msra.mxu0 0.0
        %2753 = vmatprep.subr.mxu0 0.0
        %2754 = vmatpush1.msra.mxu0 0.0
        %2755 = vmatprep.subr.mxu0 0.0
        %2756 = vmatpush1.msra.mxu0 0.0
        %2757 = vmatprep.subr.mxu0 0.0
        %2758 = vmatpush1.msra.mxu0 0.0
        %2759 = vmatprep.subr.mxu0 0.0
        %2760 = vmatpush1.msra.mxu0 0.0
        %2761 = vmatprep.subr.mxu0 0.0
        %2762 = vmatpush1.msra.mxu0 0.0
        %2763 = vmatprep.subr.mxu0 0.0
        %2764 = vmatpush1.msra.mxu0 0.0
        %2765 = vmatprep.subr.mxu0 0.0
        %2766 = vmatpush1.msra.mxu0 0.0
        %2767 = vmatprep.subr.mxu0 0.0
        %2768 = vmatpush1.msra.mxu0 0.0
        %2769 = vmatprep.subr.mxu0 0.0
        %2770 = vmatpush1.msra.mxu0 0.0
        %2771 = vmatprep.subr.mxu0 0.0
        %2772 = vmatpush1.msra.mxu0 0.0
        %2773 = vmatprep.subr.mxu0 0.0
        %2774 = vmatpush1.msra.mxu0 0.0
        %2775 = vmatprep.subr.mxu0 0.0
        %2776 = vmatpush1.msra.mxu0 0.0
        %2777 = vmatprep.mubr.f32.mxu0 0.0
        %2778 = vmatmul.mubr.f32.gmra.mrb[0].mxu0 %v2711
        %v2779 = vpop.f32.mrb[0].mxu0
        %v2780 = vadd.f32 0.0, %v2779
        %v2781 = vpop.f32.mrb[0].mxu0
        %2782 = vdwg.mxu0
        %v2784 = vsel %vm443, %v2707, 0
        %2786 = vmatprep.subr.mxu0 0.0
        %2787 = vmatpush1.msra.mxu0 %v417
        %2788 = vmatprep.subr.mxu0 0.0
        %2789 = vmatpush1.msra.mxu0 %v418
        %2790 = vmatprep.subr.mxu0 0.0
        %2791 = vmatpush1.msra.mxu0 %v419
        %2792 = vmatprep.subr.mxu0 0.0
        %2793 = vmatpush1.msra.mxu0 %v420
        %2794 = vmatprep.subr.mxu0 0.0
        %2795 = vmatpush1.msra.mxu0 %v421
        %2796 = vmatprep.subr.mxu0 0.0
        %2797 = vmatpush1.msra.mxu0 %v422
        %2798 = vmatprep.subr.mxu0 0.0
        %2799 = vmatpush1.msra.mxu0 %v423
        %2800 = vmatprep.subr.mxu0 0.0
        %2801 = vmatpush1.msra.mxu0 %v424
        %2802 = vmatprep.subr.mxu0 0.0
        %2803 = vmatpush1.msra.mxu0 0.0
        %2804 = vmatprep.subr.mxu0 0.0
        %2805 = vmatpush1.msra.mxu0 0.0
        %2806 = vmatprep.subr.mxu0 0.0
        %2807 = vmatpush1.msra.mxu0 0.0
        %2808 = vmatprep.subr.mxu0 0.0
        %2809 = vmatpush1.msra.mxu0 0.0
        %2810 = vmatprep.subr.mxu0 0.0
        %2811 = vmatpush1.msra.mxu0 0.0
        %2812 = vmatprep.subr.mxu0 0.0
        %2813 = vmatpush1.msra.mxu0 0.0
        %2814 = vmatprep.subr.mxu0 0.0
        %2815 = vmatpush1.msra.mxu0 0.0
        %2816 = vmatprep.subr.mxu0 0.0
        %2817 = vmatpush1.msra.mxu0 0.0
        %2818 = vmatprep.subr.mxu0 0.0
        %2819 = vmatpush1.msra.mxu0 0.0
        %2820 = vmatprep.subr.mxu0 0.0
        %2821 = vmatpush1.msra.mxu0 0.0
        %2822 = vmatprep.subr.mxu0 0.0
        %2823 = vmatpush1.msra.mxu0 0.0
        %2824 = vmatprep.subr.mxu0 0.0
        %2825 = vmatpush1.msra.mxu0 0.0
        %2826 = vmatprep.subr.mxu0 0.0
        %2827 = vmatpush1.msra.mxu0 0.0
        %2828 = vmatprep.subr.mxu0 0.0
        %2829 = vmatpush1.msra.mxu0 0.0
        %2830 = vmatprep.subr.mxu0 0.0
        %2831 = vmatpush1.msra.mxu0 0.0
        %2832 = vmatprep.subr.mxu0 0.0
        %2833 = vmatpush1.msra.mxu0 0.0
        %2834 = vmatprep.subr.mxu0 0.0
        %2835 = vmatpush1.msra.mxu0 0.0
        %2836 = vmatprep.subr.mxu0 0.0
        %2837 = vmatpush1.msra.mxu0 0.0
        %2838 = vmatprep.subr.mxu0 0.0
        %2839 = vmatpush1.msra.mxu0 0.0
        %2840 = vmatprep.subr.mxu0 0.0
        %2841 = vmatpush1.msra.mxu0 0.0
        %2842 = vmatprep.subr.mxu0 0.0
        %2843 = vmatpush1.msra.mxu0 0.0
        %2844 = vmatprep.subr.mxu0 0.0
        %2845 = vmatpush1.msra.mxu0 0.0
        %2846 = vmatprep.subr.mxu0 0.0
        %2847 = vmatpush1.msra.mxu0 0.0
        %2848 = vmatprep.subr.mxu0 0.0
        %2849 = vmatpush1.msra.mxu0 0.0
        %2850 = vmatprep.mubr.f32.mxu0 0.0
        %2851 = vmatmul.mubr.f32.gmra.mrb[0].mxu0 %v2784
        %v2852 = vpop.f32.mrb[0].mxu0
        %v2853 = vadd.f32 %v2780, %v2852
        %v2854 = vpop.f32.mrb[0].mxu0
        %2855 = vdwg.mxu0
        %v2856 = vadd.f32 %v2853, %v594
        %v2857 = vmax.f32 %v2856, 0.0
        %v2859 = vsel %vm604, %v2857, 0
        %2861 = vmatprep.subr.mxu0 0.0
        %2862 = vmatpush1.msra.mxu0 %v434
        %2863 = vmatprep.subr.mxu0 0.0
        %2864 = vmatpush1.msra.mxu0 %v435
        %2865 = vmatprep.subr.mxu0 0.0
        %2866 = vmatpush1.msra.mxu0 %v436
        %2867 = vmatprep.subr.mxu0 0.0
        %2868 = vmatpush1.msra.mxu0 %v437
        %2869 = vmatprep.subr.mxu0 0.0
        %2870 = vmatpush1.msra.mxu0 0.0
        %2871 = vmatprep.subr.mxu0 0.0
        %2872 = vmatpush1.msra.mxu0 0.0
        %2873 = vmatprep.subr.mxu0 0.0
        %2874 = vmatpush1.msra.mxu0 0.0
        %2875 = vmatprep.subr.mxu0 0.0
        %2876 = vmatpush1.msra.mxu0 0.0
        %2877 = vmatprep.subr.mxu0 0.0
        %2878 = vmatpush1.msra.mxu0 0.0
        %2879 = vmatprep.subr.mxu0 0.0
        %2880 = vmatpush1.msra.mxu0 0.0
        %2881 = vmatprep.subr.mxu0 0.0
        %2882 = vmatpush1.msra.mxu0 0.0
        %2883 = vmatprep.subr.mxu0 0.0
        %2884 = vmatpush1.msra.mxu0 0.0
        %2885 = vmatprep.subr.mxu0 0.0
        %2886 = vmatpush1.msra.mxu0 0.0
        %2887 = vmatprep.subr.mxu0 0.0
        %2888 = vmatpush1.msra.mxu0 0.0
        %2889 = vmatprep.subr.mxu0 0.0
        %2890 = vmatpush1.msra.mxu0 0.0
        %2891 = vmatprep.subr.mxu0 0.0
        %2892 = vmatpush1.msra.mxu0 0.0
        %2893 = vmatprep.subr.mxu0 0.0
        %2894 = vmatpush1.msra.mxu0 0.0
        %2895 = vmatprep.subr.mxu0 0.0
        %2896 = vmatpush1.msra.mxu0 0.0
        %2897 = vmatprep.subr.mxu0 0.0
        %2898 = vmatpush1.msra.mxu0 0.0
        %2899 = vmatprep.subr.mxu0 0.0
        %2900 = vmatpush1.msra.mxu0 0.0
        %2901 = vmatprep.subr.mxu0 0.0
        %2902 = vmatpush1.msra.mxu0 0.0
        %2903 = vmatprep.subr.mxu0 0.0
        %2904 = vmatpush1.msra.mxu0 0.0
        %2905 = vmatprep.subr.mxu0 0.0
        %2906 = vmatpush1.msra.mxu0 0.0
        %2907 = vmatprep.subr.mxu0 0.0
        %2908 = vmatpush1.msra.mxu0 0.0
        %2909 = vmatprep.subr.mxu0 0.0
        %2910 = vmatpush1.msra.mxu0 0.0
        %2911 = vmatprep.subr.mxu0 0.0
        %2912 = vmatpush1.msra.mxu0 0.0
        %2913 = vmatprep.subr.mxu0 0.0
        %2914 = vmatpush1.msra.mxu0 0.0
        %2915 = vmatprep.subr.mxu0 0.0
        %2916 = vmatpush1.msra.mxu0 0.0
        %2917 = vmatprep.subr.mxu0 0.0
        %2918 = vmatpush1.msra.mxu0 0.0
        %2919 = vmatprep.subr.mxu0 0.0
        %2920 = vmatpush1.msra.mxu0 0.0
        %2921 = vmatprep.subr.mxu0 0.0
        %2922 = vmatpush1.msra.mxu0 0.0
        %2923 = vmatprep.subr.mxu0 0.0
        %2924 = vmatpush1.msra.mxu0 0.0
        %2925 = vmatprep.mubr.f32.mxu0 0.0
        %2926 = vmatmul.mubr.f32.gmra.mrb[0].mxu0 %v2859
        %v2927 = vpop.f32.mrb[0].mxu0
        %v2928 = vadd.f32 %v602, %v2927
        %v2929 = vpop.f32.mrb[0].mxu0
        %2930 = vdwg.mxu0
        %v2931 = vpack.c.bf16 %v2928, %v2928
        %s2932 = scalar_lea.vmem %s366, 36 [#allocation4]
        %2933 = vst [vmem:[%s2932] sm:$0xf] %v2931
        %2934 = vst.msk [vmem:[#allocation2] sm:$0xff] %vm443, %v2928
        %2935 = vrot.lane.b32.xlu0 %v2707, 64
        %v2936 = vpop.permute.xlu0 %2935
        %v2938 = vsub.f32 %v2928, %v2936
        %v2939 = vmul.f32 %v2938, %v2938
        %2941 = vrot.lane.b32.xlu0 %v2939, 64
        %v2942 = vpop.permute.xlu0 %2941
        %v2944 = vsel %vm443, %v2942, 0.0
        %2945 = vadd.xlane.f32.xlu0 %v2944
        %v2946 = vpop.xlane.xlu0 %2945
        %v2947 = vmul.f32 %v2946, %v693
        %v2949 = vlaneseq
        %v2950 = vshrl.u32 %v2949, 7
        %v2951 = vsub.s32 %v697, %v2950
        %v2952 = vrot.slane %v2947, %v2951
        %2954 = vst.msk [vmem:[%s398 + $0x9] sm:$0x1] %vm703, %v2952
        %s2955 = scalar_lea.vmem %s388, 40
        %v2956 = vld [vmem:[%s2955] sm:$0xf]
        %v2957 = vunpack.c.l.bf16 %v2956
        %v2958 = vld [vmem:[#allocation2] sm:$0xff]
        %v2959 = vmul.f32 %v2958, %v415
        %v2961 = vsel %vm443, %v2959, 0
        %2963 = vmatprep.subr.mxu0 0.0
        %2964 = vmatpush1.msra.mxu0 %v425
        %2965 = vmatprep.subr.mxu0 0.0
        %2966 = vmatpush1.msra.mxu0 %v426
        %2967 = vmatprep.subr.mxu0 0.0
        %2968 = vmatpush1.msra.mxu0 %v427
        %2969 = vmatprep.subr.mxu0 0.0
        %2970 = vmatpush1.msra.mxu0 %v428
        %2971 = vmatprep.subr.mxu0 0.0
        %2972 = vmatpush1.msra.mxu0 %v429
        %2973 = vmatprep.subr.mxu0 0.0
        %2974 = vmatpush1.msra.mxu0 %v430
        %2975 = vmatprep.subr.mxu0 0.0
        %2976 = vmatpush1.msra.mxu0 %v431
        %2977 = vmatprep.subr.mxu0 0.0
        %2978 = vmatpush1.msra.mxu0 %v432
        %2979 = vmatprep.subr.mxu0 0.0
        %2980 = vmatpush1.msra.mxu0 0.0
        %2981 = vmatprep.subr.mxu0 0.0
        %2982 = vmatpush1.msra.mxu0 0.0
        %2983 = vmatprep.subr.mxu0 0.0
        %2984 = vmatpush1.msra.mxu0 0.0
        %2985 = vmatprep.subr.mxu0 0.0
        %2986 = vmatpush1.msra.mxu0 0.0
        %2987 = vmatprep.subr.mxu0 0.0
        %2988 = vmatpush1.msra.mxu0 0.0
        %2989 = vmatprep.subr.mxu0 0.0
        %2990 = vmatpush1.msra.mxu0 0.0
        %2991 = vmatprep.subr.mxu0 0.0
        %2992 = vmatpush1.msra.mxu0 0.0
        %2993 = vmatprep.subr.mxu0 0.0
        %2994 = vmatpush1.msra.mxu0 0.0
        %2995 = vmatprep.subr.mxu0 0.0
        %2996 = vmatpush1.msra.mxu0 0.0
        %2997 = vmatprep.subr.mxu0 0.0
        %2998 = vmatpush1.msra.mxu0 0.0
        %2999 = vmatprep.subr.mxu0 0.0
        %3000 = vmatpush1.msra.mxu0 0.0
        %3001 = vmatprep.subr.mxu0 0.0
        %3002 = vmatpush1.msra.mxu0 0.0
        %3003 = vmatprep.subr.mxu0 0.0
        %3004 = vmatpush1.msra.mxu0 0.0
        %3005 = vmatprep.subr.mxu0 0.0
        %3006 = vmatpush1.msra.mxu0 0.0
        %3007 = vmatprep.subr.mxu0 0.0
        %3008 = vmatpush1.msra.mxu0 0.0
        %3009 = vmatprep.subr.mxu0 0.0
        %3010 = vmatpush1.msra.mxu0 0.0
        %3011 = vmatprep.subr.mxu0 0.0
        %3012 = vmatpush1.msra.mxu0 0.0
        %3013 = vmatprep.subr.mxu0 0.0
        %3014 = vmatpush1.msra.mxu0 0.0
        %3015 = vmatprep.subr.mxu0 0.0
        %3016 = vmatpush1.msra.mxu0 0.0
        %3017 = vmatprep.subr.mxu0 0.0
        %3018 = vmatpush1.msra.mxu0 0.0
        %3019 = vmatprep.subr.mxu0 0.0
        %3020 = vmatpush1.msra.mxu0 0.0
        %3021 = vmatprep.subr.mxu0 0.0
        %3022 = vmatpush1.msra.mxu0 0.0
        %3023 = vmatprep.subr.mxu0 0.0
        %3024 = vmatpush1.msra.mxu0 0.0
        %3025 = vmatprep.subr.mxu0 0.0
        %3026 = vmatpush1.msra.mxu0 0.0
        %3027 = vmatprep.mubr.f32.mxu0 0.0
        %3028 = vmatmul.mubr.f32.gmra.mrb[0].mxu0 %v2961
        %v3029 = vpop.f32.mrb[0].mxu0
        %v3030 = vadd.f32 0.0, %v3029
        %v3031 = vpop.f32.mrb[0].mxu0
        %3032 = vdwg.mxu0
        %v3034 = vsel %vm443, %v2957, 0
        %3036 = vmatprep.subr.mxu0 0.0
        %3037 = vmatpush1.msra.mxu0 %v417
        %3038 = vmatprep.subr.mxu0 0.0
        %3039 = vmatpush1.msra.mxu0 %v418
        %3040 = vmatprep.subr.mxu0 0.0
        %3041 = vmatpush1.msra.mxu0 %v419
        %3042 = vmatprep.subr.mxu0 0.0
        %3043 = vmatpush1.msra.mxu0 %v420
        %3044 = vmatprep.subr.mxu0 0.0
        %3045 = vmatpush1.msra.mxu0 %v421
        %3046 = vmatprep.subr.mxu0 0.0
        %3047 = vmatpush1.msra.mxu0 %v422
        %3048 = vmatprep.subr.mxu0 0.0
        %3049 = vmatpush1.msra.mxu0 %v423
        %3050 = vmatprep.subr.mxu0 0.0
        %3051 = vmatpush1.msra.mxu0 %v424
        %3052 = vmatprep.subr.mxu0 0.0
        %3053 = vmatpush1.msra.mxu0 0.0
        %3054 = vmatprep.subr.mxu0 0.0
        %3055 = vmatpush1.msra.mxu0 0.0
        %3056 = vmatprep.subr.mxu0 0.0
        %3057 = vmatpush1.msra.mxu0 0.0
        %3058 = vmatprep.subr.mxu0 0.0
        %3059 = vmatpush1.msra.mxu0 0.0
        %3060 = vmatprep.subr.mxu0 0.0
        %3061 = vmatpush1.msra.mxu0 0.0
        %3062 = vmatprep.subr.mxu0 0.0
        %3063 = vmatpush1.msra.mxu0 0.0
        %3064 = vmatprep.subr.mxu0 0.0
        %3065 = vmatpush1.msra.mxu0 0.0
        %3066 = vmatprep.subr.mxu0 0.0
        %3067 = vmatpush1.msra.mxu0 0.0
        %3068 = vmatprep.subr.mxu0 0.0
        %3069 = vmatpush1.msra.mxu0 0.0
        %3070 = vmatprep.subr.mxu0 0.0
        %3071 = vmatpush1.msra.mxu0 0.0
        %3072 = vmatprep.subr.mxu0 0.0
        %3073 = vmatpush1.msra.mxu0 0.0
        %3074 = vmatprep.subr.mxu0 0.0
        %3075 = vmatpush1.msra.mxu0 0.0
        %3076 = vmatprep.subr.mxu0 0.0
        %3077 = vmatpush1.msra.mxu0 0.0
        %3078 = vmatprep.subr.mxu0 0.0
        %3079 = vmatpush1.msra.mxu0 0.0
        %3080 = vmatprep.subr.mxu0 0.0
        %3081 = vmatpush1.msra.mxu0 0.0
        %3082 = vmatprep.subr.mxu0 0.0
        %3083 = vmatpush1.msra.mxu0 0.0
        %3084 = vmatprep.subr.mxu0 0.0
        %3085 = vmatpush1.msra.mxu0 0.0
        %3086 = vmatprep.subr.mxu0 0.0
        %3087 = vmatpush1.msra.mxu0 0.0
        %3088 = vmatprep.subr.mxu0 0.0
        %3089 = vmatpush1.msra.mxu0 0.0
        %3090 = vmatprep.subr.mxu0 0.0
        %3091 = vmatpush1.msra.mxu0 0.0
        %3092 = vmatprep.subr.mxu0 0.0
        %3093 = vmatpush1.msra.mxu0 0.0
        %3094 = vmatprep.subr.mxu0 0.0
        %3095 = vmatpush1.msra.mxu0 0.0
        %3096 = vmatprep.subr.mxu0 0.0
        %3097 = vmatpush1.msra.mxu0 0.0
        %3098 = vmatprep.subr.mxu0 0.0
        %3099 = vmatpush1.msra.mxu0 0.0
        %3100 = vmatprep.mubr.f32.mxu0 0.0
        %3101 = vmatmul.mubr.f32.gmra.mrb[0].mxu0 %v3034
        %v3102 = vpop.f32.mrb[0].mxu0
        %v3103 = vadd.f32 %v3030, %v3102
        %v3104 = vpop.f32.mrb[0].mxu0
        %3105 = vdwg.mxu0
        %v3106 = vadd.f32 %v3103, %v594
        %v3107 = vmax.f32 %v3106, 0.0
        %v3109 = vsel %vm604, %v3107, 0
        %3111 = vmatprep.subr.mxu0 0.0
        %3112 = vmatpush1.msra.mxu0 %v434
        %3113 = vmatprep.subr.mxu0 0.0
        %3114 = vmatpush1.msra.mxu0 %v435
        %3115 = vmatprep.subr.mxu0 0.0
        %3116 = vmatpush1.msra.mxu0 %v436
        %3117 = vmatprep.subr.mxu0 0.0
        %3118 = vmatpush1.msra.mxu0 %v437
        %3119 = vmatprep.subr.mxu0 0.0
        %3120 = vmatpush1.msra.mxu0 0.0
        %3121 = vmatprep.subr.mxu0 0.0
        %3122 = vmatpush1.msra.mxu0 0.0
        %3123 = vmatprep.subr.mxu0 0.0
        %3124 = vmatpush1.msra.mxu0 0.0
        %3125 = vmatprep.subr.mxu0 0.0
        %3126 = vmatpush1.msra.mxu0 0.0
        %3127 = vmatprep.subr.mxu0 0.0
        %3128 = vmatpush1.msra.mxu0 0.0
        %3129 = vmatprep.subr.mxu0 0.0
        %3130 = vmatpush1.msra.mxu0 0.0
        %3131 = vmatprep.subr.mxu0 0.0
        %3132 = vmatpush1.msra.mxu0 0.0
        %3133 = vmatprep.subr.mxu0 0.0
        %3134 = vmatpush1.msra.mxu0 0.0
        %3135 = vmatprep.subr.mxu0 0.0
        %3136 = vmatpush1.msra.mxu0 0.0
        %3137 = vmatprep.subr.mxu0 0.0
        %3138 = vmatpush1.msra.mxu0 0.0
        %3139 = vmatprep.subr.mxu0 0.0
        %3140 = vmatpush1.msra.mxu0 0.0
        %3141 = vmatprep.subr.mxu0 0.0
        %3142 = vmatpush1.msra.mxu0 0.0
        %3143 = vmatprep.subr.mxu0 0.0
        %3144 = vmatpush1.msra.mxu0 0.0
        %3145 = vmatprep.subr.mxu0 0.0
        %3146 = vmatpush1.msra.mxu0 0.0
        %3147 = vmatprep.subr.mxu0 0.0
        %3148 = vmatpush1.msra.mxu0 0.0
        %3149 = vmatprep.subr.mxu0 0.0
        %3150 = vmatpush1.msra.mxu0 0.0
        %3151 = vmatprep.subr.mxu0 0.0
        %3152 = vmatpush1.msra.mxu0 0.0
        %3153 = vmatprep.subr.mxu0 0.0
        %3154 = vmatpush1.msra.mxu0 0.0
        %3155 = vmatprep.subr.mxu0 0.0
        %3156 = vmatpush1.msra.mxu0 0.0
        %3157 = vmatprep.subr.mxu0 0.0
        %3158 = vmatpush1.msra.mxu0 0.0
        %3159 = vmatprep.subr.mxu0 0.0
        %3160 = vmatpush1.msra.mxu0 0.0
        %3161 = vmatprep.subr.mxu0 0.0
        %3162 = vmatpush1.msra.mxu0 0.0
        %3163 = vmatprep.subr.mxu0 0.0
        %3164 = vmatpush1.msra.mxu0 0.0
        %3165 = vmatprep.subr.mxu0 0.0
        %3166 = vmatpush1.msra.mxu0 0.0
        %3167 = vmatprep.subr.mxu0 0.0
        %3168 = vmatpush1.msra.mxu0 0.0
        %3169 = vmatprep.subr.mxu0 0.0
        %3170 = vmatpush1.msra.mxu0 0.0
        %3171 = vmatprep.subr.mxu0 0.0
        %3172 = vmatpush1.msra.mxu0 0.0
        %3173 = vmatprep.subr.mxu0 0.0
        %3174 = vmatpush1.msra.mxu0 0.0
        %3175 = vmatprep.mubr.f32.mxu0 0.0
        %3176 = vmatmul.mubr.f32.gmra.mrb[0].mxu0 %v3109
        %v3177 = vpop.f32.mrb[0].mxu0
        %v3178 = vadd.f32 %v602, %v3177
        %v3179 = vpop.f32.mrb[0].mxu0
        %3180 = vdwg.mxu0
        %v3181 = vpack.c.bf16 %v3178, %v3178
        %s3182 = scalar_lea.vmem %s366, 40 [#allocation4]
        %3183 = vst [vmem:[%s3182] sm:$0xf] %v3181
        %3184 = vst.msk [vmem:[#allocation2] sm:$0xff] %vm443, %v3178
        %3185 = vrot.lane.b32.xlu0 %v2957, 64
        %v3186 = vpop.permute.xlu0 %3185
        %v3188 = vsub.f32 %v3178, %v3186
        %v3189 = vmul.f32 %v3188, %v3188
        %3191 = vrot.lane.b32.xlu0 %v3189, 64
        %v3192 = vpop.permute.xlu0 %3191
        %v3194 = vsel %vm443, %v3192, 0.0
        %3195 = vadd.xlane.f32.xlu0 %v3194
        %v3196 = vpop.xlane.xlu0 %3195
        %v3197 = vmul.f32 %v3196, %v693
        %v3199 = vlaneseq
        %v3200 = vshrl.u32 %v3199, 7
        %v3201 = vsub.s32 %v697, %v3200
        %v3202 = vrot.slane %v3197, %v3201
        %3204 = vst.msk [vmem:[%s398 + $0xa] sm:$0x1] %vm703, %v3202
        %s3205 = scalar_lea.vmem %s388, 44
        %v3206 = vld [vmem:[%s3205] sm:$0xf]
        %v3207 = vunpack.c.l.bf16 %v3206
        %v3208 = vld [vmem:[#allocation2] sm:$0xff]
        %v3209 = vmul.f32 %v3208, %v415
        %v3211 = vsel %vm443, %v3209, 0
        %3213 = vmatprep.subr.mxu0 0.0
        %3214 = vmatpush1.msra.mxu0 %v425
        %3215 = vmatprep.subr.mxu0 0.0
        %3216 = vmatpush1.msra.mxu0 %v426
        %3217 = vmatprep.subr.mxu0 0.0
        %3218 = vmatpush1.msra.mxu0 %v427
        %3219 = vmatprep.subr.mxu0 0.0
        %3220 = vmatpush1.msra.mxu0 %v428
        %3221 = vmatprep.subr.mxu0 0.0
        %3222 = vmatpush1.msra.mxu0 %v429
        %3223 = vmatprep.subr.mxu0 0.0
        %3224 = vmatpush1.msra.mxu0 %v430
        %3225 = vmatprep.subr.mxu0 0.0
        %3226 = vmatpush1.msra.mxu0 %v431
        %3227 = vmatprep.subr.mxu0 0.0
        %3228 = vmatpush1.msra.mxu0 %v432
        %3229 = vmatprep.subr.mxu0 0.0
        %3230 = vmatpush1.msra.mxu0 0.0
        %3231 = vmatprep.subr.mxu0 0.0
        %3232 = vmatpush1.msra.mxu0 0.0
        %3233 = vmatprep.subr.mxu0 0.0
        %3234 = vmatpush1.msra.mxu0 0.0
        %3235 = vmatprep.subr.mxu0 0.0
        %3236 = vmatpush1.msra.mxu0 0.0
        %3237 = vmatprep.subr.mxu0 0.0
        %3238 = vmatpush1.msra.mxu0 0.0
        %3239 = vmatprep.subr.mxu0 0.0
        %3240 = vmatpush1.msra.mxu0 0.0
        %3241 = vmatprep.subr.mxu0 0.0
        %3242 = vmatpush1.msra.mxu0 0.0
        %3243 = vmatprep.subr.mxu0 0.0
        %3244 = vmatpush1.msra.mxu0 0.0
        %3245 = vmatprep.subr.mxu0 0.0
        %3246 = vmatpush1.msra.mxu0 0.0
        %3247 = vmatprep.subr.mxu0 0.0
        %3248 = vmatpush1.msra.mxu0 0.0
        %3249 = vmatprep.subr.mxu0 0.0
        %3250 = vmatpush1.msra.mxu0 0.0
        %3251 = vmatprep.subr.mxu0 0.0
        %3252 = vmatpush1.msra.mxu0 0.0
        %3253 = vmatprep.subr.mxu0 0.0
        %3254 = vmatpush1.msra.mxu0 0.0
        %3255 = vmatprep.subr.mxu0 0.0
        %3256 = vmatpush1.msra.mxu0 0.0
        %3257 = vmatprep.subr.mxu0 0.0
        %3258 = vmatpush1.msra.mxu0 0.0
        %3259 = vmatprep.subr.mxu0 0.0
        %3260 = vmatpush1.msra.mxu0 0.0
        %3261 = vmatprep.subr.mxu0 0.0
        %3262 = vmatpush1.msra.mxu0 0.0
        %3263 = vmatprep.subr.mxu0 0.0
        %3264 = vmatpush1.msra.mxu0 0.0
        %3265 = vmatprep.subr.mxu0 0.0
        %3266 = vmatpush1.msra.mxu0 0.0
        %3267 = vmatprep.subr.mxu0 0.0
        %3268 = vmatpush1.msra.mxu0 0.0
        %3269 = vmatprep.subr.mxu0 0.0
        %3270 = vmatpush1.msra.mxu0 0.0
        %3271 = vmatprep.subr.mxu0 0.0
        %3272 = vmatpush1.msra.mxu0 0.0
        %3273 = vmatprep.subr.mxu0 0.0
        %3274 = vmatpush1.msra.mxu0 0.0
        %3275 = vmatprep.subr.mxu0 0.0
        %3276 = vmatpush1.msra.mxu0 0.0
        %3277 = vmatprep.mubr.f32.mxu0 0.0
        %3278 = vmatmul.mubr.f32.gmra.mrb[0].mxu0 %v3211
        %v3279 = vpop.f32.mrb[0].mxu0
        %v3280 = vadd.f32 0.0, %v3279
        %v3281 = vpop.f32.mrb[0].mxu0
        %3282 = vdwg.mxu0
        %v3284 = vsel %vm443, %v3207, 0
        %3286 = vmatprep.subr.mxu0 0.0
        %3287 = vmatpush1.msra.mxu0 %v417
        %3288 = vmatprep.subr.mxu0 0.0
        %3289 = vmatpush1.msra.mxu0 %v418
        %3290 = vmatprep.subr.mxu0 0.0
        %3291 = vmatpush1.msra.mxu0 %v419
        %3292 = vmatprep.subr.mxu0 0.0
        %3293 = vmatpush1.msra.mxu0 %v420
        %3294 = vmatprep.subr.mxu0 0.0
        %3295 = vmatpush1.msra.mxu0 %v421
        %3296 = vmatprep.subr.mxu0 0.0
        %3297 = vmatpush1.msra.mxu0 %v422
        %3298 = vmatprep.subr.mxu0 0.0
        %3299 = vmatpush1.msra.mxu0 %v423
        %3300 = vmatprep.subr.mxu0 0.0
        %3301 = vmatpush1.msra.mxu0 %v424
        %3302 = vmatprep.subr.mxu0 0.0
        %3303 = vmatpush1.msra.mxu0 0.0
        %3304 = vmatprep.subr.mxu0 0.0
        %3305 = vmatpush1.msra.mxu0 0.0
        %3306 = vmatprep.subr.mxu0 0.0
        %3307 = vmatpush1.msra.mxu0 0.0
        %3308 = vmatprep.subr.mxu0 0.0
        %3309 = vmatpush1.msra.mxu0 0.0
        %3310 = vmatprep.subr.mxu0 0.0
        %3311 = vmatpush1.msra.mxu0 0.0
        %3312 = vmatprep.subr.mxu0 0.0
        %3313 = vmatpush1.msra.mxu0 0.0
        %3314 = vmatprep.subr.mxu0 0.0
        %3315 = vmatpush1.msra.mxu0 0.0
        %3316 = vmatprep.subr.mxu0 0.0
        %3317 = vmatpush1.msra.mxu0 0.0
        %3318 = vmatprep.subr.mxu0 0.0
        %3319 = vmatpush1.msra.mxu0 0.0
        %3320 = vmatprep.subr.mxu0 0.0
        %3321 = vmatpush1.msra.mxu0 0.0
        %3322 = vmatprep.subr.mxu0 0.0
        %3323 = vmatpush1.msra.mxu0 0.0
        %3324 = vmatprep.subr.mxu0 0.0
        %3325 = vmatpush1.msra.mxu0 0.0
        %3326 = vmatprep.subr.mxu0 0.0
        %3327 = vmatpush1.msra.mxu0 0.0
        %3328 = vmatprep.subr.mxu0 0.0
        %3329 = vmatpush1.msra.mxu0 0.0
        %3330 = vmatprep.subr.mxu0 0.0
        %3331 = vmatpush1.msra.mxu0 0.0
        %3332 = vmatprep.subr.mxu0 0.0
        %3333 = vmatpush1.msra.mxu0 0.0
        %3334 = vmatprep.subr.mxu0 0.0
        %3335 = vmatpush1.msra.mxu0 0.0
        %3336 = vmatprep.subr.mxu0 0.0
        %3337 = vmatpush1.msra.mxu0 0.0
        %3338 = vmatprep.subr.mxu0 0.0
        %3339 = vmatpush1.msra.mxu0 0.0
        %3340 = vmatprep.subr.mxu0 0.0
        %3341 = vmatpush1.msra.mxu0 0.0
        %3342 = vmatprep.subr.mxu0 0.0
        %3343 = vmatpush1.msra.mxu0 0.0
        %3344 = vmatprep.subr.mxu0 0.0
        %3345 = vmatpush1.msra.mxu0 0.0
        %3346 = vmatprep.subr.mxu0 0.0
        %3347 = vmatpush1.msra.mxu0 0.0
        %3348 = vmatprep.subr.mxu0 0.0
        %3349 = vmatpush1.msra.mxu0 0.0
        %3350 = vmatprep.mubr.f32.mxu0 0.0
        %3351 = vmatmul.mubr.f32.gmra.mrb[0].mxu0 %v3284
        %v3352 = vpop.f32.mrb[0].mxu0
        %v3353 = vadd.f32 %v3280, %v3352
        %v3354 = vpop.f32.mrb[0].mxu0
        %3355 = vdwg.mxu0
        %v3356 = vadd.f32 %v3353, %v594
        %v3357 = vmax.f32 %v3356, 0.0
        %v3359 = vsel %vm604, %v3357, 0
        %3361 = vmatprep.subr.mxu0 0.0
        %3362 = vmatpush1.msra.mxu0 %v434
        %3363 = vmatprep.subr.mxu0 0.0
        %3364 = vmatpush1.msra.mxu0 %v435
        %3365 = vmatprep.subr.mxu0 0.0
        %3366 = vmatpush1.msra.mxu0 %v436
        %3367 = vmatprep.subr.mxu0 0.0
        %3368 = vmatpush1.msra.mxu0 %v437
        %3369 = vmatprep.subr.mxu0 0.0
        %3370 = vmatpush1.msra.mxu0 0.0
        %3371 = vmatprep.subr.mxu0 0.0
        %3372 = vmatpush1.msra.mxu0 0.0
        %3373 = vmatprep.subr.mxu0 0.0
        %3374 = vmatpush1.msra.mxu0 0.0
        %3375 = vmatprep.subr.mxu0 0.0
        %3376 = vmatpush1.msra.mxu0 0.0
        %3377 = vmatprep.subr.mxu0 0.0
        %3378 = vmatpush1.msra.mxu0 0.0
        %3379 = vmatprep.subr.mxu0 0.0
        %3380 = vmatpush1.msra.mxu0 0.0
        %3381 = vmatprep.subr.mxu0 0.0
        %3382 = vmatpush1.msra.mxu0 0.0
        %3383 = vmatprep.subr.mxu0 0.0
        %3384 = vmatpush1.msra.mxu0 0.0
        %3385 = vmatprep.subr.mxu0 0.0
        %3386 = vmatpush1.msra.mxu0 0.0
        %3387 = vmatprep.subr.mxu0 0.0
        %3388 = vmatpush1.msra.mxu0 0.0
        %3389 = vmatprep.subr.mxu0 0.0
        %3390 = vmatpush1.msra.mxu0 0.0
        %3391 = vmatprep.subr.mxu0 0.0
        %3392 = vmatpush1.msra.mxu0 0.0
        %3393 = vmatprep.subr.mxu0 0.0
        %3394 = vmatpush1.msra.mxu0 0.0
        %3395 = vmatprep.subr.mxu0 0.0
        %3396 = vmatpush1.msra.mxu0 0.0
        %3397 = vmatprep.subr.mxu0 0.0
        %3398 = vmatpush1.msra.mxu0 0.0
        %3399 = vmatprep.subr.mxu0 0.0
        %3400 = vmatpush1.msra.mxu0 0.0
        %3401 = vmatprep.subr.mxu0 0.0
        %3402 = vmatpush1.msra.mxu0 0.0
        %3403 = vmatprep.subr.mxu0 0.0
        %3404 = vmatpush1.msra.mxu0 0.0
        %3405 = vmatprep.subr.mxu0 0.0
        %3406 = vmatpush1.msra.mxu0 0.0
        %3407 = vmatprep.subr.mxu0 0.0
        %3408 = vmatpush1.msra.mxu0 0.0
        %3409 = vmatprep.subr.mxu0 0.0
        %3410 = vmatpush1.msra.mxu0 0.0
        %3411 = vmatprep.subr.mxu0 0.0
        %3412 = vmatpush1.msra.mxu0 0.0
        %3413 = vmatprep.subr.mxu0 0.0
        %3414 = vmatpush1.msra.mxu0 0.0
        %3415 = vmatprep.subr.mxu0 0.0
        %3416 = vmatpush1.msra.mxu0 0.0
        %3417 = vmatprep.subr.mxu0 0.0
        %3418 = vmatpush1.msra.mxu0 0.0
        %3419 = vmatprep.subr.mxu0 0.0
        %3420 = vmatpush1.msra.mxu0 0.0
        %3421 = vmatprep.subr.mxu0 0.0
        %3422 = vmatpush1.msra.mxu0 0.0
        %3423 = vmatprep.subr.mxu0 0.0
        %3424 = vmatpush1.msra.mxu0 0.0
        %3425 = vmatprep.mubr.f32.mxu0 0.0
        %3426 = vmatmul.mubr.f32.gmra.mrb[0].mxu0 %v3359
        %v3427 = vpop.f32.mrb[0].mxu0
        %v3428 = vadd.f32 %v602, %v3427
        %v3429 = vpop.f32.mrb[0].mxu0
        %3430 = vdwg.mxu0
        %v3431 = vpack.c.bf16 %v3428, %v3428
        %s3432 = scalar_lea.vmem %s366, 44 [#allocation4]
        %3433 = vst [vmem:[%s3432] sm:$0xf] %v3431
        %3434 = vst.msk [vmem:[#allocation2] sm:$0xff] %vm443, %v3428
        %3435 = vrot.lane.b32.xlu0 %v3207, 64
        %v3436 = vpop.permute.xlu0 %3435
        %v3438 = vsub.f32 %v3428, %v3436
        %v3439 = vmul.f32 %v3438, %v3438
        %3441 = vrot.lane.b32.xlu0 %v3439, 64
        %v3442 = vpop.permute.xlu0 %3441
        %v3444 = vsel %vm443, %v3442, 0.0
        %3445 = vadd.xlane.f32.xlu0 %v3444
        %v3446 = vpop.xlane.xlu0 %3445
        %v3447 = vmul.f32 %v3446, %v693
        %v3449 = vlaneseq
        %v3450 = vshrl.u32 %v3449, 7
        %v3451 = vsub.s32 %v697, %v3450
        %v3452 = vrot.slane %v3447, %v3451
        %3454 = vst.msk [vmem:[%s398 + $0xb] sm:$0x1] %vm703, %v3452
        %s3455 = scalar_lea.vmem %s388, 48
        %v3456 = vld [vmem:[%s3455] sm:$0xf]
        %v3457 = vunpack.c.l.bf16 %v3456
        %v3458 = vld [vmem:[#allocation2] sm:$0xff]
        %v3459 = vmul.f32 %v3458, %v415
        %v3461 = vsel %vm443, %v3459, 0
        %3463 = vmatprep.subr.mxu0 0.0
        %3464 = vmatpush1.msra.mxu0 %v425
        %3465 = vmatprep.subr.mxu0 0.0
        %3466 = vmatpush1.msra.mxu0 %v426
        %3467 = vmatprep.subr.mxu0 0.0
        %3468 = vmatpush1.msra.mxu0 %v427
        %3469 = vmatprep.subr.mxu0 0.0
        %3470 = vmatpush1.msra.mxu0 %v428
        %3471 = vmatprep.subr.mxu0 0.0
        %3472 = vmatpush1.msra.mxu0 %v429
        %3473 = vmatprep.subr.mxu0 0.0
        %3474 = vmatpush1.msra.mxu0 %v430
        %3475 = vmatprep.subr.mxu0 0.0
        %3476 = vmatpush1.msra.mxu0 %v431
        %3477 = vmatprep.subr.mxu0 0.0
        %3478 = vmatpush1.msra.mxu0 %v432
        %3479 = vmatprep.subr.mxu0 0.0
        %3480 = vmatpush1.msra.mxu0 0.0
        %3481 = vmatprep.subr.mxu0 0.0
        %3482 = vmatpush1.msra.mxu0 0.0
        %3483 = vmatprep.subr.mxu0 0.0
        %3484 = vmatpush1.msra.mxu0 0.0
        %3485 = vmatprep.subr.mxu0 0.0
        %3486 = vmatpush1.msra.mxu0 0.0
        %3487 = vmatprep.subr.mxu0 0.0
        %3488 = vmatpush1.msra.mxu0 0.0
        %3489 = vmatprep.subr.mxu0 0.0
        %3490 = vmatpush1.msra.mxu0 0.0
        %3491 = vmatprep.subr.mxu0 0.0
        %3492 = vmatpush1.msra.mxu0 0.0
        %3493 = vmatprep.subr.mxu0 0.0
        %3494 = vmatpush1.msra.mxu0 0.0
        %3495 = vmatprep.subr.mxu0 0.0
        %3496 = vmatpush1.msra.mxu0 0.0
        %3497 = vmatprep.subr.mxu0 0.0
        %3498 = vmatpush1.msra.mxu0 0.0
        %3499 = vmatprep.subr.mxu0 0.0
        %3500 = vmatpush1.msra.mxu0 0.0
        %3501 = vmatprep.subr.mxu0 0.0
        %3502 = vmatpush1.msra.mxu0 0.0
        %3503 = vmatprep.subr.mxu0 0.0
        %3504 = vmatpush1.msra.mxu0 0.0
        %3505 = vmatprep.subr.mxu0 0.0
        %3506 = vmatpush1.msra.mxu0 0.0
        %3507 = vmatprep.subr.mxu0 0.0
        %3508 = vmatpush1.msra.mxu0 0.0
        %3509 = vmatprep.subr.mxu0 0.0
        %3510 = vmatpush1.msra.mxu0 0.0
        %3511 = vmatprep.subr.mxu0 0.0
        %3512 = vmatpush1.msra.mxu0 0.0
        %3513 = vmatprep.subr.mxu0 0.0
        %3514 = vmatpush1.msra.mxu0 0.0
        %3515 = vmatprep.subr.mxu0 0.0
        %3516 = vmatpush1.msra.mxu0 0.0
        %3517 = vmatprep.subr.mxu0 0.0
        %3518 = vmatpush1.msra.mxu0 0.0
        %3519 = vmatprep.subr.mxu0 0.0
        %3520 = vmatpush1.msra.mxu0 0.0
        %3521 = vmatprep.subr.mxu0 0.0
        %3522 = vmatpush1.msra.mxu0 0.0
        %3523 = vmatprep.subr.mxu0 0.0
        %3524 = vmatpush1.msra.mxu0 0.0
        %3525 = vmatprep.subr.mxu0 0.0
        %3526 = vmatpush1.msra.mxu0 0.0
        %3527 = vmatprep.mubr.f32.mxu0 0.0
        %3528 = vmatmul.mubr.f32.gmra.mrb[0].mxu0 %v3461
        %v3529 = vpop.f32.mrb[0].mxu0
        %v3530 = vadd.f32 0.0, %v3529
        %v3531 = vpop.f32.mrb[0].mxu0
        %3532 = vdwg.mxu0
        %v3534 = vsel %vm443, %v3457, 0
        %3536 = vmatprep.subr.mxu0 0.0
        %3537 = vmatpush1.msra.mxu0 %v417
        %3538 = vmatprep.subr.mxu0 0.0
        %3539 = vmatpush1.msra.mxu0 %v418
        %3540 = vmatprep.subr.mxu0 0.0
        %3541 = vmatpush1.msra.mxu0 %v419
        %3542 = vmatprep.subr.mxu0 0.0
        %3543 = vmatpush1.msra.mxu0 %v420
        %3544 = vmatprep.subr.mxu0 0.0
        %3545 = vmatpush1.msra.mxu0 %v421
        %3546 = vmatprep.subr.mxu0 0.0
        %3547 = vmatpush1.msra.mxu0 %v422
        %3548 = vmatprep.subr.mxu0 0.0
        %3549 = vmatpush1.msra.mxu0 %v423
        %3550 = vmatprep.subr.mxu0 0.0
        %3551 = vmatpush1.msra.mxu0 %v424
        %3552 = vmatprep.subr.mxu0 0.0
        %3553 = vmatpush1.msra.mxu0 0.0
        %3554 = vmatprep.subr.mxu0 0.0
        %3555 = vmatpush1.msra.mxu0 0.0
        %3556 = vmatprep.subr.mxu0 0.0
        %3557 = vmatpush1.msra.mxu0 0.0
        %3558 = vmatprep.subr.mxu0 0.0
        %3559 = vmatpush1.msra.mxu0 0.0
        %3560 = vmatprep.subr.mxu0 0.0
        %3561 = vmatpush1.msra.mxu0 0.0
        %3562 = vmatprep.subr.mxu0 0.0
        %3563 = vmatpush1.msra.mxu0 0.0
        %3564 = vmatprep.subr.mxu0 0.0
        %3565 = vmatpush1.msra.mxu0 0.0
        %3566 = vmatprep.subr.mxu0 0.0
        %3567 = vmatpush1.msra.mxu0 0.0
        %3568 = vmatprep.subr.mxu0 0.0
        %3569 = vmatpush1.msra.mxu0 0.0
        %3570 = vmatprep.subr.mxu0 0.0
        %3571 = vmatpush1.msra.mxu0 0.0
        %3572 = vmatprep.subr.mxu0 0.0
        %3573 = vmatpush1.msra.mxu0 0.0
        %3574 = vmatprep.subr.mxu0 0.0
        %3575 = vmatpush1.msra.mxu0 0.0
        %3576 = vmatprep.subr.mxu0 0.0
        %3577 = vmatpush1.msra.mxu0 0.0
        %3578 = vmatprep.subr.mxu0 0.0
        %3579 = vmatpush1.msra.mxu0 0.0
        %3580 = vmatprep.subr.mxu0 0.0
        %3581 = vmatpush1.msra.mxu0 0.0
        %3582 = vmatprep.subr.mxu0 0.0
        %3583 = vmatpush1.msra.mxu0 0.0
        %3584 = vmatprep.subr.mxu0 0.0
        %3585 = vmatpush1.msra.mxu0 0.0
        %3586 = vmatprep.subr.mxu0 0.0
        %3587 = vmatpush1.msra.mxu0 0.0
        %3588 = vmatprep.subr.mxu0 0.0
        %3589 = vmatpush1.msra.mxu0 0.0
        %3590 = vmatprep.subr.mxu0 0.0
        %3591 = vmatpush1.msra.mxu0 0.0
        %3592 = vmatprep.subr.mxu0 0.0
        %3593 = vmatpush1.msra.mxu0 0.0
        %3594 = vmatprep.subr.mxu0 0.0
        %3595 = vmatpush1.msra.mxu0 0.0
        %3596 = vmatprep.subr.mxu0 0.0
        %3597 = vmatpush1.msra.mxu0 0.0
        %3598 = vmatprep.subr.mxu0 0.0
        %3599 = vmatpush1.msra.mxu0 0.0
        %3600 = vmatprep.mubr.f32.mxu0 0.0
        %3601 = vmatmul.mubr.f32.gmra.mrb[0].mxu0 %v3534
        %v3602 = vpop.f32.mrb[0].mxu0
        %v3603 = vadd.f32 %v3530, %v3602
        %v3604 = vpop.f32.mrb[0].mxu0
        %3605 = vdwg.mxu0
        %v3606 = vadd.f32 %v3603, %v594
        %v3607 = vmax.f32 %v3606, 0.0
        %v3609 = vsel %vm604, %v3607, 0
        %3611 = vmatprep.subr.mxu0 0.0
        %3612 = vmatpush1.msra.mxu0 %v434
        %3613 = vmatprep.subr.mxu0 0.0
        %3614 = vmatpush1.msra.mxu0 %v435
        %3615 = vmatprep.subr.mxu0 0.0
        %3616 = vmatpush1.msra.mxu0 %v436
        %3617 = vmatprep.subr.mxu0 0.0
        %3618 = vmatpush1.msra.mxu0 %v437
        %3619 = vmatprep.subr.mxu0 0.0
        %3620 = vmatpush1.msra.mxu0 0.0
        %3621 = vmatprep.subr.mxu0 0.0
        %3622 = vmatpush1.msra.mxu0 0.0
        %3623 = vmatprep.subr.mxu0 0.0
        %3624 = vmatpush1.msra.mxu0 0.0
        %3625 = vmatprep.subr.mxu0 0.0
        %3626 = vmatpush1.msra.mxu0 0.0
        %3627 = vmatprep.subr.mxu0 0.0
        %3628 = vmatpush1.msra.mxu0 0.0
        %3629 = vmatprep.subr.mxu0 0.0
        %3630 = vmatpush1.msra.mxu0 0.0
        %3631 = vmatprep.subr.mxu0 0.0
        %3632 = vmatpush1.msra.mxu0 0.0
        %3633 = vmatprep.subr.mxu0 0.0
        %3634 = vmatpush1.msra.mxu0 0.0
        %3635 = vmatprep.subr.mxu0 0.0
        %3636 = vmatpush1.msra.mxu0 0.0
        %3637 = vmatprep.subr.mxu0 0.0
        %3638 = vmatpush1.msra.mxu0 0.0
        %3639 = vmatprep.subr.mxu0 0.0
        %3640 = vmatpush1.msra.mxu0 0.0
        %3641 = vmatprep.subr.mxu0 0.0
        %3642 = vmatpush1.msra.mxu0 0.0
        %3643 = vmatprep.subr.mxu0 0.0
        %3644 = vmatpush1.msra.mxu0 0.0
        %3645 = vmatprep.subr.mxu0 0.0
        %3646 = vmatpush1.msra.mxu0 0.0
        %3647 = vmatprep.subr.mxu0 0.0
        %3648 = vmatpush1.msra.mxu0 0.0
        %3649 = vmatprep.subr.mxu0 0.0
        %3650 = vmatpush1.msra.mxu0 0.0
        %3651 = vmatprep.subr.mxu0 0.0
        %3652 = vmatpush1.msra.mxu0 0.0
        %3653 = vmatprep.subr.mxu0 0.0
        %3654 = vmatpush1.msra.mxu0 0.0
        %3655 = vmatprep.subr.mxu0 0.0
        %3656 = vmatpush1.msra.mxu0 0.0
        %3657 = vmatprep.subr.mxu0 0.0
        %3658 = vmatpush1.msra.mxu0 0.0
        %3659 = vmatprep.subr.mxu0 0.0
        %3660 = vmatpush1.msra.mxu0 0.0
        %3661 = vmatprep.subr.mxu0 0.0
        %3662 = vmatpush1.msra.mxu0 0.0
        %3663 = vmatprep.subr.mxu0 0.0
        %3664 = vmatpush1.msra.mxu0 0.0
        %3665 = vmatprep.subr.mxu0 0.0
        %3666 = vmatpush1.msra.mxu0 0.0
        %3667 = vmatprep.subr.mxu0 0.0
        %3668 = vmatpush1.msra.mxu0 0.0
        %3669 = vmatprep.subr.mxu0 0.0
        %3670 = vmatpush1.msra.mxu0 0.0
        %3671 = vmatprep.subr.mxu0 0.0
        %3672 = vmatpush1.msra.mxu0 0.0
        %3673 = vmatprep.subr.mxu0 0.0
        %3674 = vmatpush1.msra.mxu0 0.0
        %3675 = vmatprep.mubr.f32.mxu0 0.0
        %3676 = vmatmul.mubr.f32.gmra.mrb[0].mxu0 %v3609
        %v3677 = vpop.f32.mrb[0].mxu0
        %v3678 = vadd.f32 %v602, %v3677
        %v3679 = vpop.f32.mrb[0].mxu0
        %3680 = vdwg.mxu0
        %v3681 = vpack.c.bf16 %v3678, %v3678
        %s3682 = scalar_lea.vmem %s366, 48 [#allocation4]
        %3683 = vst [vmem:[%s3682] sm:$0xf] %v3681
        %3684 = vst.msk [vmem:[#allocation2] sm:$0xff] %vm443, %v3678
        %3685 = vrot.lane.b32.xlu0 %v3457, 64
        %v3686 = vpop.permute.xlu0 %3685
        %v3688 = vsub.f32 %v3678, %v3686
        %v3689 = vmul.f32 %v3688, %v3688
        %3691 = vrot.lane.b32.xlu0 %v3689, 64
        %v3692 = vpop.permute.xlu0 %3691
        %v3694 = vsel %vm443, %v3692, 0.0
        %3695 = vadd.xlane.f32.xlu0 %v3694
        %v3696 = vpop.xlane.xlu0 %3695
        %v3697 = vmul.f32 %v3696, %v693
        %v3699 = vlaneseq
        %v3700 = vshrl.u32 %v3699, 7
        %v3701 = vsub.s32 %v697, %v3700
        %v3702 = vrot.slane %v3697, %v3701
        %3704 = vst.msk [vmem:[%s398 + $0xc] sm:$0x1] %vm703, %v3702
        %s3705 = scalar_lea.vmem %s388, 52
        %v3706 = vld [vmem:[%s3705] sm:$0xf]
        %v3707 = vunpack.c.l.bf16 %v3706
        %v3708 = vld [vmem:[#allocation2] sm:$0xff]
        %v3709 = vmul.f32 %v3708, %v415
        %v3711 = vsel %vm443, %v3709, 0
        %3713 = vmatprep.subr.mxu0 0.0
        %3714 = vmatpush1.msra.mxu0 %v425
        %3715 = vmatprep.subr.mxu0 0.0
        %3716 = vmatpush1.msra.mxu0 %v426
        %3717 = vmatprep.subr.mxu0 0.0
        %3718 = vmatpush1.msra.mxu0 %v427
        %3719 = vmatprep.subr.mxu0 0.0
        %3720 = vmatpush1.msra.mxu0 %v428
        %3721 = vmatprep.subr.mxu0 0.0
        %3722 = vmatpush1.msra.mxu0 %v429
        %3723 = vmatprep.subr.mxu0 0.0
        %3724 = vmatpush1.msra.mxu0 %v430
        %3725 = vmatprep.subr.mxu0 0.0
        %3726 = vmatpush1.msra.mxu0 %v431
        %3727 = vmatprep.subr.mxu0 0.0
        %3728 = vmatpush1.msra.mxu0 %v432
        %3729 = vmatprep.subr.mxu0 0.0
        %3730 = vmatpush1.msra.mxu0 0.0
        %3731 = vmatprep.subr.mxu0 0.0
        %3732 = vmatpush1.msra.mxu0 0.0
        %3733 = vmatprep.subr.mxu0 0.0
        %3734 = vmatpush1.msra.mxu0 0.0
        %3735 = vmatprep.subr.mxu0 0.0
        %3736 = vmatpush1.msra.mxu0 0.0
        %3737 = vmatprep.subr.mxu0 0.0
        %3738 = vmatpush1.msra.mxu0 0.0
        %3739 = vmatprep.subr.mxu0 0.0
        %3740 = vmatpush1.msra.mxu0 0.0
        %3741 = vmatprep.subr.mxu0 0.0
        %3742 = vmatpush1.msra.mxu0 0.0
        %3743 = vmatprep.subr.mxu0 0.0
        %3744 = vmatpush1.msra.mxu0 0.0
        %3745 = vmatprep.subr.mxu0 0.0
        %3746 = vmatpush1.msra.mxu0 0.0
        %3747 = vmatprep.subr.mxu0 0.0
        %3748 = vmatpush1.msra.mxu0 0.0
        %3749 = vmatprep.subr.mxu0 0.0
        %3750 = vmatpush1.msra.mxu0 0.0
        %3751 = vmatprep.subr.mxu0 0.0
        %3752 = vmatpush1.msra.mxu0 0.0
        %3753 = vmatprep.subr.mxu0 0.0
        %3754 = vmatpush1.msra.mxu0 0.0
        %3755 = vmatprep.subr.mxu0 0.0
        %3756 = vmatpush1.msra.mxu0 0.0
        %3757 = vmatprep.subr.mxu0 0.0
        %3758 = vmatpush1.msra.mxu0 0.0
        %3759 = vmatprep.subr.mxu0 0.0
        %3760 = vmatpush1.msra.mxu0 0.0
        %3761 = vmatprep.subr.mxu0 0.0
        %3762 = vmatpush1.msra.mxu0 0.0
        %3763 = vmatprep.subr.mxu0 0.0
        %3764 = vmatpush1.msra.mxu0 0.0
        %3765 = vmatprep.subr.mxu0 0.0
        %3766 = vmatpush1.msra.mxu0 0.0
        %3767 = vmatprep.subr.mxu0 0.0
        %3768 = vmatpush1.msra.mxu0 0.0
        %3769 = vmatprep.subr.mxu0 0.0
        %3770 = vmatpush1.msra.mxu0 0.0
        %3771 = vmatprep.subr.mxu0 0.0
        %3772 = vmatpush1.msra.mxu0 0.0
        %3773 = vmatprep.subr.mxu0 0.0
        %3774 = vmatpush1.msra.mxu0 0.0
        %3775 = vmatprep.subr.mxu0 0.0
        %3776 = vmatpush1.msra.mxu0 0.0
        %3777 = vmatprep.mubr.f32.mxu0 0.0
        %3778 = vmatmul.mubr.f32.gmra.mrb[0].mxu0 %v3711
        %v3779 = vpop.f32.mrb[0].mxu0
        %v3780 = vadd.f32 0.0, %v3779
        %v3781 = vpop.f32.mrb[0].mxu0
        %3782 = vdwg.mxu0
        %v3784 = vsel %vm443, %v3707, 0
        %3786 = vmatprep.subr.mxu0 0.0
        %3787 = vmatpush1.msra.mxu0 %v417
        %3788 = vmatprep.subr.mxu0 0.0
        %3789 = vmatpush1.msra.mxu0 %v418
        %3790 = vmatprep.subr.mxu0 0.0
        %3791 = vmatpush1.msra.mxu0 %v419
        %3792 = vmatprep.subr.mxu0 0.0
        %3793 = vmatpush1.msra.mxu0 %v420
        %3794 = vmatprep.subr.mxu0 0.0
        %3795 = vmatpush1.msra.mxu0 %v421
        %3796 = vmatprep.subr.mxu0 0.0
        %3797 = vmatpush1.msra.mxu0 %v422
        %3798 = vmatprep.subr.mxu0 0.0
        %3799 = vmatpush1.msra.mxu0 %v423
        %3800 = vmatprep.subr.mxu0 0.0
        %3801 = vmatpush1.msra.mxu0 %v424
        %3802 = vmatprep.subr.mxu0 0.0
        %3803 = vmatpush1.msra.mxu0 0.0
        %3804 = vmatprep.subr.mxu0 0.0
        %3805 = vmatpush1.msra.mxu0 0.0
        %3806 = vmatprep.subr.mxu0 0.0
        %3807 = vmatpush1.msra.mxu0 0.0
        %3808 = vmatprep.subr.mxu0 0.0
        %3809 = vmatpush1.msra.mxu0 0.0
        %3810 = vmatprep.subr.mxu0 0.0
        %3811 = vmatpush1.msra.mxu0 0.0
        %3812 = vmatprep.subr.mxu0 0.0
        %3813 = vmatpush1.msra.mxu0 0.0
        %3814 = vmatprep.subr.mxu0 0.0
        %3815 = vmatpush1.msra.mxu0 0.0
        %3816 = vmatprep.subr.mxu0 0.0
        %3817 = vmatpush1.msra.mxu0 0.0
        %3818 = vmatprep.subr.mxu0 0.0
        %3819 = vmatpush1.msra.mxu0 0.0
        %3820 = vmatprep.subr.mxu0 0.0
        %3821 = vmatpush1.msra.mxu0 0.0
        %3822 = vmatprep.subr.mxu0 0.0
        %3823 = vmatpush1.msra.mxu0 0.0
        %3824 = vmatprep.subr.mxu0 0.0
        %3825 = vmatpush1.msra.mxu0 0.0
        %3826 = vmatprep.subr.mxu0 0.0
        %3827 = vmatpush1.msra.mxu0 0.0
        %3828 = vmatprep.subr.mxu0 0.0
        %3829 = vmatpush1.msra.mxu0 0.0
        %3830 = vmatprep.subr.mxu0 0.0
        %3831 = vmatpush1.msra.mxu0 0.0
        %3832 = vmatprep.subr.mxu0 0.0
        %3833 = vmatpush1.msra.mxu0 0.0
        %3834 = vmatprep.subr.mxu0 0.0
        %3835 = vmatpush1.msra.mxu0 0.0
        %3836 = vmatprep.subr.mxu0 0.0
        %3837 = vmatpush1.msra.mxu0 0.0
        %3838 = vmatprep.subr.mxu0 0.0
        %3839 = vmatpush1.msra.mxu0 0.0
        %3840 = vmatprep.subr.mxu0 0.0
        %3841 = vmatpush1.msra.mxu0 0.0
        %3842 = vmatprep.subr.mxu0 0.0
        %3843 = vmatpush1.msra.mxu0 0.0
        %3844 = vmatprep.subr.mxu0 0.0
        %3845 = vmatpush1.msra.mxu0 0.0
        %3846 = vmatprep.subr.mxu0 0.0
        %3847 = vmatpush1.msra.mxu0 0.0
        %3848 = vmatprep.subr.mxu0 0.0
        %3849 = vmatpush1.msra.mxu0 0.0
        %3850 = vmatprep.mubr.f32.mxu0 0.0
        %3851 = vmatmul.mubr.f32.gmra.mrb[0].mxu0 %v3784
        %v3852 = vpop.f32.mrb[0].mxu0
        %v3853 = vadd.f32 %v3780, %v3852
        %v3854 = vpop.f32.mrb[0].mxu0
        %3855 = vdwg.mxu0
        %v3856 = vadd.f32 %v3853, %v594
        %v3857 = vmax.f32 %v3856, 0.0
        %v3859 = vsel %vm604, %v3857, 0
        %3861 = vmatprep.subr.mxu0 0.0
        %3862 = vmatpush1.msra.mxu0 %v434
        %3863 = vmatprep.subr.mxu0 0.0
        %3864 = vmatpush1.msra.mxu0 %v435
        %3865 = vmatprep.subr.mxu0 0.0
        %3866 = vmatpush1.msra.mxu0 %v436
        %3867 = vmatprep.subr.mxu0 0.0
        %3868 = vmatpush1.msra.mxu0 %v437
        %3869 = vmatprep.subr.mxu0 0.0
        %3870 = vmatpush1.msra.mxu0 0.0
        %3871 = vmatprep.subr.mxu0 0.0
        %3872 = vmatpush1.msra.mxu0 0.0
        %3873 = vmatprep.subr.mxu0 0.0
        %3874 = vmatpush1.msra.mxu0 0.0
        %3875 = vmatprep.subr.mxu0 0.0
        %3876 = vmatpush1.msra.mxu0 0.0
        %3877 = vmatprep.subr.mxu0 0.0
        %3878 = vmatpush1.msra.mxu0 0.0
        %3879 = vmatprep.subr.mxu0 0.0
        %3880 = vmatpush1.msra.mxu0 0.0
        %3881 = vmatprep.subr.mxu0 0.0
        %3882 = vmatpush1.msra.mxu0 0.0
        %3883 = vmatprep.subr.mxu0 0.0
        %3884 = vmatpush1.msra.mxu0 0.0
        %3885 = vmatprep.subr.mxu0 0.0
        %3886 = vmatpush1.msra.mxu0 0.0
        %3887 = vmatprep.subr.mxu0 0.0
        %3888 = vmatpush1.msra.mxu0 0.0
        %3889 = vmatprep.subr.mxu0 0.0
        %3890 = vmatpush1.msra.mxu0 0.0
        %3891 = vmatprep.subr.mxu0 0.0
        %3892 = vmatpush1.msra.mxu0 0.0
        %3893 = vmatprep.subr.mxu0 0.0
        %3894 = vmatpush1.msra.mxu0 0.0
        %3895 = vmatprep.subr.mxu0 0.0
        %3896 = vmatpush1.msra.mxu0 0.0
        %3897 = vmatprep.subr.mxu0 0.0
        %3898 = vmatpush1.msra.mxu0 0.0
        %3899 = vmatprep.subr.mxu0 0.0
        %3900 = vmatpush1.msra.mxu0 0.0
        %3901 = vmatprep.subr.mxu0 0.0
        %3902 = vmatpush1.msra.mxu0 0.0
        %3903 = vmatprep.subr.mxu0 0.0
        %3904 = vmatpush1.msra.mxu0 0.0
        %3905 = vmatprep.subr.mxu0 0.0
        %3906 = vmatpush1.msra.mxu0 0.0
        %3907 = vmatprep.subr.mxu0 0.0
        %3908 = vmatpush1.msra.mxu0 0.0
        %3909 = vmatprep.subr.mxu0 0.0
        %3910 = vmatpush1.msra.mxu0 0.0
        %3911 = vmatprep.subr.mxu0 0.0
        %3912 = vmatpush1.msra.mxu0 0.0
        %3913 = vmatprep.subr.mxu0 0.0
        %3914 = vmatpush1.msra.mxu0 0.0
        %3915 = vmatprep.subr.mxu0 0.0
        %3916 = vmatpush1.msra.mxu0 0.0
        %3917 = vmatprep.subr.mxu0 0.0
        %3918 = vmatpush1.msra.mxu0 0.0
        %3919 = vmatprep.subr.mxu0 0.0
        %3920 = vmatpush1.msra.mxu0 0.0
        %3921 = vmatprep.subr.mxu0 0.0
        %3922 = vmatpush1.msra.mxu0 0.0
        %3923 = vmatprep.subr.mxu0 0.0
        %3924 = vmatpush1.msra.mxu0 0.0
        %3925 = vmatprep.mubr.f32.mxu0 0.0
        %3926 = vmatmul.mubr.f32.gmra.mrb[0].mxu0 %v3859
        %v3927 = vpop.f32.mrb[0].mxu0
        %v3928 = vadd.f32 %v602, %v3927
        %v3929 = vpop.f32.mrb[0].mxu0
        %3930 = vdwg.mxu0
        %v3931 = vpack.c.bf16 %v3928, %v3928
        %s3932 = scalar_lea.vmem %s366, 52 [#allocation4]
        %3933 = vst [vmem:[%s3932] sm:$0xf] %v3931
        %3934 = vst.msk [vmem:[#allocation2] sm:$0xff] %vm443, %v3928
        %3935 = vrot.lane.b32.xlu0 %v3707, 64
        %v3936 = vpop.permute.xlu0 %3935
        %v3938 = vsub.f32 %v3928, %v3936
        %v3939 = vmul.f32 %v3938, %v3938
        %3941 = vrot.lane.b32.xlu0 %v3939, 64
        %v3942 = vpop.permute.xlu0 %3941
        %v3944 = vsel %vm443, %v3942, 0.0
        %3945 = vadd.xlane.f32.xlu0 %v3944
        %v3946 = vpop.xlane.xlu0 %3945
        %v3947 = vmul.f32 %v3946, %v693
        %v3949 = vlaneseq
        %v3950 = vshrl.u32 %v3949, 7
        %v3951 = vsub.s32 %v697, %v3950
        %v3952 = vrot.slane %v3947, %v3951
        %3954 = vst.msk [vmem:[%s398 + $0xd] sm:$0x1] %vm703, %v3952
        %s3955 = scalar_lea.vmem %s388, 56
        %v3956 = vld [vmem:[%s3955] sm:$0xf]
        %v3957 = vunpack.c.l.bf16 %v3956
        %v3958 = vld [vmem:[#allocation2] sm:$0xff]
        %v3959 = vmul.f32 %v3958, %v415
        %v3961 = vsel %vm443, %v3959, 0
        %3963 = vmatprep.subr.mxu0 0.0
        %3964 = vmatpush1.msra.mxu0 %v425
        %3965 = vmatprep.subr.mxu0 0.0
        %3966 = vmatpush1.msra.mxu0 %v426
        %3967 = vmatprep.subr.mxu0 0.0
        %3968 = vmatpush1.msra.mxu0 %v427
        %3969 = vmatprep.subr.mxu0 0.0
        %3970 = vmatpush1.msra.mxu0 %v428
        %3971 = vmatprep.subr.mxu0 0.0
        %3972 = vmatpush1.msra.mxu0 %v429
        %3973 = vmatprep.subr.mxu0 0.0
        %3974 = vmatpush1.msra.mxu0 %v430
        %3975 = vmatprep.subr.mxu0 0.0
        %3976 = vmatpush1.msra.mxu0 %v431
        %3977 = vmatprep.subr.mxu0 0.0
        %3978 = vmatpush1.msra.mxu0 %v432
        %3979 = vmatprep.subr.mxu0 0.0
        %3980 = vmatpush1.msra.mxu0 0.0
        %3981 = vmatprep.subr.mxu0 0.0
        %3982 = vmatpush1.msra.mxu0 0.0
        %3983 = vmatprep.subr.mxu0 0.0
        %3984 = vmatpush1.msra.mxu0 0.0
        %3985 = vmatprep.subr.mxu0 0.0
        %3986 = vmatpush1.msra.mxu0 0.0
        %3987 = vmatprep.subr.mxu0 0.0
        %3988 = vmatpush1.msra.mxu0 0.0
        %3989 = vmatprep.subr.mxu0 0.0
        %3990 = vmatpush1.msra.mxu0 0.0
        %3991 = vmatprep.subr.mxu0 0.0
        %3992 = vmatpush1.msra.mxu0 0.0
        %3993 = vmatprep.subr.mxu0 0.0
        %3994 = vmatpush1.msra.mxu0 0.0
        %3995 = vmatprep.subr.mxu0 0.0
        %3996 = vmatpush1.msra.mxu0 0.0
        %3997 = vmatprep.subr.mxu0 0.0
        %3998 = vmatpush1.msra.mxu0 0.0
        %3999 = vmatprep.subr.mxu0 0.0
        %4000 = vmatpush1.msra.mxu0 0.0
        %4001 = vmatprep.subr.mxu0 0.0
        %4002 = vmatpush1.msra.mxu0 0.0
        %4003 = vmatprep.subr.mxu0 0.0
        %4004 = vmatpush1.msra.mxu0 0.0
        %4005 = vmatprep.subr.mxu0 0.0
        %4006 = vmatpush1.msra.mxu0 0.0
        %4007 = vmatprep.subr.mxu0 0.0
        %4008 = vmatpush1.msra.mxu0 0.0
        %4009 = vmatprep.subr.mxu0 0.0
        %4010 = vmatpush1.msra.mxu0 0.0
        %4011 = vmatprep.subr.mxu0 0.0
        %4012 = vmatpush1.msra.mxu0 0.0
        %4013 = vmatprep.subr.mxu0 0.0
        %4014 = vmatpush1.msra.mxu0 0.0
        %4015 = vmatprep.subr.mxu0 0.0
        %4016 = vmatpush1.msra.mxu0 0.0
        %4017 = vmatprep.subr.mxu0 0.0
        %4018 = vmatpush1.msra.mxu0 0.0
        %4019 = vmatprep.subr.mxu0 0.0
        %4020 = vmatpush1.msra.mxu0 0.0
        %4021 = vmatprep.subr.mxu0 0.0
        %4022 = vmatpush1.msra.mxu0 0.0
        %4023 = vmatprep.subr.mxu0 0.0
        %4024 = vmatpush1.msra.mxu0 0.0
        %4025 = vmatprep.subr.mxu0 0.0
        %4026 = vmatpush1.msra.mxu0 0.0
        %4027 = vmatprep.mubr.f32.mxu0 0.0
        %4028 = vmatmul.mubr.f32.gmra.mrb[0].mxu0 %v3961
        %v4029 = vpop.f32.mrb[0].mxu0
        %v4030 = vadd.f32 0.0, %v4029
        %v4031 = vpop.f32.mrb[0].mxu0
        %4032 = vdwg.mxu0
        %v4034 = vsel %vm443, %v3957, 0
        %4036 = vmatprep.subr.mxu0 0.0
        %4037 = vmatpush1.msra.mxu0 %v417
        %4038 = vmatprep.subr.mxu0 0.0
        %4039 = vmatpush1.msra.mxu0 %v418
        %4040 = vmatprep.subr.mxu0 0.0
        %4041 = vmatpush1.msra.mxu0 %v419
        %4042 = vmatprep.subr.mxu0 0.0
        %4043 = vmatpush1.msra.mxu0 %v420
        %4044 = vmatprep.subr.mxu0 0.0
        %4045 = vmatpush1.msra.mxu0 %v421
        %4046 = vmatprep.subr.mxu0 0.0
        %4047 = vmatpush1.msra.mxu0 %v422
        %4048 = vmatprep.subr.mxu0 0.0
        %4049 = vmatpush1.msra.mxu0 %v423
        %4050 = vmatprep.subr.mxu0 0.0
        %4051 = vmatpush1.msra.mxu0 %v424
        %4052 = vmatprep.subr.mxu0 0.0
        %4053 = vmatpush1.msra.mxu0 0.0
        %4054 = vmatprep.subr.mxu0 0.0
        %4055 = vmatpush1.msra.mxu0 0.0
        %4056 = vmatprep.subr.mxu0 0.0
        %4057 = vmatpush1.msra.mxu0 0.0
        %4058 = vmatprep.subr.mxu0 0.0
        %4059 = vmatpush1.msra.mxu0 0.0
        %4060 = vmatprep.subr.mxu0 0.0
        %4061 = vmatpush1.msra.mxu0 0.0
        %4062 = vmatprep.subr.mxu0 0.0
        %4063 = vmatpush1.msra.mxu0 0.0
        %4064 = vmatprep.subr.mxu0 0.0
        %4065 = vmatpush1.msra.mxu0 0.0
        %4066 = vmatprep.subr.mxu0 0.0
        %4067 = vmatpush1.msra.mxu0 0.0
        %4068 = vmatprep.subr.mxu0 0.0
        %4069 = vmatpush1.msra.mxu0 0.0
        %4070 = vmatprep.subr.mxu0 0.0
        %4071 = vmatpush1.msra.mxu0 0.0
        %4072 = vmatprep.subr.mxu0 0.0
        %4073 = vmatpush1.msra.mxu0 0.0
        %4074 = vmatprep.subr.mxu0 0.0
        %4075 = vmatpush1.msra.mxu0 0.0
        %4076 = vmatprep.subr.mxu0 0.0
        %4077 = vmatpush1.msra.mxu0 0.0
        %4078 = vmatprep.subr.mxu0 0.0
        %4079 = vmatpush1.msra.mxu0 0.0
        %4080 = vmatprep.subr.mxu0 0.0
        %4081 = vmatpush1.msra.mxu0 0.0
        %4082 = vmatprep.subr.mxu0 0.0
        %4083 = vmatpush1.msra.mxu0 0.0
        %4084 = vmatprep.subr.mxu0 0.0
        %4085 = vmatpush1.msra.mxu0 0.0
        %4086 = vmatprep.subr.mxu0 0.0
        %4087 = vmatpush1.msra.mxu0 0.0
        %4088 = vmatprep.subr.mxu0 0.0
        %4089 = vmatpush1.msra.mxu0 0.0
        %4090 = vmatprep.subr.mxu0 0.0
        %4091 = vmatpush1.msra.mxu0 0.0
        %4092 = vmatprep.subr.mxu0 0.0
        %4093 = vmatpush1.msra.mxu0 0.0
        %4094 = vmatprep.subr.mxu0 0.0
        %4095 = vmatpush1.msra.mxu0 0.0
        %4096 = vmatprep.subr.mxu0 0.0
        %4097 = vmatpush1.msra.mxu0 0.0
        %4098 = vmatprep.subr.mxu0 0.0
        %4099 = vmatpush1.msra.mxu0 0.0
        %4100 = vmatprep.mubr.f32.mxu0 0.0
        %4101 = vmatmul.mubr.f32.gmra.mrb[0].mxu0 %v4034
        %v4102 = vpop.f32.mrb[0].mxu0
        %v4103 = vadd.f32 %v4030, %v4102
        %v4104 = vpop.f32.mrb[0].mxu0
        %4105 = vdwg.mxu0
        %v4106 = vadd.f32 %v4103, %v594
        %v4107 = vmax.f32 %v4106, 0.0
        %v4109 = vsel %vm604, %v4107, 0
        %4111 = vmatprep.subr.mxu0 0.0
        %4112 = vmatpush1.msra.mxu0 %v434
        %4113 = vmatprep.subr.mxu0 0.0
        %4114 = vmatpush1.msra.mxu0 %v435
        %4115 = vmatprep.subr.mxu0 0.0
        %4116 = vmatpush1.msra.mxu0 %v436
        %4117 = vmatprep.subr.mxu0 0.0
        %4118 = vmatpush1.msra.mxu0 %v437
        %4119 = vmatprep.subr.mxu0 0.0
        %4120 = vmatpush1.msra.mxu0 0.0
        %4121 = vmatprep.subr.mxu0 0.0
        %4122 = vmatpush1.msra.mxu0 0.0
        %4123 = vmatprep.subr.mxu0 0.0
        %4124 = vmatpush1.msra.mxu0 0.0
        %4125 = vmatprep.subr.mxu0 0.0
        %4126 = vmatpush1.msra.mxu0 0.0
        %4127 = vmatprep.subr.mxu0 0.0
        %4128 = vmatpush1.msra.mxu0 0.0
        %4129 = vmatprep.subr.mxu0 0.0
        %4130 = vmatpush1.msra.mxu0 0.0
        %4131 = vmatprep.subr.mxu0 0.0
        %4132 = vmatpush1.msra.mxu0 0.0
        %4133 = vmatprep.subr.mxu0 0.0
        %4134 = vmatpush1.msra.mxu0 0.0
        %4135 = vmatprep.subr.mxu0 0.0
        %4136 = vmatpush1.msra.mxu0 0.0
        %4137 = vmatprep.subr.mxu0 0.0
        %4138 = vmatpush1.msra.mxu0 0.0
        %4139 = vmatprep.subr.mxu0 0.0
        %4140 = vmatpush1.msra.mxu0 0.0
        %4141 = vmatprep.subr.mxu0 0.0
        %4142 = vmatpush1.msra.mxu0 0.0
        %4143 = vmatprep.subr.mxu0 0.0
        %4144 = vmatpush1.msra.mxu0 0.0
        %4145 = vmatprep.subr.mxu0 0.0
        %4146 = vmatpush1.msra.mxu0 0.0
        %4147 = vmatprep.subr.mxu0 0.0
        %4148 = vmatpush1.msra.mxu0 0.0
        %4149 = vmatprep.subr.mxu0 0.0
        %4150 = vmatpush1.msra.mxu0 0.0
        %4151 = vmatprep.subr.mxu0 0.0
        %4152 = vmatpush1.msra.mxu0 0.0
        %4153 = vmatprep.subr.mxu0 0.0
        %4154 = vmatpush1.msra.mxu0 0.0
        %4155 = vmatprep.subr.mxu0 0.0
        %4156 = vmatpush1.msra.mxu0 0.0
        %4157 = vmatprep.subr.mxu0 0.0
        %4158 = vmatpush1.msra.mxu0 0.0
        %4159 = vmatprep.subr.mxu0 0.0
        %4160 = vmatpush1.msra.mxu0 0.0
        %4161 = vmatprep.subr.mxu0 0.0
        %4162 = vmatpush1.msra.mxu0 0.0
        %4163 = vmatprep.subr.mxu0 0.0
        %4164 = vmatpush1.msra.mxu0 0.0
        %4165 = vmatprep.subr.mxu0 0.0
        %4166 = vmatpush1.msra.mxu0 0.0
        %4167 = vmatprep.subr.mxu0 0.0
        %4168 = vmatpush1.msra.mxu0 0.0
        %4169 = vmatprep.subr.mxu0 0.0
        %4170 = vmatpush1.msra.mxu0 0.0
        %4171 = vmatprep.subr.mxu0 0.0
        %4172 = vmatpush1.msra.mxu0 0.0
        %4173 = vmatprep.subr.mxu0 0.0
        %4174 = vmatpush1.msra.mxu0 0.0
        %4175 = vmatprep.mubr.f32.mxu0 0.0
        %4176 = vmatmul.mubr.f32.gmra.mrb[0].mxu0 %v4109
        %v4177 = vpop.f32.mrb[0].mxu0
        %v4178 = vadd.f32 %v602, %v4177
        %v4179 = vpop.f32.mrb[0].mxu0
        %4180 = vdwg.mxu0
        %v4181 = vpack.c.bf16 %v4178, %v4178
        %s4182 = scalar_lea.vmem %s366, 56 [#allocation4]
        %4183 = vst [vmem:[%s4182] sm:$0xf] %v4181
        %4184 = vst.msk [vmem:[#allocation2] sm:$0xff] %vm443, %v4178
        %4185 = vrot.lane.b32.xlu0 %v3957, 64
        %v4186 = vpop.permute.xlu0 %4185
        %v4188 = vsub.f32 %v4178, %v4186
        %v4189 = vmul.f32 %v4188, %v4188
        %4191 = vrot.lane.b32.xlu0 %v4189, 64
        %v4192 = vpop.permute.xlu0 %4191
        %v4194 = vsel %vm443, %v4192, 0.0
        %4195 = vadd.xlane.f32.xlu0 %v4194
        %v4196 = vpop.xlane.xlu0 %4195
        %v4197 = vmul.f32 %v4196, %v693
        %v4199 = vlaneseq
        %v4200 = vshrl.u32 %v4199, 7
        %v4201 = vsub.s32 %v697, %v4200
        %v4202 = vrot.slane %v4197, %v4201
        %4204 = vst.msk [vmem:[%s398 + $0xe] sm:$0x1] %vm703, %v4202
        %s4205 = scalar_lea.vmem %s388, 60
        %v4206 = vld [vmem:[%s4205] sm:$0xf]
        %v4207 = vunpack.c.l.bf16 %v4206
        %v4208 = vld [vmem:[#allocation2] sm:$0xff]
        %v4209 = vmul.f32 %v4208, %v415
        %v4211 = vsel %vm443, %v4209, 0
        %4213 = vmatprep.subr.mxu0 0.0
        %4214 = vmatpush1.msra.mxu0 %v425
        %4215 = vmatprep.subr.mxu0 0.0
        %4216 = vmatpush1.msra.mxu0 %v426
        %4217 = vmatprep.subr.mxu0 0.0
        %4218 = vmatpush1.msra.mxu0 %v427
        %4219 = vmatprep.subr.mxu0 0.0
        %4220 = vmatpush1.msra.mxu0 %v428
        %4221 = vmatprep.subr.mxu0 0.0
        %4222 = vmatpush1.msra.mxu0 %v429
        %4223 = vmatprep.subr.mxu0 0.0
        %4224 = vmatpush1.msra.mxu0 %v430
        %4225 = vmatprep.subr.mxu0 0.0
        %4226 = vmatpush1.msra.mxu0 %v431
        %4227 = vmatprep.subr.mxu0 0.0
        %4228 = vmatpush1.msra.mxu0 %v432
        %4229 = vmatprep.subr.mxu0 0.0
        %4230 = vmatpush1.msra.mxu0 0.0
        %4231 = vmatprep.subr.mxu0 0.0
        %4232 = vmatpush1.msra.mxu0 0.0
        %4233 = vmatprep.subr.mxu0 0.0
        %4234 = vmatpush1.msra.mxu0 0.0
        %4235 = vmatprep.subr.mxu0 0.0
        %4236 = vmatpush1.msra.mxu0 0.0
        %4237 = vmatprep.subr.mxu0 0.0
        %4238 = vmatpush1.msra.mxu0 0.0
        %4239 = vmatprep.subr.mxu0 0.0
        %4240 = vmatpush1.msra.mxu0 0.0
        %4241 = vmatprep.subr.mxu0 0.0
        %4242 = vmatpush1.msra.mxu0 0.0
        %4243 = vmatprep.subr.mxu0 0.0
        %4244 = vmatpush1.msra.mxu0 0.0
        %4245 = vmatprep.subr.mxu0 0.0
        %4246 = vmatpush1.msra.mxu0 0.0
        %4247 = vmatprep.subr.mxu0 0.0
        %4248 = vmatpush1.msra.mxu0 0.0
        %4249 = vmatprep.subr.mxu0 0.0
        %4250 = vmatpush1.msra.mxu0 0.0
        %4251 = vmatprep.subr.mxu0 0.0
        %4252 = vmatpush1.msra.mxu0 0.0
        %4253 = vmatprep.subr.mxu0 0.0
        %4254 = vmatpush1.msra.mxu0 0.0
        %4255 = vmatprep.subr.mxu0 0.0
        %4256 = vmatpush1.msra.mxu0 0.0
        %4257 = vmatprep.subr.mxu0 0.0
        %4258 = vmatpush1.msra.mxu0 0.0
        %4259 = vmatprep.subr.mxu0 0.0
        %4260 = vmatpush1.msra.mxu0 0.0
        %4261 = vmatprep.subr.mxu0 0.0
        %4262 = vmatpush1.msra.mxu0 0.0
        %4263 = vmatprep.subr.mxu0 0.0
        %4264 = vmatpush1.msra.mxu0 0.0
        %4265 = vmatprep.subr.mxu0 0.0
        %4266 = vmatpush1.msra.mxu0 0.0
        %4267 = vmatprep.subr.mxu0 0.0
        %4268 = vmatpush1.msra.mxu0 0.0
        %4269 = vmatprep.subr.mxu0 0.0
        %4270 = vmatpush1.msra.mxu0 0.0
        %4271 = vmatprep.subr.mxu0 0.0
        %4272 = vmatpush1.msra.mxu0 0.0
        %4273 = vmatprep.subr.mxu0 0.0
        %4274 = vmatpush1.msra.mxu0 0.0
        %4275 = vmatprep.subr.mxu0 0.0
        %4276 = vmatpush1.msra.mxu0 0.0
        %4277 = vmatprep.mubr.f32.mxu0 0.0
        %4278 = vmatmul.mubr.f32.gmra.mrb[0].mxu0 %v4211
        %v4279 = vpop.f32.mrb[0].mxu0
        %v4280 = vadd.f32 0.0, %v4279
        %v4281 = vpop.f32.mrb[0].mxu0
        %4282 = vdwg.mxu0
        %v4284 = vsel %vm443, %v4207, 0
        %4286 = vmatprep.subr.mxu0 0.0
        %4287 = vmatpush1.msra.mxu0 %v417
        %4288 = vmatprep.subr.mxu0 0.0
        %4289 = vmatpush1.msra.mxu0 %v418
        %4290 = vmatprep.subr.mxu0 0.0
        %4291 = vmatpush1.msra.mxu0 %v419
        %4292 = vmatprep.subr.mxu0 0.0
        %4293 = vmatpush1.msra.mxu0 %v420
        %4294 = vmatprep.subr.mxu0 0.0
        %4295 = vmatpush1.msra.mxu0 %v421
        %4296 = vmatprep.subr.mxu0 0.0
        %4297 = vmatpush1.msra.mxu0 %v422
        %4298 = vmatprep.subr.mxu0 0.0
        %4299 = vmatpush1.msra.mxu0 %v423
        %4300 = vmatprep.subr.mxu0 0.0
        %4301 = vmatpush1.msra.mxu0 %v424
        %4302 = vmatprep.subr.mxu0 0.0
        %4303 = vmatpush1.msra.mxu0 0.0
        %4304 = vmatprep.subr.mxu0 0.0
        %4305 = vmatpush1.msra.mxu0 0.0
        %4306 = vmatprep.subr.mxu0 0.0
        %4307 = vmatpush1.msra.mxu0 0.0
        %4308 = vmatprep.subr.mxu0 0.0
        %4309 = vmatpush1.msra.mxu0 0.0
        %4310 = vmatprep.subr.mxu0 0.0
        %4311 = vmatpush1.msra.mxu0 0.0
        %4312 = vmatprep.subr.mxu0 0.0
        %4313 = vmatpush1.msra.mxu0 0.0
        %4314 = vmatprep.subr.mxu0 0.0
        %4315 = vmatpush1.msra.mxu0 0.0
        %4316 = vmatprep.subr.mxu0 0.0
        %4317 = vmatpush1.msra.mxu0 0.0
        %4318 = vmatprep.subr.mxu0 0.0
        %4319 = vmatpush1.msra.mxu0 0.0
        %4320 = vmatprep.subr.mxu0 0.0
        %4321 = vmatpush1.msra.mxu0 0.0
        %4322 = vmatprep.subr.mxu0 0.0
        %4323 = vmatpush1.msra.mxu0 0.0
        %4324 = vmatprep.subr.mxu0 0.0
        %4325 = vmatpush1.msra.mxu0 0.0
        %4326 = vmatprep.subr.mxu0 0.0
        %4327 = vmatpush1.msra.mxu0 0.0
        %4328 = vmatprep.subr.mxu0 0.0
        %4329 = vmatpush1.msra.mxu0 0.0
        %4330 = vmatprep.subr.mxu0 0.0
        %4331 = vmatpush1.msra.mxu0 0.0
        %4332 = vmatprep.subr.mxu0 0.0
        %4333 = vmatpush1.msra.mxu0 0.0
        %4334 = vmatprep.subr.mxu0 0.0
        %4335 = vmatpush1.msra.mxu0 0.0
        %4336 = vmatprep.subr.mxu0 0.0
        %4337 = vmatpush1.msra.mxu0 0.0
        %4338 = vmatprep.subr.mxu0 0.0
        %4339 = vmatpush1.msra.mxu0 0.0
        %4340 = vmatprep.subr.mxu0 0.0
        %4341 = vmatpush1.msra.mxu0 0.0
        %4342 = vmatprep.subr.mxu0 0.0
        %4343 = vmatpush1.msra.mxu0 0.0
        %4344 = vmatprep.subr.mxu0 0.0
        %4345 = vmatpush1.msra.mxu0 0.0
        %4346 = vmatprep.subr.mxu0 0.0
        %4347 = vmatpush1.msra.mxu0 0.0
        %4348 = vmatprep.subr.mxu0 0.0
        %4349 = vmatpush1.msra.mxu0 0.0
        %4350 = vmatprep.mubr.f32.mxu0 0.0
        %4351 = vmatmul.mubr.f32.gmra.mrb[0].mxu0 %v4284
        %v4352 = vpop.f32.mrb[0].mxu0
        %v4353 = vadd.f32 %v4280, %v4352
        %v4354 = vpop.f32.mrb[0].mxu0
        %4355 = vdwg.mxu0
        %v4356 = vadd.f32 %v4353, %v594
        %v4357 = vmax.f32 %v4356, 0.0
        %v4359 = vsel %vm604, %v4357, 0
        %4361 = vmatprep.subr.mxu0 0.0
        %4362 = vmatpush1.msra.mxu0 %v434
        %4363 = vmatprep.subr.mxu0 0.0
        %4364 = vmatpush1.msra.mxu0 %v435
        %4365 = vmatprep.subr.mxu0 0.0
        %4366 = vmatpush1.msra.mxu0 %v436
        %4367 = vmatprep.subr.mxu0 0.0
        %4368 = vmatpush1.msra.mxu0 %v437
        %4369 = vmatprep.subr.mxu0 0.0
        %4370 = vmatpush1.msra.mxu0 0.0
        %4371 = vmatprep.subr.mxu0 0.0
        %4372 = vmatpush1.msra.mxu0 0.0
        %4373 = vmatprep.subr.mxu0 0.0
        %4374 = vmatpush1.msra.mxu0 0.0
        %4375 = vmatprep.subr.mxu0 0.0
        %4376 = vmatpush1.msra.mxu0 0.0
        %4377 = vmatprep.subr.mxu0 0.0
        %4378 = vmatpush1.msra.mxu0 0.0
        %4379 = vmatprep.subr.mxu0 0.0
        %4380 = vmatpush1.msra.mxu0 0.0
        %4381 = vmatprep.subr.mxu0 0.0
        %4382 = vmatpush1.msra.mxu0 0.0
        %4383 = vmatprep.subr.mxu0 0.0
        %4384 = vmatpush1.msra.mxu0 0.0
        %4385 = vmatprep.subr.mxu0 0.0
        %4386 = vmatpush1.msra.mxu0 0.0
        %4387 = vmatprep.subr.mxu0 0.0
        %4388 = vmatpush1.msra.mxu0 0.0
        %4389 = vmatprep.subr.mxu0 0.0
        %4390 = vmatpush1.msra.mxu0 0.0
        %4391 = vmatprep.subr.mxu0 0.0
        %4392 = vmatpush1.msra.mxu0 0.0
        %4393 = vmatprep.subr.mxu0 0.0
        %4394 = vmatpush1.msra.mxu0 0.0
        %4395 = vmatprep.subr.mxu0 0.0
        %4396 = vmatpush1.msra.mxu0 0.0
        %4397 = vmatprep.subr.mxu0 0.0
        %4398 = vmatpush1.msra.mxu0 0.0
        %4399 = vmatprep.subr.mxu0 0.0
        %4400 = vmatpush1.msra.mxu0 0.0
        %4401 = vmatprep.subr.mxu0 0.0
        %4402 = vmatpush1.msra.mxu0 0.0
        %4403 = vmatprep.subr.mxu0 0.0
        %4404 = vmatpush1.msra.mxu0 0.0
        %4405 = vmatprep.subr.mxu0 0.0
        %4406 = vmatpush1.msra.mxu0 0.0
        %4407 = vmatprep.subr.mxu0 0.0
        %4408 = vmatpush1.msra.mxu0 0.0
        %4409 = vmatprep.subr.mxu0 0.0
        %4410 = vmatpush1.msra.mxu0 0.0
        %4411 = vmatprep.subr.mxu0 0.0
        %4412 = vmatpush1.msra.mxu0 0.0
        %4413 = vmatprep.subr.mxu0 0.0
        %4414 = vmatpush1.msra.mxu0 0.0
        %4415 = vmatprep.subr.mxu0 0.0
        %4416 = vmatpush1.msra.mxu0 0.0
        %4417 = vmatprep.subr.mxu0 0.0
        %4418 = vmatpush1.msra.mxu0 0.0
        %4419 = vmatprep.subr.mxu0 0.0
        %4420 = vmatpush1.msra.mxu0 0.0
        %4421 = vmatprep.subr.mxu0 0.0
        %4422 = vmatpush1.msra.mxu0 0.0
        %4423 = vmatprep.subr.mxu0 0.0
        %4424 = vmatpush1.msra.mxu0 0.0
        %4425 = vmatprep.mubr.f32.mxu0 0.0
        %4426 = vmatmul.mubr.f32.gmra.mrb[0].mxu0 %v4359
        %v4427 = vpop.f32.mrb[0].mxu0
        %v4428 = vadd.f32 %v602, %v4427
        %v4429 = vpop.f32.mrb[0].mxu0
        %4430 = vdwg.mxu0
        %v4431 = vpack.c.bf16 %v4428, %v4428
        %s4432 = scalar_lea.vmem %s366, 60 [#allocation4]
        %4433 = vst [vmem:[%s4432] sm:$0xf] %v4431
        %4434 = vst.msk [vmem:[#allocation2] sm:$0xff] %vm443, %v4428
        %4435 = vrot.lane.b32.xlu0 %v4207, 64
        %v4436 = vpop.permute.xlu0 %4435
        %v4438 = vsub.f32 %v4428, %v4436
        %v4439 = vmul.f32 %v4438, %v4438
        %4441 = vrot.lane.b32.xlu0 %v4439, 64
        %v4442 = vpop.permute.xlu0 %4441
        %v4444 = vsel %vm443, %v4442, 0.0
        %4445 = vadd.xlane.f32.xlu0 %v4444
        %v4446 = vpop.xlane.xlu0 %4445
        %v4447 = vmul.f32 %v4446, %v693
        %v4449 = vlaneseq
        %v4450 = vshrl.u32 %v4449, 7
        %v4451 = vsub.s32 %v697, %v4450
        %v4452 = vrot.slane %v4447, %v4451
        %4454 = vst.msk [vmem:[%s398 + $0xf] sm:$0x1] %vm703, %v4452
        %s4455 = sand.u32 %s228, 1
        %s4456 = scalar_lea.sflag [#allocation5], %s4455
        %s4457 = sand.u32 %s228, 1
        %s4458 = smul.addr %s4457, 64
        %s4459 = scalar_lea.vmem [#allocation4], %s4458
        %s4460 = smul.u32 2, %s31
        %p4461 = scmp.lt.s32.totalorder %s4460, 3
        %s4462 = scalar_select %p4461, %s4460, 3
        %p4463 = scmp.lt.s32.totalorder %s30, 0
        %s4464 = scalar_select %p4463, %s30, 0
        %s4465 = sadd.s32 %s4464, %s4462
        %s4466 = smul.addr %s4465, 8
        %s4467 = scalar_lea.vmem %s9, %s4466
        // Predicated region
        $region57: #{tpu_custom_call.1} parent=51 // pred_check
          %p4468 = pneg %p238
        $region58: #{tpu_custom_call.1} parent=51 // pred_check_branch
          %4470 = sbr.rel (%p4468) target = $region60
        $region59: #{tpu_custom_call.1} parent=51 // pred_region
          %s4471 = smul.u32 16, %s31
          %s4473 = ssub.s32 1024, 1024
          %4474 = vsyncadd %s4456, %s4473
          %s4475 = sadd.s32 %s30, %s4471
          %s4476 = smul.addr %s4475, 64
          %s4477 = scalar_lea.hbm %s8, %s4476
          %s4478 = sshll.u32 %s4459, 4
          %s4479 = int_to_ptr.vmem [resolvable:$true] %s4478
          %4484 = dma.vmem_to_hbm [thread:$0]  %s4479, 1024, %s4477, %s4456, 64, 64, 4
        $region60: #{tpu_custom_call.1} parent=51 // pred_fallthru
          _
        // Predicated region
        $region61: #{tpu_custom_call.1} parent=51 // pred_check
          %p4485 = pneg %p266
        $region62: #{tpu_custom_call.1} parent=51 // pred_check_branch
          %4487 = sbr.rel (%p4485) target = $region64
        $region63: #{tpu_custom_call.1} parent=51 // pred_region
          %s4488 = smul.u32 2, %s31
        $region64: #{tpu_custom_call.1} parent=51 // pred_fallthru
          _
      $region52: #{tpu_custom_call.1} parent=5 // pred_fallthru
        _
      %p4489 = scmp.le.s32.totalorder 2, %s21
      // Predicated region
      $region65: #{tpu_custom_call.1} parent=5 // pred_check
        %p4490 = pneg %p4489
      $region66: #{tpu_custom_call.1} parent=5 // pred_check_branch
        %4492 = sbr.rel (%p4490) target = $region68
      $region67: #{tpu_custom_call.1} parent=5 // pred_region
        %s4493 = ssub.s32 %s21, 2
        // Predicated region
        $region69: #{tpu_custom_call.1} parent=67 // pred_check
          %p4494 = pneg %p244
        $region70: #{tpu_custom_call.1} parent=67 // pred_check_branch
          %4496 = sbr.rel (%p4494) target = $region72
        $region71: #{tpu_custom_call.1} parent=67 // pred_region
          %s4497 = sand.u32 %s229, 1
          %s4498 = scalar_lea.sflag [#allocation5], %s4497
          %s4499 = sand.u32 %s229, 1
          %s4500 = smul.addr %s4499, 64
          %s4501 = scalar_lea.vmem [#allocation4], %s4500
          %4502 = dma.done %s4498, 1024
        $region72: #{tpu_custom_call.1} parent=67 // pred_fallthru
          _
        // Predicated region
        $region73: #{tpu_custom_call.1} parent=67 // pred_check
          %p4503 = pneg %p272
        $region74: #{tpu_custom_call.1} parent=67 // pred_check_branch
          %4505 = sbr.rel (%p4503) target = $region76
        $region75: #{tpu_custom_call.1} parent=67 // pred_region
          %s4506 = smul.u32 2, %s33
          %p4507 = scmp.lt.s32.totalorder %s4506, 3
          %s4508 = scalar_select %p4507, %s4506, 3
          %p4509 = scmp.lt.s32.totalorder %s32, 0
          %s4510 = scalar_select %p4509, %s32, 0
          %s4511 = sadd.s32 %s4510, %s4508
          %s4512 = smul.addr %s4511, 8
          %s4513 = scalar_lea.vmem %s9, %s4512
        $region76: #{tpu_custom_call.1} parent=67 // pred_fallthru
          _
      $region68: #{tpu_custom_call.1} parent=5 // pred_fallthru
        _
    $region6: #{tpu_custom_call.1} parent=1 // loop_footer
      %s25 = sadd.s32 1, %s21
    $region7: #{tpu_custom_call.1} parent=1 // loop_footer_branch
      %20 = sbr.rel target = $region3
    $region8: #{tpu_custom_call.1} parent=1 // loop_exit
      _
    %4514 = vsyncpa [#allocation5], 1
    %s4515 = scalar_lea.sflag [#allocation5], 1
    %4516 = vsyncpa %s4515, 1

</llo_original>
